<compile_context>
chip_gen: v5e
topology: v5e:2x2
jax: 0.10.0
libtpu: 0.0.40
codegen_flags: <defaults>
</compile_context>

<pallas_src>
import functools

import numpy as np
import jax
import jax.numpy as jnp
from jax import lax
from jax.experimental import pallas as pl
from jax.experimental.pallas import tpu as pltpu


# ---------------------------------------------------------------------------
# Static helper matrices (built once in the wrapper, hoisted out of the grid).
# ---------------------------------------------------------------------------

def _band_indicator(w_out, w_in, offset):
    """ind[p, dx, w] = 1  iff  p == w + dx + offset  (and 0 <= p < w_in)."""
    ind = np.zeros((w_in, 3, w_out), np.float32)
    for dx in range(3):
        for w in range(w_out):
            p = w + dx + offset
            if 0 <= p < w_in:
                ind[p, dx, w] = 1.0
    return jnp.asarray(ind)


def _hpool_shift(H, dy):
    """(Ho, H) matrix folding conv2's dy row-shift (with H zero-pad) and the
    2x average pool along H: m[ho, h] = 0.5 for h in {2ho+dy-1, 2ho+dy}."""
    Ho = H // 2
    m = np.zeros((Ho, H), np.float32)
    for ho in range(Ho):
        for h in (2 * ho + dy - 1, 2 * ho + dy):
            if 0 <= h < H:
                m[ho, h] = 0.5
    return m


def _wpool_matrix(W, C):
    """(W*C, Wo*C) matrix: 2x average pool along W inside the (w, c) lanes."""
    Wo = W // 2
    m = np.zeros((W * C, Wo * C), np.float32)
    for wo in range(Wo):
        for c in range(C):
            m[(2 * wo) * C + c, wo * C + c] = 0.5
            m[(2 * wo + 1) * C + c, wo * C + c] = 0.5
    return m


def _pick_batch_tile(N, cap=32):
    """Largest divisor of N that keeps >= 2 grid steps (v7x 2 TCs), <= cap."""
    if N <= 1:
        return 1
    bt = min(cap, max(1, N // 2))
    while N % bt:
        bt -= 1
    return bt


# ---------------------------------------------------------------------------
# Kernel: one grid step == B_tile images; everything is 2-D lane-dense matmul.
# ---------------------------------------------------------------------------

def _block_kernel(xp_ref, a1_ref, b1_ref, a2_ref, hm_ref, hp_ref, pw_ref,
                  bo_ref, o_ref, *, B, H, W, Cin, Cmid):
    f32 = jnp.float32
    hi = lax.Precision.HIGHEST
    WC = W * Cmid
    WoC = (W // 2) * Cmid
    Ho = H // 2
    Kin = (W + 2) * Cin

    # ---- Stage 1: conv1 (+b1 +ReLU) and shortcut conv fused: 3 banded matmuls.
    acc1 = jnp.zeros((B * H, 2 * WC), f32)
    for dy in range(3):
        rows = xp_ref[:, dy:dy + H, :].reshape(B * H, Kin)       # (B*H, (W+2)*Cin)
        acc1 = acc1 + jnp.dot(rows, a1_ref[dy],
                              preferred_element_type=f32, precision=hi)
    u1 = jnp.maximum(acc1[:, :WC] + b1_ref[...], 0.0)            # conv1 branch
    sc = acc1[:, WC:]                                            # shortcut (bias deferred)

    # ---- Stage 2: conv2 row-products; H shift/pad + 2x H-pool folded into hm.
    acc2 = jnp.zeros((B * Ho, WC), f32)
    for dy in range(3):
        p = jnp.dot(u1, a2_ref[dy], preferred_element_type=f32, precision=hi)
        acc2 = acc2 + jnp.dot(hm_ref[dy], p,
                              preferred_element_type=f32, precision=hi)
    acc2 = acc2 + jnp.dot(hp_ref[...], sc,                       # H-pooled shortcut
                          preferred_element_type=f32, precision=hi)

    # ---- 2x W-pool, post-pool (b2 + bs) bias, final ReLU.
    pooled = jnp.dot(acc2, pw_ref[...], preferred_element_type=f32, precision=hi)
    out = jnp.maximum(pooled + bo_ref[...], 0.0)                 # (B*Ho, Wo*Cmid)
    o_ref[...] = out.reshape(B, Ho, WoC).astype(o_ref.dtype)


# ---------------------------------------------------------------------------
# Wrapper
# ---------------------------------------------------------------------------

@jax.jit
def downscale_basic_block(x_nchw, params):
    """params = (w1, b1, w2, b2, ws, bs); weights OIHW (already spectral-normed)."""
    w1, b1, w2, b2, ws, bs = params
    N, Cin, H, W = x_nchw.shape
    Cmid = w1.shape[0]
    assert H % 2 == 0 and W % 2 == 0
    Ho, Wo = H // 2, W // 2
    WC, WoC, Kin = W * Cmid, Wo * Cmid, (W + 2) * Cin

    bt = _pick_batch_tile(N)
    n_steps = N // bt

    # Lane-dense padded input: (N, H+2, (W+2)*Cin); one image row per slab row.
    # TODO(synk): the NCHW->NHWC transpose + pad still run as wrapper XLA ops.
    x = jnp.transpose(x_nchw, (0, 2, 3, 1))
    xp = jnp.pad(x, ((0, 0), (1, 1), (1, 1), (0, 0))).reshape(N, H + 2, Kin)

    # Weight repacking (once): banded conv matrices + pool/shift mixing matrices.
    to_hwio = lambda w: jnp.transpose(w, (2, 3, 1, 0))           # OIHW -> HWIO
    w1h, w2h, wsh = to_hwio(w1), to_hwio(w2), to_hwio(ws)

    ind1 = _band_indicator(W, W + 2, 0)      # stage-1 input already W-padded
    ind2 = _band_indicator(W, W, -1)         # stage-2 W-padding folded into band

    def band(ind, wh):
        t = jnp.einsum('pdw,edio->epiwo', ind, wh)
        return t.reshape(3, ind.shape[0] * wh.shape[2], W * wh.shape[3])

    a1 = jnp.concatenate([band(ind1, w1h), band(ind1, wsh)], axis=2)  # (3,Kin,2WC)
    a2 = band(ind2, w2h)                                              # (3,WC,WC)

    eye = np.eye(bt, dtype=np.float32)       # block-diagonal per-image row mixes
    hm = jnp.asarray(np.stack([np.kron(eye, _hpool_shift(H, dy)) for dy in range(3)]))
    hp = jnp.asarray(np.kron(eye, _hpool_shift(H, 1)))
    pw = jnp.asarray(_wpool_matrix(W, Cmid))

    b1row = jnp.tile(b1, W)[None, :]                 # (1, W*Cmid)
    borow = jnp.tile(b2 + bs, Wo)[None, :]           # (1, Wo*Cmid); pool(const)=const

    kernel = functools.partial(_block_kernel, B=bt, H=H, W=W, Cin=Cin, Cmid=Cmid)

    flops = (2 * N * H * Kin * 2 * WC * 3            # stage-1 banded matmuls
             + 2 * N * H * WC * WC * 3               # conv2 row products
             + 2 * n_steps * (bt * Ho) * (bt * H) * WC * 4   # H-mix matmuls
             + 2 * N * Ho * WC * WoC)                # W-pool matmul
    bytes_accessed = 4 * (N * (H + 2) * Kin + 3 * Kin * 2 * WC + 3 * WC * WC
                          + 4 * bt * Ho * bt * H + WC * WoC + WC + WoC
                          + N * Ho * WoC)

    out = pl.pallas_call(
        kernel,
        out_shape=jax.ShapeDtypeStruct((N, Ho, WoC), x_nchw.dtype),
        grid_spec=pltpu.PrefetchScalarGridSpec(
            num_scalar_prefetch=0,
            grid=(n_steps,),
            in_specs=[
                pl.BlockSpec((bt, H + 2, Kin), lambda n: (n, 0, 0)),      # xp
                pl.BlockSpec((3, Kin, 2 * WC), lambda n: (0, 0, 0)),      # a1
                pl.BlockSpec((1, WC), lambda n: (0, 0)),                  # b1row
                pl.BlockSpec((3, WC, WC), lambda n: (0, 0, 0)),           # a2
                pl.BlockSpec((3, bt * Ho, bt * H), lambda n: (0, 0, 0)),  # hm
                pl.BlockSpec((bt * Ho, bt * H), lambda n: (0, 0)),        # hp
                pl.BlockSpec((WC, WoC), lambda n: (0, 0)),                # pw
                pl.BlockSpec((1, WoC), lambda n: (0, 0)),                 # borow
            ],
            out_specs=pl.BlockSpec((bt, Ho, WoC), lambda n: (n, 0, 0)),
        ),
        compiler_params=pltpu.CompilerParams(
            dimension_semantics=("parallel",),
            vmem_limit_bytes=32 * 1024 * 1024),
        cost_estimate=pl.CostEstimate(flops=int(flops), transcendentals=0,
                                      bytes_accessed=int(bytes_accessed)),
    )(xp, a1, b1row, a2, hm, hp, pw, borow)

    # Lane-dense slab -> NCHW for the caller.
    out = out.reshape(N, Ho, Wo, Cmid)
    return jnp.transpose(out, (0, 3, 1, 2))


# ---------------------------------------------------------------------------
# spectral_norm (weight reparametrization, applied outside the kernel) + reference
# ---------------------------------------------------------------------------

def spectral_normalize(w_oihw, key, n_iter=5):
    # torch spectral_norm: divide weight by its leading singular value with the
    # weight flattened to (out_channels, -1). Deterministic power iteration.
    o = w_oihw.shape[0]
    w_mat = w_oihw.reshape(o, -1)
    u = jax.random.normal(key, (o,), dtype=w_oihw.dtype)
    u = u / (jnp.linalg.norm(u) + 1e-12)
    v = w_mat.T @ u
    v = v / (jnp.linalg.norm(v) + 1e-12)
    for _ in range(n_iter):
        v = w_mat.T @ u
        v = v / (jnp.linalg.norm(v) + 1e-12)
        u = w_mat @ v
        u = u / (jnp.linalg.norm(u) + 1e-12)
    sigma = u @ (w_mat @ v)
    return w_oihw / sigma


def ref_forward(x, params):
    # Pure-JAX reference (NCHW / OIHW) mirroring the PyTorch forward.
    w1, b1, w2, b2, ws, bs = params
    dn = ('NCHW', 'OIHW', 'NCHW')

    def conv(t, w, b):
        return lax.conv_general_dilated(
            t, w, (1, 1), ((1, 1), (1, 1)), dimension_numbers=dn,
            precision=lax.Precision.HIGHEST) + b[None, :, None, None]

    def pool(t):
        return lax.reduce_window(t, 0.0, lax.add, (1, 1, 2, 2),
                                 (1, 1, 2, 2), 'VALID') * 0.25

    out = jax.nn.relu(conv(x, w1, b1))
    out = pool(conv(out, w2, b2)) + pool(conv(x, ws, bs))
    return jax.nn.relu(out)


if __name__ == "__main__":
    key = jax.random.PRNGKey(0)
    N, Cin, H, W = 2, 4, 16, 16      # batch=2, in_planes=4, spatial=16
    Cmid = 8                         # planes=8

    ks = jax.random.split(key, 8)
    w1 = 0.1 * jax.random.normal(ks[0], (Cmid, Cin, 3, 3), jnp.float32)
    b1 = 0.05 * jax.random.normal(ks[1], (Cmid,), jnp.float32)
    w2 = 0.1 * jax.random.normal(ks[2], (Cmid, Cmid, 3, 3), jnp.float32)
    b2 = 0.05 * jax.random.normal(ks[3], (Cmid,), jnp.float32)
    ws = 0.1 * jax.random.normal(ks[4], (Cmid, Cin, 3, 3), jnp.float32)
    bs = 0.05 * jax.random.normal(ks[5], (Cmid,), jnp.float32)

    # spectral_norm wrapper: normalize each conv weight by its leading singular value
    w1 = spectral_normalize(w1, jax.random.fold_in(key, 101))
    w2 = spectral_normalize(w2, jax.random.fold_in(key, 102))
    ws = spectral_normalize(ws, jax.random.fold_in(key, 103))
    params = (w1, b1, w2, b2, ws, bs)

    x = jax.random.normal(ks[6], (N, Cin, H, W), jnp.float32)

    out = jax.block_until_ready(downscale_basic_block(x, params))
    ref = ref_forward(x, params)
    assert out.shape == (N, Cmid, H // 2, W // 2), out.shape
    err = float(jnp.max(jnp.abs(out - ref)))
    assert jnp.allclose(out, ref, atol=1e-3, rtol=1e-3), err
    print("KERNEL_OK")
</pallas_src>

<mosaic_0001>
module attributes {stable_mosaic.version = 11 : i64} {
  func.func @_block_kernel(%arg0: i32, %arg1: memref<1x18x72xf32, #tpu.memory_space<vmem>>, %arg2: memref<3x72x256xf32, #tpu.memory_space<vmem>>, %arg3: memref<1x128xf32, #tpu.memory_space<vmem>>, %arg4: memref<3x128x128xf32, #tpu.memory_space<vmem>>, %arg5: memref<3x8x16xf32, #tpu.memory_space<vmem>>, %arg6: memref<8x16xf32, #tpu.memory_space<vmem>>, %arg7: memref<128x64xf32, #tpu.memory_space<vmem>>, %arg8: memref<1x64xf32, #tpu.memory_space<vmem>>, %arg9: memref<1x8x64xf32, #tpu.memory_space<vmem>>) attributes {dimension_semantics = [#tpu.dimension_semantics<parallel>], iteration_bounds = array<i64: 2>, scalar_prefetch = 0 : i64, scratch_operands = 0 : i64, tpu.core_type = #tpu.core_type<tc>, window_params = [{transform_indices = @transform_0, window_bounds = array<i64: 1, 18, 72>}, {pipeline_mode = #tpu.pipeline_mode<synchronous>, transform_indices = @transform_1, window_bounds = array<i64: 3, 72, 256>}, {pipeline_mode = #tpu.pipeline_mode<synchronous>, transform_indices = @transform_2, window_bounds = array<i64: 1, 128>}, {pipeline_mode = #tpu.pipeline_mode<synchronous>, transform_indices = @transform_3, window_bounds = array<i64: 3, 128, 128>}, {pipeline_mode = #tpu.pipeline_mode<synchronous>, transform_indices = @transform_4, window_bounds = array<i64: 3, 8, 16>}, {pipeline_mode = #tpu.pipeline_mode<synchronous>, transform_indices = @transform_5, window_bounds = array<i64: 8, 16>}, {pipeline_mode = #tpu.pipeline_mode<synchronous>, transform_indices = @transform_6, window_bounds = array<i64: 128, 64>}, {pipeline_mode = #tpu.pipeline_mode<synchronous>, transform_indices = @transform_7, window_bounds = array<i64: 1, 64>}, {transform_indices = @transform_8, window_bounds = array<i64: 1, 8, 64>}]} {
    %cst = arith.constant 0.000000e+00 : f32
    %0 = vector.broadcast %cst : f32 to vector<16x256xf32>
    %c0 = arith.constant 0 : index
    %c0_0 = arith.constant 0 : index
    %c0_1 = arith.constant 0 : index
    %1 = vector.load %arg1[%c0, %c0_0, %c0_1] : memref<1x18x72xf32, #tpu.memory_space<vmem>>, vector<1x16x72xf32>
    %2 = vector.shape_cast %1 : vector<1x16x72xf32> to vector<16x72xf32>
    %c0_2 = arith.constant 0 : index
    %c0_3 = arith.constant 0 : index
    %c0_4 = arith.constant 0 : index
    %3 = vector.load %arg2[%c0_2, %c0_3, %c0_4] : memref<3x72x256xf32, #tpu.memory_space<vmem>>, vector<1x72x256xf32>
    %4 = vector.shape_cast %3 : vector<1x72x256xf32> to vector<72x256xf32>
    %cst_5 = arith.constant dense<0.000000e+00> : vector<16x256xf32>
    %5 = tpu.matmul %2, %4, %cst_5 {dimension_numbers = #tpu.dot_dimension_numbers<[1], [0], [0], [1], [0, 0, 1, 1], [], []>, precision = #tpu.contract_precision<fp32>} : vector<16x72xf32>, vector<72x256xf32>, vector<16x256xf32> -> vector<16x256xf32>
    %6 = arith.addf %0, %5 : vector<16x256xf32>
    %c0_6 = arith.constant 0 : index
    %c1 = arith.constant 1 : index
    %c0_7 = arith.constant 0 : index
    %7 = vector.load %arg1[%c0_6, %c1, %c0_7] : memref<1x18x72xf32, #tpu.memory_space<vmem>>, vector<1x16x72xf32>
    %8 = vector.shape_cast %7 : vector<1x16x72xf32> to vector<16x72xf32>
    %c1_8 = arith.constant 1 : index
    %c0_9 = arith.constant 0 : index
    %c0_10 = arith.constant 0 : index
    %9 = vector.load %arg2[%c1_8, %c0_9, %c0_10] : memref<3x72x256xf32, #tpu.memory_space<vmem>>, vector<1x72x256xf32>
    %10 = vector.shape_cast %9 : vector<1x72x256xf32> to vector<72x256xf32>
    %cst_11 = arith.constant dense<0.000000e+00> : vector<16x256xf32>
    %11 = tpu.matmul %8, %10, %cst_11 {dimension_numbers = #tpu.dot_dimension_numbers<[1], [0], [0], [1], [0, 0, 1, 1], [], []>, precision = #tpu.contract_precision<fp32>} : vector<16x72xf32>, vector<72x256xf32>, vector<16x256xf32> -> vector<16x256xf32>
    %12 = arith.addf %6, %11 : vector<16x256xf32>
    %c0_12 = arith.constant 0 : index
    %c2 = arith.constant 2 : index
    %c0_13 = arith.constant 0 : index
    %13 = vector.load %arg1[%c0_12, %c2, %c0_13] : memref<1x18x72xf32, #tpu.memory_space<vmem>>, vector<1x16x72xf32>
    %14 = vector.shape_cast %13 : vector<1x16x72xf32> to vector<16x72xf32>
    %c2_14 = arith.constant 2 : index
    %c0_15 = arith.constant 0 : index
    %c0_16 = arith.constant 0 : index
    %15 = vector.load %arg2[%c2_14, %c0_15, %c0_16] : memref<3x72x256xf32, #tpu.memory_space<vmem>>, vector<1x72x256xf32>
    %16 = vector.shape_cast %15 : vector<1x72x256xf32> to vector<72x256xf32>
    %cst_17 = arith.constant dense<0.000000e+00> : vector<16x256xf32>
    %17 = tpu.matmul %14, %16, %cst_17 {dimension_numbers = #tpu.dot_dimension_numbers<[1], [0], [0], [1], [0, 0, 1, 1], [], []>, precision = #tpu.contract_precision<fp32>} : vector<16x72xf32>, vector<72x256xf32>, vector<16x256xf32> -> vector<16x256xf32>
    %18 = arith.addf %12, %17 : vector<16x256xf32>
    %19 = vector.extract_strided_slice %18 {offsets = [0, 0], sizes = [16, 128], strides = [1, 1]} : vector<16x256xf32> to vector<16x128xf32>
    %c0_18 = arith.constant 0 : index
    %c0_19 = arith.constant 0 : index
    %20 = vector.load %arg3[%c0_18, %c0_19] : memref<1x128xf32, #tpu.memory_space<vmem>>, vector<1x128xf32>
    %21 = vector.broadcast %20 : vector<1x128xf32> to vector<16x128xf32>
    %22 = arith.addf %19, %21 : vector<16x128xf32>
    %cst_20 = arith.constant 0.000000e+00 : f32
    %23 = vector.broadcast %cst_20 : f32 to vector<16x128xf32>
    %24 = arith.maximumf %22, %23 : vector<16x128xf32>
    %25 = vector.extract_strided_slice %18 {offsets = [0, 128], sizes = [16, 128], strides = [1, 1]} : vector<16x256xf32> to vector<16x128xf32>
    %cst_21 = arith.constant 0.000000e+00 : f32
    %26 = vector.broadcast %cst_21 : f32 to vector<8x128xf32>
    %c0_22 = arith.constant 0 : index
    %c0_23 = arith.constant 0 : index
    %c0_24 = arith.constant 0 : index
    %27 = vector.load %arg4[%c0_22, %c0_23, %c0_24] : memref<3x128x128xf32, #tpu.memory_space<vmem>>, vector<1x128x128xf32>
    %28 = vector.shape_cast %27 : vector<1x128x128xf32> to vector<128x128xf32>
    %cst_25 = arith.constant dense<0.000000e+00> : vector<16x128xf32>
    %29 = tpu.matmul %24, %28, %cst_25 {dimension_numbers = #tpu.dot_dimension_numbers<[1], [0], [0], [1], [0, 0, 1, 1], [], []>, precision = #tpu.contract_precision<fp32>} : vector<16x128xf32>, vector<128x128xf32>, vector<16x128xf32> -> vector<16x128xf32>
    %c0_26 = arith.constant 0 : index
    %c0_27 = arith.constant 0 : index
    %c0_28 = arith.constant 0 : index
    %30 = vector.load %arg5[%c0_26, %c0_27, %c0_28] : memref<3x8x16xf32, #tpu.memory_space<vmem>>, vector<1x8x16xf32>
    %31 = vector.shape_cast %30 : vector<1x8x16xf32> to vector<8x16xf32>
    %cst_29 = arith.constant dense<0.000000e+00> : vector<8x128xf32>
    %32 = tpu.matmul %31, %29, %cst_29 {dimension_numbers = #tpu.dot_dimension_numbers<[1], [0], [0], [1], [0, 0, 1, 1], [], []>, precision = #tpu.contract_precision<fp32>} : vector<8x16xf32>, vector<16x128xf32>, vector<8x128xf32> -> vector<8x128xf32>
    %33 = arith.addf %26, %32 : vector<8x128xf32>
    %c1_30 = arith.constant 1 : index
    %c0_31 = arith.constant 0 : index
    %c0_32 = arith.constant 0 : index
    %34 = vector.load %arg4[%c1_30, %c0_31, %c0_32] : memref<3x128x128xf32, #tpu.memory_space<vmem>>, vector<1x128x128xf32>
    %35 = vector.shape_cast %34 : vector<1x128x128xf32> to vector<128x128xf32>
    %cst_33 = arith.constant dense<0.000000e+00> : vector<16x128xf32>
    %36 = tpu.matmul %24, %35, %cst_33 {dimension_numbers = #tpu.dot_dimension_numbers<[1], [0], [0], [1], [0, 0, 1, 1], [], []>, precision = #tpu.contract_precision<fp32>} : vector<16x128xf32>, vector<128x128xf32>, vector<16x128xf32> -> vector<16x128xf32>
    %c1_34 = arith.constant 1 : index
    %c0_35 = arith.constant 0 : index
    %c0_36 = arith.constant 0 : index
    %37 = vector.load %arg5[%c1_34, %c0_35, %c0_36] : memref<3x8x16xf32, #tpu.memory_space<vmem>>, vector<1x8x16xf32>
    %38 = vector.shape_cast %37 : vector<1x8x16xf32> to vector<8x16xf32>
    %cst_37 = arith.constant dense<0.000000e+00> : vector<8x128xf32>
    %39 = tpu.matmul %38, %36, %cst_37 {dimension_numbers = #tpu.dot_dimension_numbers<[1], [0], [0], [1], [0, 0, 1, 1], [], []>, precision = #tpu.contract_precision<fp32>} : vector<8x16xf32>, vector<16x128xf32>, vector<8x128xf32> -> vector<8x128xf32>
    %40 = arith.addf %33, %39 : vector<8x128xf32>
    %c2_38 = arith.constant 2 : index
    %c0_39 = arith.constant 0 : index
    %c0_40 = arith.constant 0 : index
    %41 = vector.load %arg4[%c2_38, %c0_39, %c0_40] : memref<3x128x128xf32, #tpu.memory_space<vmem>>, vector<1x128x128xf32>
    %42 = vector.shape_cast %41 : vector<1x128x128xf32> to vector<128x128xf32>
    %cst_41 = arith.constant dense<0.000000e+00> : vector<16x128xf32>
    %43 = tpu.matmul %24, %42, %cst_41 {dimension_numbers = #tpu.dot_dimension_numbers<[1], [0], [0], [1], [0, 0, 1, 1], [], []>, precision = #tpu.contract_precision<fp32>} : vector<16x128xf32>, vector<128x128xf32>, vector<16x128xf32> -> vector<16x128xf32>
    %c2_42 = arith.constant 2 : index
    %c0_43 = arith.constant 0 : index
    %c0_44 = arith.constant 0 : index
    %44 = vector.load %arg5[%c2_42, %c0_43, %c0_44] : memref<3x8x16xf32, #tpu.memory_space<vmem>>, vector<1x8x16xf32>
    %45 = vector.shape_cast %44 : vector<1x8x16xf32> to vector<8x16xf32>
    %cst_45 = arith.constant dense<0.000000e+00> : vector<8x128xf32>
    %46 = tpu.matmul %45, %43, %cst_45 {dimension_numbers = #tpu.dot_dimension_numbers<[1], [0], [0], [1], [0, 0, 1, 1], [], []>, precision = #tpu.contract_precision<fp32>} : vector<8x16xf32>, vector<16x128xf32>, vector<8x128xf32> -> vector<8x128xf32>
    %47 = arith.addf %40, %46 : vector<8x128xf32>
    %c0_46 = arith.constant 0 : index
    %c0_47 = arith.constant 0 : index
    %48 = vector.load %arg6[%c0_46, %c0_47] : memref<8x16xf32, #tpu.memory_space<vmem>>, vector<8x16xf32>
    %cst_48 = arith.constant dense<0.000000e+00> : vector<8x128xf32>
    %49 = tpu.matmul %48, %25, %cst_48 {dimension_numbers = #tpu.dot_dimension_numbers<[1], [0], [0], [1], [0, 0, 1, 1], [], []>, precision = #tpu.contract_precision<fp32>} : vector<8x16xf32>, vector<16x128xf32>, vector<8x128xf32> -> vector<8x128xf32>
    %50 = arith.addf %47, %49 : vector<8x128xf32>
    %c0_49 = arith.constant 0 : index
    %c0_50 = arith.constant 0 : index
    %51 = vector.load %arg7[%c0_49, %c0_50] : memref<128x64xf32, #tpu.memory_space<vmem>>, vector<128x64xf32>
    %cst_51 = arith.constant dense<0.000000e+00> : vector<8x64xf32>
    %52 = tpu.matmul %50, %51, %cst_51 {dimension_numbers = #tpu.dot_dimension_numbers<[1], [0], [0], [1], [0, 0, 1, 1], [], []>, precision = #tpu.contract_precision<fp32>} : vector<8x128xf32>, vector<128x64xf32>, vector<8x64xf32> -> vector<8x64xf32>
    %c0_52 = arith.constant 0 : index
    %c0_53 = arith.constant 0 : index
    %53 = vector.load %arg8[%c0_52, %c0_53] : memref<1x64xf32, #tpu.memory_space<vmem>>, vector<1x64xf32>
    %54 = vector.broadcast %53 : vector<1x64xf32> to vector<8x64xf32>
    %55 = arith.addf %52, %54 : vector<8x64xf32>
    %cst_54 = arith.constant 0.000000e+00 : f32
    %56 = vector.broadcast %cst_54 : f32 to vector<8x64xf32>
    %57 = arith.maximumf %55, %56 : vector<8x64xf32>
    %58 = vector.shape_cast %57 : vector<8x64xf32> to vector<1x8x64xf32>
    %c0_55 = arith.constant 0 : index
    %c0_56 = arith.constant 0 : index
    %c0_57 = arith.constant 0 : index
    %59 = vector.load %arg9[%c0_55, %c0_56, %c0_57] : memref<1x8x64xf32, #tpu.memory_space<vmem>>, vector<1x8x64xf32>
    tpu.vector_store %arg9[%c0_55, %c0_56, %c0_57], %58 {strides = array<i32>} : memref<1x8x64xf32, #tpu.memory_space<vmem>>, vector<1x8x64xf32>,
    return
  }
  func.func @transform_0(%arg0: i32) -> (i32, i32, i32) {
    %c0_i32 = arith.constant 0 : i32
    %c0_i32_0 = arith.constant 0 : i32
    %c0_i32_1 = arith.constant 0 : i32
    return %arg0, %c0_i32, %c0_i32_0 : i32, i32, i32
  }
  func.func @transform_1(%arg0: i32) -> (i32, i32, i32) {
    %c0_i32 = arith.constant 0 : i32
    %c0_i32_0 = arith.constant 0 : i32
    %c0_i32_1 = arith.constant 0 : i32
    %c0_i32_2 = arith.constant 0 : i32
    return %c0_i32, %c0_i32_0, %c0_i32_1 : i32, i32, i32
  }
  func.func @transform_2(%arg0: i32) -> (i32, i32) {
    %c0_i32 = arith.constant 0 : i32
    %c0_i32_0 = arith.constant 0 : i32
    %c0_i32_1 = arith.constant 0 : i32
    return %c0_i32, %c0_i32_0 : i32, i32
  }
  func.func @transform_3(%arg0: i32) -> (i32, i32, i32) {
    %c0_i32 = arith.constant 0 : i32
    %c0_i32_0 = arith.constant 0 : i32
    %c0_i32_1 = arith.constant 0 : i32
    %c0_i32_2 = arith.constant 0 : i32
    return %c0_i32, %c0_i32_0, %c0_i32_1 : i32, i32, i32
  }
  func.func @transform_4(%arg0: i32) -> (i32, i32, i32) {
    %c0_i32 = arith.constant 0 : i32
    %c0_i32_0 = arith.constant 0 : i32
    %c0_i32_1 = arith.constant 0 : i32
    %c0_i32_2 = arith.constant 0 : i32
    return %c0_i32, %c0_i32_0, %c0_i32_1 : i32, i32, i32
  }
  func.func @transform_5(%arg0: i32) -> (i32, i32) {
    %c0_i32 = arith.constant 0 : i32
    %c0_i32_0 = arith.constant 0 : i32
    %c0_i32_1 = arith.constant 0 : i32
    return %c0_i32, %c0_i32_0 : i32, i32
  }
  func.func @transform_6(%arg0: i32) -> (i32, i32) {
    %c0_i32 = arith.constant 0 : i32
    %c0_i32_0 = arith.constant 0 : i32
    %c0_i32_1 = arith.constant 0 : i32
    return %c0_i32, %c0_i32_0 : i32, i32
  }
  func.func @transform_7(%arg0: i32) -> (i32, i32) {
    %c0_i32 = arith.constant 0 : i32
    %c0_i32_0 = arith.constant 0 : i32
    %c0_i32_1 = arith.constant 0 : i32
    return %c0_i32, %c0_i32_0 : i32, i32
  }
  func.func @transform_8(%arg0: i32) -> (i32, i32, i32) {
    %c0_i32 = arith.constant 0 : i32
    %c0_i32_0 = arith.constant 0 : i32
    %c0_i32_1 = arith.constant 0 : i32
    return %arg0, %c0_i32, %c0_i32_0 : i32, i32, i32
  }
}

</mosaic_0001>

<llo_original>
// kernel: tile.13
$region0: #{tile.13}
  #allocation0 [shape = 's32[1]{0}', space=sflag, size = 0x4, scoped, tag = 'scoped memory for tile.13']
  %s0 = inlined_call_operand.vmem [shape: f32[8], index: 0, kind: input, shape index: {}]
  %s1 = inlined_call_operand.vmem [shape: f32[16,8], index: 1, kind: output, shape index: {}]
  // Predicated region
  $region2: #{tile.13} parent=0 // pred_check
    _
  $region3: #{tile.13} parent=0 // pred_check_branch
    %3 = sbr.rel (0) target = $region5
  $region4: #{tile.13} parent=0 // pred_region
    _
  $region5: #{tile.13} parent=0 // pred_fallthru
    _
  %v4 = vld [vmem:[%s0] ss:$0 sm:$0xff]
  %5 = vst [vmem:[%s1] sm:$0xff] %v4
  %s6 = scalar_lea.vmem %s1, 8
  %7 = vst [vmem:[%s6] sm:$0xff] %v4

// kernel: tile.14
$region0: #{tile.14}
  %s0 = inlined_call_operand.vmem [shape: f32[16,8], index: 0, kind: input, shape index: {}]
  %s1 = inlined_call_operand.vmem [shape: f32[1,128], index: 1, kind: output, shape index: {}]
  $region1: #{tile.14} parent=0
    #allocation0 [shape = 'u8[4096]{0}', space=vmem, size = 0x1000, scoped, tag = 'scoped mem for output reshape']
    %v2 = vld [vmem:[%s0] sm:$0x1]
    %vm3 = vcmask 64512
    %4 = vst.msk [vmem:[#allocation0] sm:$0x1] %vm3, %v2
    %s5 = scalar_lea.vmem %s0, 15
    %v6 = vld [vmem:[%s5] sm:$0x1]
    %7 = vrot.lane.b32.xlu0 %v6, 120
    %v8 = vpop.permute.xlu0 %7
    %vm9 = vcmask 1048512
    %10 = vst.msk [vmem:[#allocation0] sm:$0x1] %vm9, %v8
    %s11 = scalar_lea.vmem %s0, 14
    %v12 = vld [vmem:[%s11] sm:$0x1]
    %13 = vrot.lane.b32.xlu0 %v12, 112
    %v14 = vpop.permute.xlu0 %13
    %vm15 = vcmask 982912
    %16 = vst.msk [vmem:[#allocation0] sm:$0x1] %vm15, %v14
    %s17 = scalar_lea.vmem %s0, 13
    %v18 = vld [vmem:[%s17] sm:$0x1]
    %19 = vrot.lane.b32.xlu0 %v18, 104
    %v20 = vpop.permute.xlu0 %19
    %vm21 = vcmask 917312
    %22 = vst.msk [vmem:[#allocation0] sm:$0x1] %vm21, %v20
    %s23 = scalar_lea.vmem %s0, 12
    %v24 = vld [vmem:[%s23] sm:$0x1]
    %25 = vrot.lane.b32.xlu0 %v24, 96
    %v26 = vpop.permute.xlu0 %25
    %vm27 = vcmask 851712
    %28 = vst.msk [vmem:[#allocation0] sm:$0x1] %vm27, %v26
    %s29 = scalar_lea.vmem %s0, 11
    %v30 = vld [vmem:[%s29] sm:$0x1]
    %31 = vrot.lane.b32.xlu0 %v30, 88
    %v32 = vpop.permute.xlu0 %31
    %vm33 = vcmask 786112
    %34 = vst.msk [vmem:[#allocation0] sm:$0x1] %vm33, %v32
    %s35 = scalar_lea.vmem %s0, 10
    %v36 = vld [vmem:[%s35] sm:$0x1]
    %37 = vrot.lane.b32.xlu0 %v36, 80
    %v38 = vpop.permute.xlu0 %37
    %vm39 = vcmask 720512
    %40 = vst.msk [vmem:[#allocation0] sm:$0x1] %vm39, %v38
    %s41 = scalar_lea.vmem %s0, 9
    %v42 = vld [vmem:[%s41] sm:$0x1]
    %43 = vrot.lane.b32.xlu0 %v42, 72
    %v44 = vpop.permute.xlu0 %43
    %vm45 = vcmask 654912
    %46 = vst.msk [vmem:[#allocation0] sm:$0x1] %vm45, %v44
    %s47 = scalar_lea.vmem %s0, 8
    %v48 = vld [vmem:[%s47] sm:$0x1]
    %49 = vrot.lane.b32.xlu0 %v48, 64
    %v50 = vpop.permute.xlu0 %49
    %vm51 = vcmask 589312
    %52 = vst.msk [vmem:[#allocation0] sm:$0x1] %vm51, %v50
    %s53 = scalar_lea.vmem %s0, 7
    %v54 = vld [vmem:[%s53] sm:$0x1]
    %55 = vrot.lane.b32.xlu0 %v54, 56
    %v56 = vpop.permute.xlu0 %55
    %vm57 = vcmask 523712
    %58 = vst.msk [vmem:[#allocation0] sm:$0x1] %vm57, %v56
    %s59 = scalar_lea.vmem %s0, 6
    %v60 = vld [vmem:[%s59] sm:$0x1]
    %61 = vrot.lane.b32.xlu0 %v60, 48
    %v62 = vpop.permute.xlu0 %61
    %vm63 = vcmask 458112
    %64 = vst.msk [vmem:[#allocation0] sm:$0x1] %vm63, %v62
    %s65 = scalar_lea.vmem %s0, 5
    %v66 = vld [vmem:[%s65] sm:$0x1]
    %67 = vrot.lane.b32.xlu0 %v66, 40
    %v68 = vpop.permute.xlu0 %67
    %vm69 = vcmask 392512
    %70 = vst.msk [vmem:[#allocation0] sm:$0x1] %vm69, %v68
    %s71 = scalar_lea.vmem %s0, 4
    %v72 = vld [vmem:[%s71] sm:$0x1]
    %73 = vrot.lane.b32.xlu0 %v72, 32
    %v74 = vpop.permute.xlu0 %73
    %vm75 = vcmask 326912
    %76 = vst.msk [vmem:[#allocation0] sm:$0x1] %vm75, %v74
    %s77 = scalar_lea.vmem %s0, 3
    %v78 = vld [vmem:[%s77] sm:$0x1]
    %79 = vrot.lane.b32.xlu0 %v78, 24
    %v80 = vpop.permute.xlu0 %79
    %vm81 = vcmask 261312
    %82 = vst.msk [vmem:[#allocation0] sm:$0x1] %vm81, %v80
    %s83 = scalar_lea.vmem %s0, 2
    %v84 = vld [vmem:[%s83] sm:$0x1]
    %85 = vrot.lane.b32.xlu0 %v84, 16
    %v86 = vpop.permute.xlu0 %85
    %vm87 = vcmask 195712
    %88 = vst.msk [vmem:[#allocation0] sm:$0x1] %vm87, %v86
    %s89 = scalar_lea.vmem %s0, 1
    %v90 = vld [vmem:[%s89] sm:$0x1]
    %91 = vrot.lane.b32.xlu0 %v90, 8
    %v92 = vpop.permute.xlu0 %91
    %vm93 = vcmask 130112
    %94 = vst.msk [vmem:[#allocation0] sm:$0x1] %vm93, %v92
    %s96 = ssub.s32 2, 1
    %v97 = vld [vmem:[#allocation0] sm:%s96]
    %s99 = ssub.s32 2, 1
    %100 = vst [vmem:[%s1] sm:%s99] %v97

// kernel: tile.18
$region0: #{tile.18}
  #allocation0 [shape = 's32[1]{0}', space=sflag, size = 0x4, scoped, tag = 'scoped memory for tile.18']
  %s0 = inlined_call_operand.vmem [shape: f32[8], index: 0, kind: input, shape index: {}]
  %s1 = inlined_call_operand.vmem [shape: f32[8,8], index: 1, kind: output, shape index: {}]
  // Predicated region
  $region2: #{tile.18} parent=0 // pred_check
    _
  $region3: #{tile.18} parent=0 // pred_check_branch
    %3 = sbr.rel (0) target = $region5
  $region4: #{tile.18} parent=0 // pred_region
    _
  $region5: #{tile.18} parent=0 // pred_fallthru
    _
  %v4 = vld [vmem:[%s0] ss:$0 sm:$0xff]
  %5 = vst [vmem:[%s1] sm:$0xff] %v4

// kernel: tile.19
$region0: #{tile.19}
  %s0 = inlined_call_operand.vmem [shape: f32[8,8], index: 0, kind: input, shape index: {}]
  %s1 = inlined_call_operand.vmem [shape: f32[1,64], index: 1, kind: output, shape index: {}]
  $region1: #{tile.19} parent=0
    #allocation0 [shape = 'u8[4096]{0}', space=vmem, size = 0x1000, scoped, tag = 'scoped mem for output reshape']
    %v2 = vld [vmem:[%s0] sm:$0x1]
    %vm3 = vcmask 64512
    %4 = vst.msk [vmem:[#allocation0] sm:$0x1] %vm3, %v2
    %s5 = scalar_lea.vmem %s0, 7
    %v6 = vld [vmem:[%s5] sm:$0x1]
    %7 = vrot.lane.b32.xlu0 %v6, 56
    %v8 = vpop.permute.xlu0 %7
    %vm9 = vcmask 523712
    %10 = vst.msk [vmem:[#allocation0] sm:$0x1] %vm9, %v8
    %s11 = scalar_lea.vmem %s0, 6
    %v12 = vld [vmem:[%s11] sm:$0x1]
    %13 = vrot.lane.b32.xlu0 %v12, 48
    %v14 = vpop.permute.xlu0 %13
    %vm15 = vcmask 458112
    %16 = vst.msk [vmem:[#allocation0] sm:$0x1] %vm15, %v14
    %s17 = scalar_lea.vmem %s0, 5
    %v18 = vld [vmem:[%s17] sm:$0x1]
    %19 = vrot.lane.b32.xlu0 %v18, 40
    %v20 = vpop.permute.xlu0 %19
    %vm21 = vcmask 392512
    %22 = vst.msk [vmem:[#allocation0] sm:$0x1] %vm21, %v20
    %s23 = scalar_lea.vmem %s0, 4
    %v24 = vld [vmem:[%s23] sm:$0x1]
    %25 = vrot.lane.b32.xlu0 %v24, 32
    %v26 = vpop.permute.xlu0 %25
    %vm27 = vcmask 326912
    %28 = vst.msk [vmem:[#allocation0] sm:$0x1] %vm27, %v26
    %s29 = scalar_lea.vmem %s0, 3
    %v30 = vld [vmem:[%s29] sm:$0x1]
    %31 = vrot.lane.b32.xlu0 %v30, 24
    %v32 = vpop.permute.xlu0 %31
    %vm33 = vcmask 261312
    %34 = vst.msk [vmem:[#allocation0] sm:$0x1] %vm33, %v32
    %s35 = scalar_lea.vmem %s0, 2
    %v36 = vld [vmem:[%s35] sm:$0x1]
    %37 = vrot.lane.b32.xlu0 %v36, 16
    %v38 = vpop.permute.xlu0 %37
    %vm39 = vcmask 195712
    %40 = vst.msk [vmem:[#allocation0] sm:$0x1] %vm39, %v38
    %s41 = scalar_lea.vmem %s0, 1
    %v42 = vld [vmem:[%s41] sm:$0x1]
    %43 = vrot.lane.b32.xlu0 %v42, 8
    %v44 = vpop.permute.xlu0 %43
    %vm45 = vcmask 130112
    %46 = vst.msk [vmem:[#allocation0] sm:$0x1] %vm45, %v44
    %s48 = ssub.s32 2, 1
    %v49 = vld [vmem:[#allocation0] sm:%s48]
    %s51 = ssub.s32 2, 1
    %52 = vst [vmem:[%s1] sm:%s51] %v49

// kernel: downscale_basic_block.1
$region0: #{downscale_basic_block.1}
  #allocation0 [shape = 'u32[]', space=smem, size = 0x4, offset = 0x4, fixed_abs, tag = 'smem constant byte address 0x4 - core index']
  #allocation1 [shape = 'u32[72,128]{1,0:T(1,128)}', space=vmem, size = 0x9000, scoped, tag = 'internal scratch']
  %s0 = inlined_call_operand.vmem [shape: f32[2,18,72], index: 0, kind: input, shape index: {}]
  %s1 = inlined_call_operand.vmem [shape: f32[3,72,256], index: 1, kind: input, shape index: {}]
  %s2 = inlined_call_operand.vmem [shape: f32[1,128], index: 2, kind: input, shape index: {}]
  %s3 = inlined_call_operand.vmem [shape: f32[3,128,128], index: 3, kind: input, shape index: {}]
  %s4 = inlined_call_operand.vmem [shape: f32[3,8,16], index: 4, kind: input, shape index: {}]
  %s5 = inlined_call_operand.vmem [shape: f32[8,16], index: 5, kind: input, shape index: {}]
  %s6 = inlined_call_operand.vmem [shape: f32[128,64], index: 6, kind: input, shape index: {}]
  %s7 = inlined_call_operand.vmem [shape: f32[1,64], index: 7, kind: input, shape index: {}]
  %s8 = inlined_call_operand.vmem [shape: f32[2,8,64], index: 8, kind: output, shape index: {}]
  %s9 = sld [smem:[#allocation0]]
  $region65: #{downscale_basic_block.1} parent=0
    _
  %s11 = ssub.s32 1, %s9
  %s12 = scalar_select 0, %s11, %s9
  loop: start=0, step=1, limit=4
  $region2: #{downscale_basic_block.1} parent=0 // loop_pre_header
    _
  $region3: #{downscale_basic_block.1} parent=0 // loop_header
    %s14 = sphi 0, %s18
    %p15 = scmp.ge.s32.totalorder %s14, 4
    %s24 = sphi 0, %s26
    %s27 = sphi 0, %s24
    %s28 = sphi 0, %s27
    %s44 = sphi 0, %s28
    %s48 = sphi 0, %s48
    %s50 = sphi 0, %s48
    %s51 = sphi 0, %s50
    %s65 = sphi 0, %s51
    %s69 = sphi 0, %s69
    %s71 = sphi 0, %s69
    %s72 = sphi 0, %s71
    %s86 = sphi 0, %s72
    %s90 = sphi 0, %s90
    %s92 = sphi 0, %s90
    %s93 = sphi 0, %s92
    %s107 = sphi 0, %s93
    %s111 = sphi 0, %s111
    %s113 = sphi 0, %s111
    %s114 = sphi 0, %s113
    %s128 = sphi 0, %s114
    %s132 = sphi 0, %s132
    %s134 = sphi 0, %s132
    %s135 = sphi 0, %s134
    %s149 = sphi 0, %s135
    %s153 = sphi 0, %s153
    %s155 = sphi 0, %s153
    %s156 = sphi 0, %s155
    %s170 = sphi 0, %s156
    %s174 = sphi 0, %s174
    %s176 = sphi 0, %s174
    %s177 = sphi 0, %s176
    %s191 = sphi 0, %s177
    %s197 = sphi 0, %s199
    %s200 = sphi 0, %s197
    %s201 = sphi 0, %s200
    %s217 = sphi 0, %s201
  $region4: #{downscale_basic_block.1} parent=0 // loop_header_branch
    %17 = sbr.rel (%p15) target = $region8
  $region5: #{downscale_basic_block.1} parent=0 // loop_body
    %s19 = ssub.s32 %s14, 1
    %s20 = ssub.s32 %s14, 2
    %s21 = sadd.s32 %s14, 1
    %s22 = ssub.s32 %s14, %s21
    %p23 = scmp.eq.s32.totalorder %s22, 0
    %s25 = sadd.s32 %s24, 1
    %s26 = scalar_select %p23, %s24, %s25
    %p29 = pneg %p23
    %p30 = scmp.eq.s32.totalorder %s14, 1
    %p31 = por %p29, %p30
    %p32 = scmp.ne.s32.totalorder %s24, %s27
    %p33 = scmp.eq.s32.totalorder %s14, 0
    %p34 = por %p32, %p33
    %p35 = scmp.ne.s32.totalorder %s24, %s27
    %p36 = scmp.eq.s32.totalorder %s19, 1
    %p37 = por %p35, %p36
    %p38 = scmp.ne.s32.totalorder %s27, %s28
    %p39 = scmp.eq.s32.totalorder %s19, 0
    %p40 = por %p38, %p39
    %p41 = scmp.ne.s32.totalorder %s27, %s28
    %p42 = scmp.eq.s32.totalorder %s20, 1
    %p43 = por %p41, %p42
    %p45 = scmp.ne.s32.totalorder %s28, %s44
    %p46 = scmp.eq.s32.totalorder %s20, 0
    %p47 = por %p45, %p46
    %s49 = sadd.s32 %s48, 1
    %p52 = scmp.eq.s32.totalorder %s14, 1
    %p53 = scmp.ne.s32.totalorder %s48, %s50
    %p54 = scmp.eq.s32.totalorder %s14, 0
    %p55 = por %p53, %p54
    %p56 = scmp.ne.s32.totalorder %s48, %s50
    %p57 = scmp.eq.s32.totalorder %s19, 1
    %p58 = por %p56, %p57
    %p59 = scmp.ne.s32.totalorder %s50, %s51
    %p60 = scmp.eq.s32.totalorder %s19, 0
    %p61 = por %p59, %p60
    %p62 = scmp.ne.s32.totalorder %s50, %s51
    %p63 = scmp.eq.s32.totalorder %s20, 1
    %p64 = por %p62, %p63
    %p66 = scmp.ne.s32.totalorder %s51, %s65
    %p67 = scmp.eq.s32.totalorder %s20, 0
    %p68 = por %p66, %p67
    %s70 = sadd.s32 %s69, 1
    %p73 = scmp.eq.s32.totalorder %s14, 1
    %p74 = scmp.ne.s32.totalorder %s69, %s71
    %p75 = scmp.eq.s32.totalorder %s14, 0
    %p76 = por %p74, %p75
    %p77 = scmp.ne.s32.totalorder %s69, %s71
    %p78 = scmp.eq.s32.totalorder %s19, 1
    %p79 = por %p77, %p78
    %p80 = scmp.ne.s32.totalorder %s71, %s72
    %p81 = scmp.eq.s32.totalorder %s19, 0
    %p82 = por %p80, %p81
    %p83 = scmp.ne.s32.totalorder %s71, %s72
    %p84 = scmp.eq.s32.totalorder %s20, 1
    %p85 = por %p83, %p84
    %p87 = scmp.ne.s32.totalorder %s72, %s86
    %p88 = scmp.eq.s32.totalorder %s20, 0
    %p89 = por %p87, %p88
    %s91 = sadd.s32 %s90, 1
    %p94 = scmp.eq.s32.totalorder %s14, 1
    %p95 = scmp.ne.s32.totalorder %s90, %s92
    %p96 = scmp.eq.s32.totalorder %s14, 0
    %p97 = por %p95, %p96
    %p98 = scmp.ne.s32.totalorder %s90, %s92
    %p99 = scmp.eq.s32.totalorder %s19, 1
    %p100 = por %p98, %p99
    %p101 = scmp.ne.s32.totalorder %s92, %s93
    %p102 = scmp.eq.s32.totalorder %s19, 0
    %p103 = por %p101, %p102
    %p104 = scmp.ne.s32.totalorder %s92, %s93
    %p105 = scmp.eq.s32.totalorder %s20, 1
    %p106 = por %p104, %p105
    %p108 = scmp.ne.s32.totalorder %s93, %s107
    %p109 = scmp.eq.s32.totalorder %s20, 0
    %p110 = por %p108, %p109
    %s112 = sadd.s32 %s111, 1
    %p115 = scmp.eq.s32.totalorder %s14, 1
    %p116 = scmp.ne.s32.totalorder %s111, %s113
    %p117 = scmp.eq.s32.totalorder %s14, 0
    %p118 = por %p116, %p117
    %p119 = scmp.ne.s32.totalorder %s111, %s113
    %p120 = scmp.eq.s32.totalorder %s19, 1
    %p121 = por %p119, %p120
    %p122 = scmp.ne.s32.totalorder %s113, %s114
    %p123 = scmp.eq.s32.totalorder %s19, 0
    %p124 = por %p122, %p123
    %p125 = scmp.ne.s32.totalorder %s113, %s114
    %p126 = scmp.eq.s32.totalorder %s20, 1
    %p127 = por %p125, %p126
    %p129 = scmp.ne.s32.totalorder %s114, %s128
    %p130 = scmp.eq.s32.totalorder %s20, 0
    %p131 = por %p129, %p130
    %s133 = sadd.s32 %s132, 1
    %p136 = scmp.eq.s32.totalorder %s14, 1
    %p137 = scmp.ne.s32.totalorder %s132, %s134
    %p138 = scmp.eq.s32.totalorder %s14, 0
    %p139 = por %p137, %p138
    %p140 = scmp.ne.s32.totalorder %s132, %s134
    %p141 = scmp.eq.s32.totalorder %s19, 1
    %p142 = por %p140, %p141
    %p143 = scmp.ne.s32.totalorder %s134, %s135
    %p144 = scmp.eq.s32.totalorder %s19, 0
    %p145 = por %p143, %p144
    %p146 = scmp.ne.s32.totalorder %s134, %s135
    %p147 = scmp.eq.s32.totalorder %s20, 1
    %p148 = por %p146, %p147
    %p150 = scmp.ne.s32.totalorder %s135, %s149
    %p151 = scmp.eq.s32.totalorder %s20, 0
    %p152 = por %p150, %p151
    %s154 = sadd.s32 %s153, 1
    %p157 = scmp.eq.s32.totalorder %s14, 1
    %p158 = scmp.ne.s32.totalorder %s153, %s155
    %p159 = scmp.eq.s32.totalorder %s14, 0
    %p160 = por %p158, %p159
    %p161 = scmp.ne.s32.totalorder %s153, %s155
    %p162 = scmp.eq.s32.totalorder %s19, 1
    %p163 = por %p161, %p162
    %p164 = scmp.ne.s32.totalorder %s155, %s156
    %p165 = scmp.eq.s32.totalorder %s19, 0
    %p166 = por %p164, %p165
    %p167 = scmp.ne.s32.totalorder %s155, %s156
    %p168 = scmp.eq.s32.totalorder %s20, 1
    %p169 = por %p167, %p168
    %p171 = scmp.ne.s32.totalorder %s156, %s170
    %p172 = scmp.eq.s32.totalorder %s20, 0
    %p173 = por %p171, %p172
    %s175 = sadd.s32 %s174, 1
    %p178 = scmp.eq.s32.totalorder %s14, 1
    %p179 = scmp.ne.s32.totalorder %s174, %s176
    %p180 = scmp.eq.s32.totalorder %s14, 0
    %p181 = por %p179, %p180
    %p182 = scmp.ne.s32.totalorder %s174, %s176
    %p183 = scmp.eq.s32.totalorder %s19, 1
    %p184 = por %p182, %p183
    %p185 = scmp.ne.s32.totalorder %s176, %s177
    %p186 = scmp.eq.s32.totalorder %s19, 0
    %p187 = por %p185, %p186
    %p188 = scmp.ne.s32.totalorder %s176, %s177
    %p189 = scmp.eq.s32.totalorder %s20, 1
    %p190 = por %p188, %p189
    %p192 = scmp.ne.s32.totalorder %s177, %s191
    %p193 = scmp.eq.s32.totalorder %s20, 0
    %p194 = por %p192, %p193
    %s195 = ssub.s32 %s14, %s21
    %p196 = scmp.eq.s32.totalorder %s195, 0
    %s198 = sadd.s32 %s197, 1
    %s199 = scalar_select %p196, %s197, %s198
    %p202 = pneg %p196
    %p203 = scmp.eq.s32.totalorder %s14, 1
    %p204 = por %p202, %p203
    %p205 = scmp.ne.s32.totalorder %s197, %s200
    %p206 = scmp.eq.s32.totalorder %s14, 0
    %p207 = por %p205, %p206
    %p208 = scmp.ne.s32.totalorder %s197, %s200
    %p209 = scmp.eq.s32.totalorder %s19, 1
    %p210 = por %p208, %p209
    %p211 = scmp.ne.s32.totalorder %s200, %s201
    %p212 = scmp.eq.s32.totalorder %s19, 0
    %p213 = por %p211, %p212
    %p214 = scmp.ne.s32.totalorder %s200, %s201
    %p215 = scmp.eq.s32.totalorder %s20, 1
    %p216 = por %p214, %p215
    %p218 = scmp.ne.s32.totalorder %s201, %s217
    %p219 = scmp.eq.s32.totalorder %s20, 0
    %p220 = por %p218, %p219
    %p221 = scmp.le.s32.totalorder 1, %s14
    %p222 = scmp.lt.s32.totalorder %s14, 3
    %p223 = pnand %p221, %p222
    %p224 = pneg %p223
    // Predicated region
    $region9: #{downscale_basic_block.1} parent=5 // pred_check
      _
    $region10: #{downscale_basic_block.1} parent=5 // pred_check_branch
      %226 = sbr.rel (%p223) target = $region12
    $region11: #{downscale_basic_block.1} parent=5 // pred_region
      %s227 = ssub.s32 %s14, 1
      // Predicated region
      $region13: #{downscale_basic_block.1} parent=11 // pred_check
        %p228 = pneg %p61
      $region14: #{downscale_basic_block.1} parent=11 // pred_check_branch
        %230 = sbr.rel (%p228) target = $region16
      $region15: #{downscale_basic_block.1} parent=11 // pred_region
        _
      $region16: #{downscale_basic_block.1} parent=11 // pred_fallthru
        _
      // Predicated region
      $region17: #{downscale_basic_block.1} parent=11 // pred_check
        %p231 = pneg %p82
      $region18: #{downscale_basic_block.1} parent=11 // pred_check_branch
        %233 = sbr.rel (%p231) target = $region20
      $region19: #{downscale_basic_block.1} parent=11 // pred_region
        _
      $region20: #{downscale_basic_block.1} parent=11 // pred_fallthru
        _
      // Predicated region
      $region21: #{downscale_basic_block.1} parent=11 // pred_check
        %p234 = pneg %p103
      $region22: #{downscale_basic_block.1} parent=11 // pred_check_branch
        %236 = sbr.rel (%p234) target = $region24
      $region23: #{downscale_basic_block.1} parent=11 // pred_region
        _
      $region24: #{downscale_basic_block.1} parent=11 // pred_fallthru
        _
      // Predicated region
      $region25: #{downscale_basic_block.1} parent=11 // pred_check
        %p237 = pneg %p124
      $region26: #{downscale_basic_block.1} parent=11 // pred_check_branch
        %239 = sbr.rel (%p237) target = $region28
      $region27: #{downscale_basic_block.1} parent=11 // pred_region
        _
      $region28: #{downscale_basic_block.1} parent=11 // pred_fallthru
        _
      // Predicated region
      $region29: #{downscale_basic_block.1} parent=11 // pred_check
        %p240 = pneg %p145
      $region30: #{downscale_basic_block.1} parent=11 // pred_check_branch
        %242 = sbr.rel (%p240) target = $region32
      $region31: #{downscale_basic_block.1} parent=11 // pred_region
        _
      $region32: #{downscale_basic_block.1} parent=11 // pred_fallthru
        _
      // Predicated region
      $region33: #{downscale_basic_block.1} parent=11 // pred_check
        %p243 = pneg %p166
      $region34: #{downscale_basic_block.1} parent=11 // pred_check_branch
        %245 = sbr.rel (%p243) target = $region36
      $region35: #{downscale_basic_block.1} parent=11 // pred_region
        _
      $region36: #{downscale_basic_block.1} parent=11 // pred_fallthru
        _
      // Predicated region
      $region37: #{downscale_basic_block.1} parent=11 // pred_check
        %p246 = pneg %p187
      $region38: #{downscale_basic_block.1} parent=11 // pred_check_branch
        %248 = sbr.rel (%p246) target = $region40
      $region39: #{downscale_basic_block.1} parent=11 // pred_region
        _
      $region40: #{downscale_basic_block.1} parent=11 // pred_fallthru
        _
    $region12: #{downscale_basic_block.1} parent=5 // pred_fallthru
      _
    %p249 = scmp.lt.s32.totalorder %s14, 2
    // Predicated region
    $region41: #{downscale_basic_block.1} parent=5 // pred_check
      %p250 = pneg %p249
    $region42: #{downscale_basic_block.1} parent=5 // pred_check_branch
      %252 = sbr.rel (%p250) target = $region44
    $region43: #{downscale_basic_block.1} parent=5 // pred_region
      // Predicated region
      $region45: #{downscale_basic_block.1} parent=43 // pred_check
        %p253 = pneg %p34
      $region46: #{downscale_basic_block.1} parent=43 // pred_check_branch
        %255 = sbr.rel (%p253) target = $region48
      $region47: #{downscale_basic_block.1} parent=43 // pred_region
        %p256 = scmp.lt.s32.totalorder %s14, 1
        %s257 = scalar_select %p256, %s14, 1
        %s258 = smul.addr %s257, 3
        %s259 = smul.addr %s258, 8
        %s260 = scalar_lea.vmem %s0, %s259
      $region48: #{downscale_basic_block.1} parent=43 // pred_fallthru
        _
    $region44: #{downscale_basic_block.1} parent=5 // pred_fallthru
      _
    %p261 = scmp.le.s32.totalorder 1, %s14
    %p262 = scmp.lt.s32.totalorder %s14, 3
    %p263 = pnand %p261, %p262
    %p264 = pneg %p263
    // Predicated region
    $region49: #{downscale_basic_block.1} parent=5 // pred_check
      _
    $region50: #{downscale_basic_block.1} parent=5 // pred_check_branch
      %266 = sbr.rel (%p263) target = $region52
    $region51: #{downscale_basic_block.1} parent=5 // pred_region
      %s267 = ssub.s32 %s14, 1
      %p268 = scmp.lt.s32.totalorder %s19, 1
      %s269 = scalar_select %p268, %s19, 1
      %s270 = smul.addr %s269, 3
      %s271 = smul.addr %s270, 8
      %s272 = scalar_lea.vmem %s0, %s271
      %p273 = pneg %p40
      %p274 = pneg %p37
      %p275 = pneg %p61
      %p276 = pneg %p58
      %p277 = pneg %p82
      %p278 = pneg %p79
      %p279 = pneg %p103
      %p280 = pneg %p100
      %p281 = pneg %p124
      %p282 = pneg %p121
      %p283 = pneg %p145
      %p284 = pneg %p142
      %p285 = pneg %p166
      %p286 = pneg %p163
      %p287 = pneg %p187
      %p288 = pneg %p184
      %p289 = pneg %p213
      %p290 = pneg %p210
      %p291 = scmp.lt.s32.totalorder %s19, 1
      %s292 = scalar_select %p291, %s19, 1
      %s293 = smul.addr %s292, 8
      %s294 = scalar_lea.vmem %s8, %s293
      %p295 = scmp.lt.s32.totalorder %s19, 1
      %s296 = scalar_select %p295, %s19, 1
      %s297 = smul.addr %s296, 3
      %s298 = smul.addr %s297, 8
      %s299 = scalar_lea.vmem %s0, %s298
      %p300 = scmp.lt.s32.totalorder %s19, 1
      %s301 = scalar_select %p300, %s19, 1
      %s302 = smul.addr %s301, 8
      %s303 = scalar_lea.vmem %s8, %s302
      %v304 = vld [vmem:[%s299] sm:$0xff]
      %v305 = vld [vmem:[%s299 + $0x8] sm:$0xff]
      %v306 = vld [vmem:[%s1] sm:$0xff]
      %v307 = vld [vmem:[%s1 + $0x8] sm:$0xff]
      %v308 = vld [vmem:[%s1 + $0x10] sm:$0xff]
      %v309 = vld [vmem:[%s1 + $0x18] sm:$0xff]
      %v310 = vld [vmem:[%s1 + $0x20] sm:$0xff]
      %v311 = vld [vmem:[%s1 + $0x28] sm:$0xff]
      %v312 = vld [vmem:[%s1 + $0x30] sm:$0xff]
      %v313 = vld [vmem:[%s1 + $0x38] sm:$0xff]
      %v314 = vld [vmem:[%s1 + $0x40] sm:$0xff]
      %v315 = vld [vmem:[%s1 + $0x48] sm:$0xff]
      %v316 = vld [vmem:[%s1 + $0x50] sm:$0xff]
      %v317 = vld [vmem:[%s1 + $0x58] sm:$0xff]
      %v318 = vld [vmem:[%s1 + $0x60] sm:$0xff]
      %v319 = vld [vmem:[%s1 + $0x68] sm:$0xff]
      %v320 = vld [vmem:[%s1 + $0x70] sm:$0xff]
      %v321 = vld [vmem:[%s1 + $0x78] sm:$0xff]
      %v322 = vld [vmem:[%s1 + $0x80] sm:$0xff]
      %v323 = vld [vmem:[%s1 + $0x88] sm:$0xff]
      %v324 = vld [vmem:[%s299 + $0x1] sm:$0xff]
      %v325 = vld [vmem:[%s299 + $0x9] sm:$0xff]
      %s326 = scalar_lea.vmem %s1, 144
      %v327 = vld [vmem:[%s326] sm:$0xff]
      %v328 = vld [vmem:[%s326 + $0x8] sm:$0xff]
      %v329 = vld [vmem:[%s326 + $0x10] sm:$0xff]
      %v330 = vld [vmem:[%s326 + $0x18] sm:$0xff]
      %v331 = vld [vmem:[%s326 + $0x20] sm:$0xff]
      %v332 = vld [vmem:[%s326 + $0x28] sm:$0xff]
      %v333 = vld [vmem:[%s326 + $0x30] sm:$0xff]
      %v334 = vld [vmem:[%s326 + $0x38] sm:$0xff]
      %v335 = vld [vmem:[%s326 + $0x40] sm:$0xff]
      %v336 = vld [vmem:[%s326 + $0x48] sm:$0xff]
      %v337 = vld [vmem:[%s326 + $0x50] sm:$0xff]
      %v338 = vld [vmem:[%s326 + $0x58] sm:$0xff]
      %v339 = vld [vmem:[%s326 + $0x60] sm:$0xff]
      %v340 = vld [vmem:[%s326 + $0x68] sm:$0xff]
      %v341 = vld [vmem:[%s326 + $0x70] sm:$0xff]
      %v342 = vld [vmem:[%s326 + $0x78] sm:$0xff]
      %v343 = vld [vmem:[%s326 + $0x80] sm:$0xff]
      %v344 = vld [vmem:[%s326 + $0x88] sm:$0xff]
      %vm345 = vcmask 588800
      %v347 = vsel %vm345, %v324, 0
      %v350 = vsel %vm345, %v325, 0
      %352 = vmatpush.msra.mxu0 0.0
      %353 = vmatpush.msra.mxu0 0.0
      %354 = vmatpush.msra.mxu0 0.0
      %355 = vmatpush.msra.mxu0 0.0
      %356 = vmatpush.msra.mxu0 0.0
      %357 = vmatpush.msra.mxu0 0.0
      %358 = vmatpush.msra.mxu0 0.0
      %v359 = vand.u32 %v343, 4294901760
      %360 = vmatpush.msra.mxu0 %v359
      %v361 = vand.u32 %v341, 4294901760
      %362 = vmatpush.msra.mxu0 %v361
      %v363 = vand.u32 %v339, 4294901760
      %364 = vmatpush.msra.mxu0 %v363
      %v365 = vand.u32 %v337, 4294901760
      %366 = vmatpush.msra.mxu0 %v365
      %v367 = vand.u32 %v335, 4294901760
      %368 = vmatpush.msra.mxu0 %v367
      %v369 = vand.u32 %v333, 4294901760
      %370 = vmatpush.msra.mxu0 %v369
      %v371 = vand.u32 %v331, 4294901760
      %372 = vmatpush.msra.mxu0 %v371
      %v373 = vand.u32 %v329, 4294901760
      %374 = vmatpush.msra.mxu0 %v373
      %v375 = vand.u32 %v327, 4294901760
      %376 = vmatpush.msra.mxu0 %v375
      %v377 = vand.u32 %v347, 4294901760
      %v378 = vsub.f32 %v347, %v377
      %v379 = vand.u32 %v378, 4294901760
      %v380 = vsub.f32 %v378, %v379
      %v381 = vand.u32 %v380, 4294901760
      %382 = vmatmul.f32.gmra.mxu0 %v381
      %v383 = vpop.f32.mrf.mxu0
      %v384 = vadd.f32 0.0, %v383
      %v385 = vand.u32 %v350, 4294901760
      %v386 = vsub.f32 %v350, %v385
      %v387 = vand.u32 %v386, 4294901760
      %v388 = vsub.f32 %v386, %v387
      %v389 = vand.u32 %v388, 4294901760
      %390 = vmatmul.f32.gmra.mxu0 %v389
      %v391 = vpop.f32.mrf.mxu0
      %v392 = vadd.f32 0.0, %v391
      %393 = vdwg.mxu0
      %394 = vmatpush.msra.mxu0 0.0
      %395 = vmatpush.msra.mxu0 0.0
      %396 = vmatpush.msra.mxu0 0.0
      %397 = vmatpush.msra.mxu0 0.0
      %398 = vmatpush.msra.mxu0 0.0
      %399 = vmatpush.msra.mxu0 0.0
      %400 = vmatpush.msra.mxu0 0.0
      %v401 = vand.u32 %v343, 4294901760
      %v402 = vsub.f32 %v343, %v401
      %v403 = vand.u32 %v402, 4294901760
      %v404 = vsub.f32 %v402, %v403
      %v405 = vand.u32 %v404, 4294901760
      %406 = vmatpush.msra.mxu0 %v405
      %v407 = vand.u32 %v341, 4294901760
      %v408 = vsub.f32 %v341, %v407
      %v409 = vand.u32 %v408, 4294901760
      %v410 = vsub.f32 %v408, %v409
      %v411 = vand.u32 %v410, 4294901760
      %412 = vmatpush.msra.mxu0 %v411
      %v413 = vand.u32 %v339, 4294901760
      %v414 = vsub.f32 %v339, %v413
      %v415 = vand.u32 %v414, 4294901760
      %v416 = vsub.f32 %v414, %v415
      %v417 = vand.u32 %v416, 4294901760
      %418 = vmatpush.msra.mxu0 %v417
      %v419 = vand.u32 %v337, 4294901760
      %v420 = vsub.f32 %v337, %v419
      %v421 = vand.u32 %v420, 4294901760
      %v422 = vsub.f32 %v420, %v421
      %v423 = vand.u32 %v422, 4294901760
      %424 = vmatpush.msra.mxu0 %v423
      %v425 = vand.u32 %v335, 4294901760
      %v426 = vsub.f32 %v335, %v425
      %v427 = vand.u32 %v426, 4294901760
      %v428 = vsub.f32 %v426, %v427
      %v429 = vand.u32 %v428, 4294901760
      %430 = vmatpush.msra.mxu0 %v429
      %v431 = vand.u32 %v333, 4294901760
      %v432 = vsub.f32 %v333, %v431
      %v433 = vand.u32 %v432, 4294901760
      %v434 = vsub.f32 %v432, %v433
      %v435 = vand.u32 %v434, 4294901760
      %436 = vmatpush.msra.mxu0 %v435
      %v437 = vand.u32 %v331, 4294901760
      %v438 = vsub.f32 %v331, %v437
      %v439 = vand.u32 %v438, 4294901760
      %v440 = vsub.f32 %v438, %v439
      %v441 = vand.u32 %v440, 4294901760
      %442 = vmatpush.msra.mxu0 %v441
      %v443 = vand.u32 %v329, 4294901760
      %v444 = vsub.f32 %v329, %v443
      %v445 = vand.u32 %v444, 4294901760
      %v446 = vsub.f32 %v444, %v445
      %v447 = vand.u32 %v446, 4294901760
      %448 = vmatpush.msra.mxu0 %v447
      %v449 = vand.u32 %v327, 4294901760
      %v450 = vsub.f32 %v327, %v449
      %v451 = vand.u32 %v450, 4294901760
      %v452 = vsub.f32 %v450, %v451
      %v453 = vand.u32 %v452, 4294901760
      %454 = vmatpush.msra.mxu0 %v453
      %v455 = vand.u32 %v347, 4294901760
      %456 = vmatmul.f32.gmra.mxu0 %v455
      %v457 = vpop.f32.mrf.mxu0
      %v458 = vadd.f32 %v384, %v457
      %v459 = vand.u32 %v350, 4294901760
      %460 = vmatmul.f32.gmra.mxu0 %v459
      %v461 = vpop.f32.mrf.mxu0
      %v462 = vadd.f32 %v392, %v461
      %463 = vdwg.mxu0
      %464 = vmatpush.msra.mxu0 0.0
      %465 = vmatpush.msra.mxu0 0.0
      %466 = vmatpush.msra.mxu0 0.0
      %467 = vmatpush.msra.mxu0 0.0
      %468 = vmatpush.msra.mxu0 0.0
      %469 = vmatpush.msra.mxu0 0.0
      %470 = vmatpush.msra.mxu0 0.0
      %v471 = vand.u32 %v343, 4294901760
      %v472 = vsub.f32 %v343, %v471
      %473 = vmatpush.msra.mxu0 %v472
      %v474 = vand.u32 %v341, 4294901760
      %v475 = vsub.f32 %v341, %v474
      %476 = vmatpush.msra.mxu0 %v475
      %v477 = vand.u32 %v339, 4294901760
      %v478 = vsub.f32 %v339, %v477
      %479 = vmatpush.msra.mxu0 %v478
      %v480 = vand.u32 %v337, 4294901760
      %v481 = vsub.f32 %v337, %v480
      %482 = vmatpush.msra.mxu0 %v481
      %v483 = vand.u32 %v335, 4294901760
      %v484 = vsub.f32 %v335, %v483
      %485 = vmatpush.msra.mxu0 %v484
      %v486 = vand.u32 %v333, 4294901760
      %v487 = vsub.f32 %v333, %v486
      %488 = vmatpush.msra.mxu0 %v487
      %v489 = vand.u32 %v331, 4294901760
      %v490 = vsub.f32 %v331, %v489
      %491 = vmatpush.msra.mxu0 %v490
      %v492 = vand.u32 %v329, 4294901760
      %v493 = vsub.f32 %v329, %v492
      %494 = vmatpush.msra.mxu0 %v493
      %v495 = vand.u32 %v327, 4294901760
      %v496 = vsub.f32 %v327, %v495
      %497 = vmatpush.msra.mxu0 %v496
      %v498 = vand.u32 %v347, 4294901760
      %v499 = vsub.f32 %v347, %v498
      %500 = vmatmul.f32.gmra.mxu0 %v499
      %v501 = vpop.f32.mrf.mxu0
      %v502 = vadd.f32 %v458, %v501
      %v503 = vand.u32 %v350, 4294901760
      %v504 = vsub.f32 %v350, %v503
      %505 = vmatmul.f32.gmra.mxu0 %v504
      %v506 = vpop.f32.mrf.mxu0
      %v507 = vadd.f32 %v462, %v506
      %508 = vdwg.mxu0
      %509 = vmatpush.msra.mxu0 0.0
      %510 = vmatpush.msra.mxu0 0.0
      %511 = vmatpush.msra.mxu0 0.0
      %512 = vmatpush.msra.mxu0 0.0
      %513 = vmatpush.msra.mxu0 0.0
      %514 = vmatpush.msra.mxu0 0.0
      %515 = vmatpush.msra.mxu0 0.0
      %v516 = vand.u32 %v343, 4294901760
      %517 = vmatpush.msra.mxu0 %v516
      %v518 = vand.u32 %v341, 4294901760
      %519 = vmatpush.msra.mxu0 %v518
      %v520 = vand.u32 %v339, 4294901760
      %521 = vmatpush.msra.mxu0 %v520
      %v522 = vand.u32 %v337, 4294901760
      %523 = vmatpush.msra.mxu0 %v522
      %v524 = vand.u32 %v335, 4294901760
      %525 = vmatpush.msra.mxu0 %v524
      %v526 = vand.u32 %v333, 4294901760
      %527 = vmatpush.msra.mxu0 %v526
      %v528 = vand.u32 %v331, 4294901760
      %529 = vmatpush.msra.mxu0 %v528
      %v530 = vand.u32 %v329, 4294901760
      %531 = vmatpush.msra.mxu0 %v530
      %v532 = vand.u32 %v327, 4294901760
      %533 = vmatpush.msra.mxu0 %v532
      %v534 = vand.u32 %v347, 4294901760
      %v535 = vsub.f32 %v347, %v534
      %v536 = vand.u32 %v535, 4294901760
      %537 = vmatmul.f32.gmra.mxu0 %v536
      %v538 = vpop.f32.mrf.mxu0
      %v539 = vadd.f32 %v502, %v538
      %v540 = vand.u32 %v350, 4294901760
      %v541 = vsub.f32 %v350, %v540
      %v542 = vand.u32 %v541, 4294901760
      %543 = vmatmul.f32.gmra.mxu0 %v542
      %v544 = vpop.f32.mrf.mxu0
      %v545 = vadd.f32 %v507, %v544
      %546 = vdwg.mxu0
      %547 = vmatpush.msra.mxu0 0.0
      %548 = vmatpush.msra.mxu0 0.0
      %549 = vmatpush.msra.mxu0 0.0
      %550 = vmatpush.msra.mxu0 0.0
      %551 = vmatpush.msra.mxu0 0.0
      %552 = vmatpush.msra.mxu0 0.0
      %553 = vmatpush.msra.mxu0 0.0
      %v554 = vand.u32 %v343, 4294901760
      %v555 = vsub.f32 %v343, %v554
      %v556 = vand.u32 %v555, 4294901760
      %557 = vmatpush.msra.mxu0 %v556
      %v558 = vand.u32 %v341, 4294901760
      %v559 = vsub.f32 %v341, %v558
      %v560 = vand.u32 %v559, 4294901760
      %561 = vmatpush.msra.mxu0 %v560
      %v562 = vand.u32 %v339, 4294901760
      %v563 = vsub.f32 %v339, %v562
      %v564 = vand.u32 %v563, 4294901760
      %565 = vmatpush.msra.mxu0 %v564
      %v566 = vand.u32 %v337, 4294901760
      %v567 = vsub.f32 %v337, %v566
      %v568 = vand.u32 %v567, 4294901760
      %569 = vmatpush.msra.mxu0 %v568
      %v570 = vand.u32 %v335, 4294901760
      %v571 = vsub.f32 %v335, %v570
      %v572 = vand.u32 %v571, 4294901760
      %573 = vmatpush.msra.mxu0 %v572
      %v574 = vand.u32 %v333, 4294901760
      %v575 = vsub.f32 %v333, %v574
      %v576 = vand.u32 %v575, 4294901760
      %577 = vmatpush.msra.mxu0 %v576
      %v578 = vand.u32 %v331, 4294901760
      %v579 = vsub.f32 %v331, %v578
      %v580 = vand.u32 %v579, 4294901760
      %581 = vmatpush.msra.mxu0 %v580
      %v582 = vand.u32 %v329, 4294901760
      %v583 = vsub.f32 %v329, %v582
      %v584 = vand.u32 %v583, 4294901760
      %585 = vmatpush.msra.mxu0 %v584
      %v586 = vand.u32 %v327, 4294901760
      %v587 = vsub.f32 %v327, %v586
      %v588 = vand.u32 %v587, 4294901760
      %589 = vmatpush.msra.mxu0 %v588
      %v590 = vand.u32 %v347, 4294901760
      %591 = vmatmul.f32.gmra.mxu0 %v590
      %v592 = vpop.f32.mrf.mxu0
      %v593 = vadd.f32 %v539, %v592
      %v594 = vand.u32 %v350, 4294901760
      %595 = vmatmul.f32.gmra.mxu0 %v594
      %v596 = vpop.f32.mrf.mxu0
      %v597 = vadd.f32 %v545, %v596
      %598 = vdwg.mxu0
      %599 = vmatpush.msra.mxu0 0.0
      %600 = vmatpush.msra.mxu0 0.0
      %601 = vmatpush.msra.mxu0 0.0
      %602 = vmatpush.msra.mxu0 0.0
      %603 = vmatpush.msra.mxu0 0.0
      %604 = vmatpush.msra.mxu0 0.0
      %605 = vmatpush.msra.mxu0 0.0
      %v606 = vand.u32 %v343, 4294901760
      %607 = vmatpush.msra.mxu0 %v606
      %v608 = vand.u32 %v341, 4294901760
      %609 = vmatpush.msra.mxu0 %v608
      %v610 = vand.u32 %v339, 4294901760
      %611 = vmatpush.msra.mxu0 %v610
      %v612 = vand.u32 %v337, 4294901760
      %613 = vmatpush.msra.mxu0 %v612
      %v614 = vand.u32 %v335, 4294901760
      %615 = vmatpush.msra.mxu0 %v614
      %v616 = vand.u32 %v333, 4294901760
      %617 = vmatpush.msra.mxu0 %v616
      %v618 = vand.u32 %v331, 4294901760
      %619 = vmatpush.msra.mxu0 %v618
      %v620 = vand.u32 %v329, 4294901760
      %621 = vmatpush.msra.mxu0 %v620
      %v622 = vand.u32 %v327, 4294901760
      %623 = vmatpush.msra.mxu0 %v622
      %v624 = vand.u32 %v347, 4294901760
      %625 = vmatmul.f32.gmra.mxu0 %v624
      %v626 = vpop.f32.mrf.mxu0
      %v627 = vadd.f32 %v593, %v626
      %v628 = vand.u32 %v350, 4294901760
      %629 = vmatmul.f32.gmra.mxu0 %v628
      %v630 = vpop.f32.mrf.mxu0
      %v631 = vadd.f32 %v597, %v630
      %632 = vdwg.mxu0
      %633 = vmatpush.msra.mxu0 0.0
      %634 = vmatpush.msra.mxu0 0.0
      %635 = vmatpush.msra.mxu0 0.0
      %636 = vmatpush.msra.mxu0 0.0
      %637 = vmatpush.msra.mxu0 0.0
      %638 = vmatpush.msra.mxu0 0.0
      %639 = vmatpush.msra.mxu0 0.0
      %v640 = vand.u32 %v344, 4294901760
      %641 = vmatpush.msra.mxu0 %v640
      %v642 = vand.u32 %v342, 4294901760
      %643 = vmatpush.msra.mxu0 %v642
      %v644 = vand.u32 %v340, 4294901760
      %645 = vmatpush.msra.mxu0 %v644
      %v646 = vand.u32 %v338, 4294901760
      %647 = vmatpush.msra.mxu0 %v646
      %v648 = vand.u32 %v336, 4294901760
      %649 = vmatpush.msra.mxu0 %v648
      %v650 = vand.u32 %v334, 4294901760
      %651 = vmatpush.msra.mxu0 %v650
      %v652 = vand.u32 %v332, 4294901760
      %653 = vmatpush.msra.mxu0 %v652
      %v654 = vand.u32 %v330, 4294901760
      %655 = vmatpush.msra.mxu0 %v654
      %v656 = vand.u32 %v328, 4294901760
      %657 = vmatpush.msra.mxu0 %v656
      %v658 = vand.u32 %v347, 4294901760
      %v659 = vsub.f32 %v347, %v658
      %v660 = vand.u32 %v659, 4294901760
      %v661 = vsub.f32 %v659, %v660
      %v662 = vand.u32 %v661, 4294901760
      %663 = vmatmul.f32.gmra.mxu0 %v662
      %v664 = vpop.f32.mrf.mxu0
      %v665 = vadd.f32 0.0, %v664
      %v666 = vand.u32 %v350, 4294901760
      %v667 = vsub.f32 %v350, %v666
      %v668 = vand.u32 %v667, 4294901760
      %v669 = vsub.f32 %v667, %v668
      %v670 = vand.u32 %v669, 4294901760
      %671 = vmatmul.f32.gmra.mxu0 %v670
      %v672 = vpop.f32.mrf.mxu0
      %v673 = vadd.f32 0.0, %v672
      %674 = vdwg.mxu0
      %675 = vmatpush.msra.mxu0 0.0
      %676 = vmatpush.msra.mxu0 0.0
      %677 = vmatpush.msra.mxu0 0.0
      %678 = vmatpush.msra.mxu0 0.0
      %679 = vmatpush.msra.mxu0 0.0
      %680 = vmatpush.msra.mxu0 0.0
      %681 = vmatpush.msra.mxu0 0.0
      %v682 = vand.u32 %v344, 4294901760
      %v683 = vsub.f32 %v344, %v682
      %v684 = vand.u32 %v683, 4294901760
      %v685 = vsub.f32 %v683, %v684
      %v686 = vand.u32 %v685, 4294901760
      %687 = vmatpush.msra.mxu0 %v686
      %v688 = vand.u32 %v342, 4294901760
      %v689 = vsub.f32 %v342, %v688
      %v690 = vand.u32 %v689, 4294901760
      %v691 = vsub.f32 %v689, %v690
      %v692 = vand.u32 %v691, 4294901760
      %693 = vmatpush.msra.mxu0 %v692
      %v694 = vand.u32 %v340, 4294901760
      %v695 = vsub.f32 %v340, %v694
      %v696 = vand.u32 %v695, 4294901760
      %v697 = vsub.f32 %v695, %v696
      %v698 = vand.u32 %v697, 4294901760
      %699 = vmatpush.msra.mxu0 %v698
      %v700 = vand.u32 %v338, 4294901760
      %v701 = vsub.f32 %v338, %v700
      %v702 = vand.u32 %v701, 4294901760
      %v703 = vsub.f32 %v701, %v702
      %v704 = vand.u32 %v703, 4294901760
      %705 = vmatpush.msra.mxu0 %v704
      %v706 = vand.u32 %v336, 4294901760
      %v707 = vsub.f32 %v336, %v706
      %v708 = vand.u32 %v707, 4294901760
      %v709 = vsub.f32 %v707, %v708
      %v710 = vand.u32 %v709, 4294901760
      %711 = vmatpush.msra.mxu0 %v710
      %v712 = vand.u32 %v334, 4294901760
      %v713 = vsub.f32 %v334, %v712
      %v714 = vand.u32 %v713, 4294901760
      %v715 = vsub.f32 %v713, %v714
      %v716 = vand.u32 %v715, 4294901760
      %717 = vmatpush.msra.mxu0 %v716
      %v718 = vand.u32 %v332, 4294901760
      %v719 = vsub.f32 %v332, %v718
      %v720 = vand.u32 %v719, 4294901760
      %v721 = vsub.f32 %v719, %v720
      %v722 = vand.u32 %v721, 4294901760
      %723 = vmatpush.msra.mxu0 %v722
      %v724 = vand.u32 %v330, 4294901760
      %v725 = vsub.f32 %v330, %v724
      %v726 = vand.u32 %v725, 4294901760
      %v727 = vsub.f32 %v725, %v726
      %v728 = vand.u32 %v727, 4294901760
      %729 = vmatpush.msra.mxu0 %v728
      %v730 = vand.u32 %v328, 4294901760
      %v731 = vsub.f32 %v328, %v730
      %v732 = vand.u32 %v731, 4294901760
      %v733 = vsub.f32 %v731, %v732
      %v734 = vand.u32 %v733, 4294901760
      %735 = vmatpush.msra.mxu0 %v734
      %v736 = vand.u32 %v347, 4294901760
      %737 = vmatmul.f32.gmra.mxu0 %v736
      %v738 = vpop.f32.mrf.mxu0
      %v739 = vadd.f32 %v665, %v738
      %v740 = vand.u32 %v350, 4294901760
      %741 = vmatmul.f32.gmra.mxu0 %v740
      %v742 = vpop.f32.mrf.mxu0
      %v743 = vadd.f32 %v673, %v742
      %744 = vdwg.mxu0
      %745 = vmatpush.msra.mxu0 0.0
      %746 = vmatpush.msra.mxu0 0.0
      %747 = vmatpush.msra.mxu0 0.0
      %748 = vmatpush.msra.mxu0 0.0
      %749 = vmatpush.msra.mxu0 0.0
      %750 = vmatpush.msra.mxu0 0.0
      %751 = vmatpush.msra.mxu0 0.0
      %v752 = vand.u32 %v344, 4294901760
      %v753 = vsub.f32 %v344, %v752
      %754 = vmatpush.msra.mxu0 %v753
      %v755 = vand.u32 %v342, 4294901760
      %v756 = vsub.f32 %v342, %v755
      %757 = vmatpush.msra.mxu0 %v756
      %v758 = vand.u32 %v340, 4294901760
      %v759 = vsub.f32 %v340, %v758
      %760 = vmatpush.msra.mxu0 %v759
      %v761 = vand.u32 %v338, 4294901760
      %v762 = vsub.f32 %v338, %v761
      %763 = vmatpush.msra.mxu0 %v762
      %v764 = vand.u32 %v336, 4294901760
      %v765 = vsub.f32 %v336, %v764
      %766 = vmatpush.msra.mxu0 %v765
      %v767 = vand.u32 %v334, 4294901760
      %v768 = vsub.f32 %v334, %v767
      %769 = vmatpush.msra.mxu0 %v768
      %v770 = vand.u32 %v332, 4294901760
      %v771 = vsub.f32 %v332, %v770
      %772 = vmatpush.msra.mxu0 %v771
      %v773 = vand.u32 %v330, 4294901760
      %v774 = vsub.f32 %v330, %v773
      %775 = vmatpush.msra.mxu0 %v774
      %v776 = vand.u32 %v328, 4294901760
      %v777 = vsub.f32 %v328, %v776
      %778 = vmatpush.msra.mxu0 %v777
      %v779 = vand.u32 %v347, 4294901760
      %v780 = vsub.f32 %v347, %v779
      %781 = vmatmul.f32.gmra.mxu0 %v780
      %v782 = vpop.f32.mrf.mxu0
      %v783 = vadd.f32 %v739, %v782
      %v784 = vand.u32 %v350, 4294901760
      %v785 = vsub.f32 %v350, %v784
      %786 = vmatmul.f32.gmra.mxu0 %v785
      %v787 = vpop.f32.mrf.mxu0
      %v788 = vadd.f32 %v743, %v787
      %789 = vdwg.mxu0
      %790 = vmatpush.msra.mxu0 0.0
      %791 = vmatpush.msra.mxu0 0.0
      %792 = vmatpush.msra.mxu0 0.0
      %793 = vmatpush.msra.mxu0 0.0
      %794 = vmatpush.msra.mxu0 0.0
      %795 = vmatpush.msra.mxu0 0.0
      %796 = vmatpush.msra.mxu0 0.0
      %v797 = vand.u32 %v344, 4294901760
      %798 = vmatpush.msra.mxu0 %v797
      %v799 = vand.u32 %v342, 4294901760
      %800 = vmatpush.msra.mxu0 %v799
      %v801 = vand.u32 %v340, 4294901760
      %802 = vmatpush.msra.mxu0 %v801
      %v803 = vand.u32 %v338, 4294901760
      %804 = vmatpush.msra.mxu0 %v803
      %v805 = vand.u32 %v336, 4294901760
      %806 = vmatpush.msra.mxu0 %v805
      %v807 = vand.u32 %v334, 4294901760
      %808 = vmatpush.msra.mxu0 %v807
      %v809 = vand.u32 %v332, 4294901760
      %810 = vmatpush.msra.mxu0 %v809
      %v811 = vand.u32 %v330, 4294901760
      %812 = vmatpush.msra.mxu0 %v811
      %v813 = vand.u32 %v328, 4294901760
      %814 = vmatpush.msra.mxu0 %v813
      %v815 = vand.u32 %v347, 4294901760
      %v816 = vsub.f32 %v347, %v815
      %v817 = vand.u32 %v816, 4294901760
      %818 = vmatmul.f32.gmra.mxu0 %v817
      %v819 = vpop.f32.mrf.mxu0
      %v820 = vadd.f32 %v783, %v819
      %v821 = vand.u32 %v350, 4294901760
      %v822 = vsub.f32 %v350, %v821
      %v823 = vand.u32 %v822, 4294901760
      %824 = vmatmul.f32.gmra.mxu0 %v823
      %v825 = vpop.f32.mrf.mxu0
      %v826 = vadd.f32 %v788, %v825
      %827 = vdwg.mxu0
      %828 = vmatpush.msra.mxu0 0.0
      %829 = vmatpush.msra.mxu0 0.0
      %830 = vmatpush.msra.mxu0 0.0
      %831 = vmatpush.msra.mxu0 0.0
      %832 = vmatpush.msra.mxu0 0.0
      %833 = vmatpush.msra.mxu0 0.0
      %834 = vmatpush.msra.mxu0 0.0
      %v835 = vand.u32 %v344, 4294901760
      %v836 = vsub.f32 %v344, %v835
      %v837 = vand.u32 %v836, 4294901760
      %838 = vmatpush.msra.mxu0 %v837
      %v839 = vand.u32 %v342, 4294901760
      %v840 = vsub.f32 %v342, %v839
      %v841 = vand.u32 %v840, 4294901760
      %842 = vmatpush.msra.mxu0 %v841
      %v843 = vand.u32 %v340, 4294901760
      %v844 = vsub.f32 %v340, %v843
      %v845 = vand.u32 %v844, 4294901760
      %846 = vmatpush.msra.mxu0 %v845
      %v847 = vand.u32 %v338, 4294901760
      %v848 = vsub.f32 %v338, %v847
      %v849 = vand.u32 %v848, 4294901760
      %850 = vmatpush.msra.mxu0 %v849
      %v851 = vand.u32 %v336, 4294901760
      %v852 = vsub.f32 %v336, %v851
      %v853 = vand.u32 %v852, 4294901760
      %854 = vmatpush.msra.mxu0 %v853
      %v855 = vand.u32 %v334, 4294901760
      %v856 = vsub.f32 %v334, %v855
      %v857 = vand.u32 %v856, 4294901760
      %858 = vmatpush.msra.mxu0 %v857
      %v859 = vand.u32 %v332, 4294901760
      %v860 = vsub.f32 %v332, %v859
      %v861 = vand.u32 %v860, 4294901760
      %862 = vmatpush.msra.mxu0 %v861
      %v863 = vand.u32 %v330, 4294901760
      %v864 = vsub.f32 %v330, %v863
      %v865 = vand.u32 %v864, 4294901760
      %866 = vmatpush.msra.mxu0 %v865
      %v867 = vand.u32 %v328, 4294901760
      %v868 = vsub.f32 %v328, %v867
      %v869 = vand.u32 %v868, 4294901760
      %870 = vmatpush.msra.mxu0 %v869
      %v871 = vand.u32 %v347, 4294901760
      %872 = vmatmul.f32.gmra.mxu0 %v871
      %v873 = vpop.f32.mrf.mxu0
      %v874 = vadd.f32 %v820, %v873
      %v875 = vand.u32 %v350, 4294901760
      %876 = vmatmul.f32.gmra.mxu0 %v875
      %v877 = vpop.f32.mrf.mxu0
      %v878 = vadd.f32 %v826, %v877
      %879 = vdwg.mxu0
      %880 = vmatpush.msra.mxu0 0.0
      %881 = vmatpush.msra.mxu0 0.0
      %882 = vmatpush.msra.mxu0 0.0
      %883 = vmatpush.msra.mxu0 0.0
      %884 = vmatpush.msra.mxu0 0.0
      %885 = vmatpush.msra.mxu0 0.0
      %886 = vmatpush.msra.mxu0 0.0
      %v887 = vand.u32 %v344, 4294901760
      %888 = vmatpush.msra.mxu0 %v887
      %v889 = vand.u32 %v342, 4294901760
      %890 = vmatpush.msra.mxu0 %v889
      %v891 = vand.u32 %v340, 4294901760
      %892 = vmatpush.msra.mxu0 %v891
      %v893 = vand.u32 %v338, 4294901760
      %894 = vmatpush.msra.mxu0 %v893
      %v895 = vand.u32 %v336, 4294901760
      %896 = vmatpush.msra.mxu0 %v895
      %v897 = vand.u32 %v334, 4294901760
      %898 = vmatpush.msra.mxu0 %v897
      %v899 = vand.u32 %v332, 4294901760
      %900 = vmatpush.msra.mxu0 %v899
      %v901 = vand.u32 %v330, 4294901760
      %902 = vmatpush.msra.mxu0 %v901
      %v903 = vand.u32 %v328, 4294901760
      %904 = vmatpush.msra.mxu0 %v903
      %v905 = vand.u32 %v347, 4294901760
      %906 = vmatmul.f32.gmra.mxu0 %v905
      %v907 = vpop.f32.mrf.mxu0
      %v908 = vadd.f32 %v874, %v907
      %v909 = vand.u32 %v350, 4294901760
      %910 = vmatmul.f32.gmra.mxu0 %v909
      %v911 = vpop.f32.mrf.mxu0
      %v912 = vadd.f32 %v878, %v911
      %913 = vdwg.mxu0
      %v915 = vsel %vm345, %v304, 0
      %v918 = vsel %vm345, %v305, 0
      %920 = vmatpush.msra.mxu0 0.0
      %921 = vmatpush.msra.mxu0 0.0
      %922 = vmatpush.msra.mxu0 0.0
      %923 = vmatpush.msra.mxu0 0.0
      %924 = vmatpush.msra.mxu0 0.0
      %925 = vmatpush.msra.mxu0 0.0
      %926 = vmatpush.msra.mxu0 0.0
      %v927 = vand.u32 %v322, 4294901760
      %928 = vmatpush.msra.mxu0 %v927
      %v929 = vand.u32 %v320, 4294901760
      %930 = vmatpush.msra.mxu0 %v929
      %v931 = vand.u32 %v318, 4294901760
      %932 = vmatpush.msra.mxu0 %v931
      %v933 = vand.u32 %v316, 4294901760
      %934 = vmatpush.msra.mxu0 %v933
      %v935 = vand.u32 %v314, 4294901760
      %936 = vmatpush.msra.mxu0 %v935
      %v937 = vand.u32 %v312, 4294901760
      %938 = vmatpush.msra.mxu0 %v937
      %v939 = vand.u32 %v310, 4294901760
      %940 = vmatpush.msra.mxu0 %v939
      %v941 = vand.u32 %v308, 4294901760
      %942 = vmatpush.msra.mxu0 %v941
      %v943 = vand.u32 %v306, 4294901760
      %944 = vmatpush.msra.mxu0 %v943
      %v945 = vand.u32 %v915, 4294901760
      %v946 = vsub.f32 %v915, %v945
      %v947 = vand.u32 %v946, 4294901760
      %v948 = vsub.f32 %v946, %v947
      %v949 = vand.u32 %v948, 4294901760
      %950 = vmatmul.f32.gmra.mxu0 %v949
      %v951 = vpop.f32.mrf.mxu0
      %v952 = vadd.f32 %v627, %v951
      %v953 = vand.u32 %v918, 4294901760
      %v954 = vsub.f32 %v918, %v953
      %v955 = vand.u32 %v954, 4294901760
      %v956 = vsub.f32 %v954, %v955
      %v957 = vand.u32 %v956, 4294901760
      %958 = vmatmul.f32.gmra.mxu0 %v957
      %v959 = vpop.f32.mrf.mxu0
      %v960 = vadd.f32 %v631, %v959
      %961 = vdwg.mxu0
      %962 = vmatpush.msra.mxu0 0.0
      %963 = vmatpush.msra.mxu0 0.0
      %964 = vmatpush.msra.mxu0 0.0
      %965 = vmatpush.msra.mxu0 0.0
      %966 = vmatpush.msra.mxu0 0.0
      %967 = vmatpush.msra.mxu0 0.0
      %968 = vmatpush.msra.mxu0 0.0
      %v969 = vand.u32 %v322, 4294901760
      %v970 = vsub.f32 %v322, %v969
      %v971 = vand.u32 %v970, 4294901760
      %v972 = vsub.f32 %v970, %v971
      %v973 = vand.u32 %v972, 4294901760
      %974 = vmatpush.msra.mxu0 %v973
      %v975 = vand.u32 %v320, 4294901760
      %v976 = vsub.f32 %v320, %v975
      %v977 = vand.u32 %v976, 4294901760
      %v978 = vsub.f32 %v976, %v977
      %v979 = vand.u32 %v978, 4294901760
      %980 = vmatpush.msra.mxu0 %v979
      %v981 = vand.u32 %v318, 4294901760
      %v982 = vsub.f32 %v318, %v981
      %v983 = vand.u32 %v982, 4294901760
      %v984 = vsub.f32 %v982, %v983
      %v985 = vand.u32 %v984, 4294901760
      %986 = vmatpush.msra.mxu0 %v985
      %v987 = vand.u32 %v316, 4294901760
      %v988 = vsub.f32 %v316, %v987
      %v989 = vand.u32 %v988, 4294901760
      %v990 = vsub.f32 %v988, %v989
      %v991 = vand.u32 %v990, 4294901760
      %992 = vmatpush.msra.mxu0 %v991
      %v993 = vand.u32 %v314, 4294901760
      %v994 = vsub.f32 %v314, %v993
      %v995 = vand.u32 %v994, 4294901760
      %v996 = vsub.f32 %v994, %v995
      %v997 = vand.u32 %v996, 4294901760
      %998 = vmatpush.msra.mxu0 %v997
      %v999 = vand.u32 %v312, 4294901760
      %v1000 = vsub.f32 %v312, %v999
      %v1001 = vand.u32 %v1000, 4294901760
      %v1002 = vsub.f32 %v1000, %v1001
      %v1003 = vand.u32 %v1002, 4294901760
      %1004 = vmatpush.msra.mxu0 %v1003
      %v1005 = vand.u32 %v310, 4294901760
      %v1006 = vsub.f32 %v310, %v1005
      %v1007 = vand.u32 %v1006, 4294901760
      %v1008 = vsub.f32 %v1006, %v1007
      %v1009 = vand.u32 %v1008, 4294901760
      %1010 = vmatpush.msra.mxu0 %v1009
      %v1011 = vand.u32 %v308, 4294901760
      %v1012 = vsub.f32 %v308, %v1011
      %v1013 = vand.u32 %v1012, 4294901760
      %v1014 = vsub.f32 %v1012, %v1013
      %v1015 = vand.u32 %v1014, 4294901760
      %1016 = vmatpush.msra.mxu0 %v1015
      %v1017 = vand.u32 %v306, 4294901760
      %v1018 = vsub.f32 %v306, %v1017
      %v1019 = vand.u32 %v1018, 4294901760
      %v1020 = vsub.f32 %v1018, %v1019
      %v1021 = vand.u32 %v1020, 4294901760
      %1022 = vmatpush.msra.mxu0 %v1021
      %v1023 = vand.u32 %v915, 4294901760
      %1024 = vmatmul.f32.gmra.mxu0 %v1023
      %v1025 = vpop.f32.mrf.mxu0
      %v1026 = vadd.f32 %v952, %v1025
      %v1027 = vand.u32 %v918, 4294901760
      %1028 = vmatmul.f32.gmra.mxu0 %v1027
      %v1029 = vpop.f32.mrf.mxu0
      %v1030 = vadd.f32 %v960, %v1029
      %1031 = vdwg.mxu0
      %1032 = vmatpush.msra.mxu0 0.0
      %1033 = vmatpush.msra.mxu0 0.0
      %1034 = vmatpush.msra.mxu0 0.0
      %1035 = vmatpush.msra.mxu0 0.0
      %1036 = vmatpush.msra.mxu0 0.0
      %1037 = vmatpush.msra.mxu0 0.0
      %1038 = vmatpush.msra.mxu0 0.0
      %v1039 = vand.u32 %v322, 4294901760
      %v1040 = vsub.f32 %v322, %v1039
      %1041 = vmatpush.msra.mxu0 %v1040
      %v1042 = vand.u32 %v320, 4294901760
      %v1043 = vsub.f32 %v320, %v1042
      %1044 = vmatpush.msra.mxu0 %v1043
      %v1045 = vand.u32 %v318, 4294901760
      %v1046 = vsub.f32 %v318, %v1045
      %1047 = vmatpush.msra.mxu0 %v1046
      %v1048 = vand.u32 %v316, 4294901760
      %v1049 = vsub.f32 %v316, %v1048
      %1050 = vmatpush.msra.mxu0 %v1049
      %v1051 = vand.u32 %v314, 4294901760
      %v1052 = vsub.f32 %v314, %v1051
      %1053 = vmatpush.msra.mxu0 %v1052
      %v1054 = vand.u32 %v312, 4294901760
      %v1055 = vsub.f32 %v312, %v1054
      %1056 = vmatpush.msra.mxu0 %v1055
      %v1057 = vand.u32 %v310, 4294901760
      %v1058 = vsub.f32 %v310, %v1057
      %1059 = vmatpush.msra.mxu0 %v1058
      %v1060 = vand.u32 %v308, 4294901760
      %v1061 = vsub.f32 %v308, %v1060
      %1062 = vmatpush.msra.mxu0 %v1061
      %v1063 = vand.u32 %v306, 4294901760
      %v1064 = vsub.f32 %v306, %v1063
      %1065 = vmatpush.msra.mxu0 %v1064
      %v1066 = vand.u32 %v915, 4294901760
      %v1067 = vsub.f32 %v915, %v1066
      %1068 = vmatmul.f32.gmra.mxu0 %v1067
      %v1069 = vpop.f32.mrf.mxu0
      %v1070 = vadd.f32 %v1026, %v1069
      %v1071 = vand.u32 %v918, 4294901760
      %v1072 = vsub.f32 %v918, %v1071
      %1073 = vmatmul.f32.gmra.mxu0 %v1072
      %v1074 = vpop.f32.mrf.mxu0
      %v1075 = vadd.f32 %v1030, %v1074
      %1076 = vdwg.mxu0
      %1077 = vmatpush.msra.mxu0 0.0
      %1078 = vmatpush.msra.mxu0 0.0
      %1079 = vmatpush.msra.mxu0 0.0
      %1080 = vmatpush.msra.mxu0 0.0
      %1081 = vmatpush.msra.mxu0 0.0
      %1082 = vmatpush.msra.mxu0 0.0
      %1083 = vmatpush.msra.mxu0 0.0
      %v1084 = vand.u32 %v322, 4294901760
      %1085 = vmatpush.msra.mxu0 %v1084
      %v1086 = vand.u32 %v320, 4294901760
      %1087 = vmatpush.msra.mxu0 %v1086
      %v1088 = vand.u32 %v318, 4294901760
      %1089 = vmatpush.msra.mxu0 %v1088
      %v1090 = vand.u32 %v316, 4294901760
      %1091 = vmatpush.msra.mxu0 %v1090
      %v1092 = vand.u32 %v314, 4294901760
      %1093 = vmatpush.msra.mxu0 %v1092
      %v1094 = vand.u32 %v312, 4294901760
      %1095 = vmatpush.msra.mxu0 %v1094
      %v1096 = vand.u32 %v310, 4294901760
      %1097 = vmatpush.msra.mxu0 %v1096
      %v1098 = vand.u32 %v308, 4294901760
      %1099 = vmatpush.msra.mxu0 %v1098
      %v1100 = vand.u32 %v306, 4294901760
      %1101 = vmatpush.msra.mxu0 %v1100
      %v1102 = vand.u32 %v915, 4294901760
      %v1103 = vsub.f32 %v915, %v1102
      %v1104 = vand.u32 %v1103, 4294901760
      %1105 = vmatmul.f32.gmra.mxu0 %v1104
      %v1106 = vpop.f32.mrf.mxu0
      %v1107 = vadd.f32 %v1070, %v1106
      %v1108 = vand.u32 %v918, 4294901760
      %v1109 = vsub.f32 %v918, %v1108
      %v1110 = vand.u32 %v1109, 4294901760
      %1111 = vmatmul.f32.gmra.mxu0 %v1110
      %v1112 = vpop.f32.mrf.mxu0
      %v1113 = vadd.f32 %v1075, %v1112
      %1114 = vdwg.mxu0
      %1115 = vmatpush.msra.mxu0 0.0
      %1116 = vmatpush.msra.mxu0 0.0
      %1117 = vmatpush.msra.mxu0 0.0
      %1118 = vmatpush.msra.mxu0 0.0
      %1119 = vmatpush.msra.mxu0 0.0
      %1120 = vmatpush.msra.mxu0 0.0
      %1121 = vmatpush.msra.mxu0 0.0
      %v1122 = vand.u32 %v322, 4294901760
      %v1123 = vsub.f32 %v322, %v1122
      %v1124 = vand.u32 %v1123, 4294901760
      %1125 = vmatpush.msra.mxu0 %v1124
      %v1126 = vand.u32 %v320, 4294901760
      %v1127 = vsub.f32 %v320, %v1126
      %v1128 = vand.u32 %v1127, 4294901760
      %1129 = vmatpush.msra.mxu0 %v1128
      %v1130 = vand.u32 %v318, 4294901760
      %v1131 = vsub.f32 %v318, %v1130
      %v1132 = vand.u32 %v1131, 4294901760
      %1133 = vmatpush.msra.mxu0 %v1132
      %v1134 = vand.u32 %v316, 4294901760
      %v1135 = vsub.f32 %v316, %v1134
      %v1136 = vand.u32 %v1135, 4294901760
      %1137 = vmatpush.msra.mxu0 %v1136
      %v1138 = vand.u32 %v314, 4294901760
      %v1139 = vsub.f32 %v314, %v1138
      %v1140 = vand.u32 %v1139, 4294901760
      %1141 = vmatpush.msra.mxu0 %v1140
      %v1142 = vand.u32 %v312, 4294901760
      %v1143 = vsub.f32 %v312, %v1142
      %v1144 = vand.u32 %v1143, 4294901760
      %1145 = vmatpush.msra.mxu0 %v1144
      %v1146 = vand.u32 %v310, 4294901760
      %v1147 = vsub.f32 %v310, %v1146
      %v1148 = vand.u32 %v1147, 4294901760
      %1149 = vmatpush.msra.mxu0 %v1148
      %v1150 = vand.u32 %v308, 4294901760
      %v1151 = vsub.f32 %v308, %v1150
      %v1152 = vand.u32 %v1151, 4294901760
      %1153 = vmatpush.msra.mxu0 %v1152
      %v1154 = vand.u32 %v306, 4294901760
      %v1155 = vsub.f32 %v306, %v1154
      %v1156 = vand.u32 %v1155, 4294901760
      %1157 = vmatpush.msra.mxu0 %v1156
      %v1158 = vand.u32 %v915, 4294901760
      %1159 = vmatmul.f32.gmra.mxu0 %v1158
      %v1160 = vpop.f32.mrf.mxu0
      %v1161 = vadd.f32 %v1107, %v1160
      %v1162 = vand.u32 %v918, 4294901760
      %1163 = vmatmul.f32.gmra.mxu0 %v1162
      %v1164 = vpop.f32.mrf.mxu0
      %v1165 = vadd.f32 %v1113, %v1164
      %1166 = vdwg.mxu0
      %1167 = vmatpush.msra.mxu0 0.0
      %1168 = vmatpush.msra.mxu0 0.0
      %1169 = vmatpush.msra.mxu0 0.0
      %1170 = vmatpush.msra.mxu0 0.0
      %1171 = vmatpush.msra.mxu0 0.0
      %1172 = vmatpush.msra.mxu0 0.0
      %1173 = vmatpush.msra.mxu0 0.0
      %v1174 = vand.u32 %v322, 4294901760
      %1175 = vmatpush.msra.mxu0 %v1174
      %v1176 = vand.u32 %v320, 4294901760
      %1177 = vmatpush.msra.mxu0 %v1176
      %v1178 = vand.u32 %v318, 4294901760
      %1179 = vmatpush.msra.mxu0 %v1178
      %v1180 = vand.u32 %v316, 4294901760
      %1181 = vmatpush.msra.mxu0 %v1180
      %v1182 = vand.u32 %v314, 4294901760
      %1183 = vmatpush.msra.mxu0 %v1182
      %v1184 = vand.u32 %v312, 4294901760
      %1185 = vmatpush.msra.mxu0 %v1184
      %v1186 = vand.u32 %v310, 4294901760
      %1187 = vmatpush.msra.mxu0 %v1186
      %v1188 = vand.u32 %v308, 4294901760
      %1189 = vmatpush.msra.mxu0 %v1188
      %v1190 = vand.u32 %v306, 4294901760
      %1191 = vmatpush.msra.mxu0 %v1190
      %v1192 = vand.u32 %v915, 4294901760
      %1193 = vmatmul.f32.gmra.mxu0 %v1192
      %v1194 = vpop.f32.mrf.mxu0
      %v1195 = vadd.f32 %v1161, %v1194
      %v1196 = vand.u32 %v918, 4294901760
      %1197 = vmatmul.f32.gmra.mxu0 %v1196
      %v1198 = vpop.f32.mrf.mxu0
      %v1199 = vadd.f32 %v1165, %v1198
      %1200 = vdwg.mxu0
      %1201 = vmatpush.msra.mxu0 0.0
      %1202 = vmatpush.msra.mxu0 0.0
      %1203 = vmatpush.msra.mxu0 0.0
      %1204 = vmatpush.msra.mxu0 0.0
      %1205 = vmatpush.msra.mxu0 0.0
      %1206 = vmatpush.msra.mxu0 0.0
      %1207 = vmatpush.msra.mxu0 0.0
      %v1208 = vand.u32 %v323, 4294901760
      %1209 = vmatpush.msra.mxu0 %v1208
      %v1210 = vand.u32 %v321, 4294901760
      %1211 = vmatpush.msra.mxu0 %v1210
      %v1212 = vand.u32 %v319, 4294901760
      %1213 = vmatpush.msra.mxu0 %v1212
      %v1214 = vand.u32 %v317, 4294901760
      %1215 = vmatpush.msra.mxu0 %v1214
      %v1216 = vand.u32 %v315, 4294901760
      %1217 = vmatpush.msra.mxu0 %v1216
      %v1218 = vand.u32 %v313, 4294901760
      %1219 = vmatpush.msra.mxu0 %v1218
      %v1220 = vand.u32 %v311, 4294901760
      %1221 = vmatpush.msra.mxu0 %v1220
      %v1222 = vand.u32 %v309, 4294901760
      %1223 = vmatpush.msra.mxu0 %v1222
      %v1224 = vand.u32 %v307, 4294901760
      %1225 = vmatpush.msra.mxu0 %v1224
      %v1226 = vand.u32 %v915, 4294901760
      %v1227 = vsub.f32 %v915, %v1226
      %v1228 = vand.u32 %v1227, 4294901760
      %v1229 = vsub.f32 %v1227, %v1228
      %v1230 = vand.u32 %v1229, 4294901760
      %1231 = vmatmul.f32.gmra.mxu0 %v1230
      %v1232 = vpop.f32.mrf.mxu0
      %v1233 = vadd.f32 %v908, %v1232
      %v1234 = vand.u32 %v918, 4294901760
      %v1235 = vsub.f32 %v918, %v1234
      %v1236 = vand.u32 %v1235, 4294901760
      %v1237 = vsub.f32 %v1235, %v1236
      %v1238 = vand.u32 %v1237, 4294901760
      %1239 = vmatmul.f32.gmra.mxu0 %v1238
      %v1240 = vpop.f32.mrf.mxu0
      %v1241 = vadd.f32 %v912, %v1240
      %1242 = vdwg.mxu0
      %1243 = vmatpush.msra.mxu0 0.0
      %1244 = vmatpush.msra.mxu0 0.0
      %1245 = vmatpush.msra.mxu0 0.0
      %1246 = vmatpush.msra.mxu0 0.0
      %1247 = vmatpush.msra.mxu0 0.0
      %1248 = vmatpush.msra.mxu0 0.0
      %1249 = vmatpush.msra.mxu0 0.0
      %v1250 = vand.u32 %v323, 4294901760
      %v1251 = vsub.f32 %v323, %v1250
      %v1252 = vand.u32 %v1251, 4294901760
      %v1253 = vsub.f32 %v1251, %v1252
      %v1254 = vand.u32 %v1253, 4294901760
      %1255 = vmatpush.msra.mxu0 %v1254
      %v1256 = vand.u32 %v321, 4294901760
      %v1257 = vsub.f32 %v321, %v1256
      %v1258 = vand.u32 %v1257, 4294901760
      %v1259 = vsub.f32 %v1257, %v1258
      %v1260 = vand.u32 %v1259, 4294901760
      %1261 = vmatpush.msra.mxu0 %v1260
      %v1262 = vand.u32 %v319, 4294901760
      %v1263 = vsub.f32 %v319, %v1262
      %v1264 = vand.u32 %v1263, 4294901760
      %v1265 = vsub.f32 %v1263, %v1264
      %v1266 = vand.u32 %v1265, 4294901760
      %1267 = vmatpush.msra.mxu0 %v1266
      %v1268 = vand.u32 %v317, 4294901760
      %v1269 = vsub.f32 %v317, %v1268
      %v1270 = vand.u32 %v1269, 4294901760
      %v1271 = vsub.f32 %v1269, %v1270
      %v1272 = vand.u32 %v1271, 4294901760
      %1273 = vmatpush.msra.mxu0 %v1272
      %v1274 = vand.u32 %v315, 4294901760
      %v1275 = vsub.f32 %v315, %v1274
      %v1276 = vand.u32 %v1275, 4294901760
      %v1277 = vsub.f32 %v1275, %v1276
      %v1278 = vand.u32 %v1277, 4294901760
      %1279 = vmatpush.msra.mxu0 %v1278
      %v1280 = vand.u32 %v313, 4294901760
      %v1281 = vsub.f32 %v313, %v1280
      %v1282 = vand.u32 %v1281, 4294901760
      %v1283 = vsub.f32 %v1281, %v1282
      %v1284 = vand.u32 %v1283, 4294901760
      %1285 = vmatpush.msra.mxu0 %v1284
      %v1286 = vand.u32 %v311, 4294901760
      %v1287 = vsub.f32 %v311, %v1286
      %v1288 = vand.u32 %v1287, 4294901760
      %v1289 = vsub.f32 %v1287, %v1288
      %v1290 = vand.u32 %v1289, 4294901760
      %1291 = vmatpush.msra.mxu0 %v1290
      %v1292 = vand.u32 %v309, 4294901760
      %v1293 = vsub.f32 %v309, %v1292
      %v1294 = vand.u32 %v1293, 4294901760
      %v1295 = vsub.f32 %v1293, %v1294
      %v1296 = vand.u32 %v1295, 4294901760
      %1297 = vmatpush.msra.mxu0 %v1296
      %v1298 = vand.u32 %v307, 4294901760
      %v1299 = vsub.f32 %v307, %v1298
      %v1300 = vand.u32 %v1299, 4294901760
      %v1301 = vsub.f32 %v1299, %v1300
      %v1302 = vand.u32 %v1301, 4294901760
      %1303 = vmatpush.msra.mxu0 %v1302
      %v1304 = vand.u32 %v915, 4294901760
      %1305 = vmatmul.f32.gmra.mxu0 %v1304
      %v1306 = vpop.f32.mrf.mxu0
      %v1307 = vadd.f32 %v1233, %v1306
      %v1308 = vand.u32 %v918, 4294901760
      %1309 = vmatmul.f32.gmra.mxu0 %v1308
      %v1310 = vpop.f32.mrf.mxu0
      %v1311 = vadd.f32 %v1241, %v1310
      %1312 = vdwg.mxu0
      %1313 = vmatpush.msra.mxu0 0.0
      %1314 = vmatpush.msra.mxu0 0.0
      %1315 = vmatpush.msra.mxu0 0.0
      %1316 = vmatpush.msra.mxu0 0.0
      %1317 = vmatpush.msra.mxu0 0.0
      %1318 = vmatpush.msra.mxu0 0.0
      %1319 = vmatpush.msra.mxu0 0.0
      %v1320 = vand.u32 %v323, 4294901760
      %v1321 = vsub.f32 %v323, %v1320
      %1322 = vmatpush.msra.mxu0 %v1321
      %v1323 = vand.u32 %v321, 4294901760
      %v1324 = vsub.f32 %v321, %v1323
      %1325 = vmatpush.msra.mxu0 %v1324
      %v1326 = vand.u32 %v319, 4294901760
      %v1327 = vsub.f32 %v319, %v1326
      %1328 = vmatpush.msra.mxu0 %v1327
      %v1329 = vand.u32 %v317, 4294901760
      %v1330 = vsub.f32 %v317, %v1329
      %1331 = vmatpush.msra.mxu0 %v1330
      %v1332 = vand.u32 %v315, 4294901760
      %v1333 = vsub.f32 %v315, %v1332
      %1334 = vmatpush.msra.mxu0 %v1333
      %v1335 = vand.u32 %v313, 4294901760
      %v1336 = vsub.f32 %v313, %v1335
      %1337 = vmatpush.msra.mxu0 %v1336
      %v1338 = vand.u32 %v311, 4294901760
      %v1339 = vsub.f32 %v311, %v1338
      %1340 = vmatpush.msra.mxu0 %v1339
      %v1341 = vand.u32 %v309, 4294901760
      %v1342 = vsub.f32 %v309, %v1341
      %1343 = vmatpush.msra.mxu0 %v1342
      %v1344 = vand.u32 %v307, 4294901760
      %v1345 = vsub.f32 %v307, %v1344
      %1346 = vmatpush.msra.mxu0 %v1345
      %v1347 = vand.u32 %v915, 4294901760
      %v1348 = vsub.f32 %v915, %v1347
      %1349 = vmatmul.f32.gmra.mxu0 %v1348
      %v1350 = vpop.f32.mrf.mxu0
      %v1351 = vadd.f32 %v1307, %v1350
      %v1352 = vand.u32 %v918, 4294901760
      %v1353 = vsub.f32 %v918, %v1352
      %1354 = vmatmul.f32.gmra.mxu0 %v1353
      %v1355 = vpop.f32.mrf.mxu0
      %v1356 = vadd.f32 %v1311, %v1355
      %1357 = vdwg.mxu0
      %1358 = vmatpush.msra.mxu0 0.0
      %1359 = vmatpush.msra.mxu0 0.0
      %1360 = vmatpush.msra.mxu0 0.0
      %1361 = vmatpush.msra.mxu0 0.0
      %1362 = vmatpush.msra.mxu0 0.0
      %1363 = vmatpush.msra.mxu0 0.0
      %1364 = vmatpush.msra.mxu0 0.0
      %v1365 = vand.u32 %v323, 4294901760
      %1366 = vmatpush.msra.mxu0 %v1365
      %v1367 = vand.u32 %v321, 4294901760
      %1368 = vmatpush.msra.mxu0 %v1367
      %v1369 = vand.u32 %v319, 4294901760
      %1370 = vmatpush.msra.mxu0 %v1369
      %v1371 = vand.u32 %v317, 4294901760
      %1372 = vmatpush.msra.mxu0 %v1371
      %v1373 = vand.u32 %v315, 4294901760
      %1374 = vmatpush.msra.mxu0 %v1373
      %v1375 = vand.u32 %v313, 4294901760
      %1376 = vmatpush.msra.mxu0 %v1375
      %v1377 = vand.u32 %v311, 4294901760
      %1378 = vmatpush.msra.mxu0 %v1377
      %v1379 = vand.u32 %v309, 4294901760
      %1380 = vmatpush.msra.mxu0 %v1379
      %v1381 = vand.u32 %v307, 4294901760
      %1382 = vmatpush.msra.mxu0 %v1381
      %v1383 = vand.u32 %v915, 4294901760
      %v1384 = vsub.f32 %v915, %v1383
      %v1385 = vand.u32 %v1384, 4294901760
      %1386 = vmatmul.f32.gmra.mxu0 %v1385
      %v1387 = vpop.f32.mrf.mxu0
      %v1388 = vadd.f32 %v1351, %v1387
      %v1389 = vand.u32 %v918, 4294901760
      %v1390 = vsub.f32 %v918, %v1389
      %v1391 = vand.u32 %v1390, 4294901760
      %1392 = vmatmul.f32.gmra.mxu0 %v1391
      %v1393 = vpop.f32.mrf.mxu0
      %v1394 = vadd.f32 %v1356, %v1393
      %1395 = vdwg.mxu0
      %1396 = vmatpush.msra.mxu0 0.0
      %1397 = vmatpush.msra.mxu0 0.0
      %1398 = vmatpush.msra.mxu0 0.0
      %1399 = vmatpush.msra.mxu0 0.0
      %1400 = vmatpush.msra.mxu0 0.0
      %1401 = vmatpush.msra.mxu0 0.0
      %1402 = vmatpush.msra.mxu0 0.0
      %v1403 = vand.u32 %v323, 4294901760
      %v1404 = vsub.f32 %v323, %v1403
      %v1405 = vand.u32 %v1404, 4294901760
      %1406 = vmatpush.msra.mxu0 %v1405
      %v1407 = vand.u32 %v321, 4294901760
      %v1408 = vsub.f32 %v321, %v1407
      %v1409 = vand.u32 %v1408, 4294901760
      %1410 = vmatpush.msra.mxu0 %v1409
      %v1411 = vand.u32 %v319, 4294901760
      %v1412 = vsub.f32 %v319, %v1411
      %v1413 = vand.u32 %v1412, 4294901760
      %1414 = vmatpush.msra.mxu0 %v1413
      %v1415 = vand.u32 %v317, 4294901760
      %v1416 = vsub.f32 %v317, %v1415
      %v1417 = vand.u32 %v1416, 4294901760
      %1418 = vmatpush.msra.mxu0 %v1417
      %v1419 = vand.u32 %v315, 4294901760
      %v1420 = vsub.f32 %v315, %v1419
      %v1421 = vand.u32 %v1420, 4294901760
      %1422 = vmatpush.msra.mxu0 %v1421
      %v1423 = vand.u32 %v313, 4294901760
      %v1424 = vsub.f32 %v313, %v1423
      %v1425 = vand.u32 %v1424, 4294901760
      %1426 = vmatpush.msra.mxu0 %v1425
      %v1427 = vand.u32 %v311, 4294901760
      %v1428 = vsub.f32 %v311, %v1427
      %v1429 = vand.u32 %v1428, 4294901760
      %1430 = vmatpush.msra.mxu0 %v1429
      %v1431 = vand.u32 %v309, 4294901760
      %v1432 = vsub.f32 %v309, %v1431
      %v1433 = vand.u32 %v1432, 4294901760
      %1434 = vmatpush.msra.mxu0 %v1433
      %v1435 = vand.u32 %v307, 4294901760
      %v1436 = vsub.f32 %v307, %v1435
      %v1437 = vand.u32 %v1436, 4294901760
      %1438 = vmatpush.msra.mxu0 %v1437
      %v1439 = vand.u32 %v915, 4294901760
      %1440 = vmatmul.f32.gmra.mxu0 %v1439
      %v1441 = vpop.f32.mrf.mxu0
      %v1442 = vadd.f32 %v1388, %v1441
      %v1443 = vand.u32 %v918, 4294901760
      %1444 = vmatmul.f32.gmra.mxu0 %v1443
      %v1445 = vpop.f32.mrf.mxu0
      %v1446 = vadd.f32 %v1394, %v1445
      %1447 = vdwg.mxu0
      %1448 = vmatpush.msra.mxu0 0.0
      %1449 = vmatpush.msra.mxu0 0.0
      %1450 = vmatpush.msra.mxu0 0.0
      %1451 = vmatpush.msra.mxu0 0.0
      %1452 = vmatpush.msra.mxu0 0.0
      %1453 = vmatpush.msra.mxu0 0.0
      %1454 = vmatpush.msra.mxu0 0.0
      %v1455 = vand.u32 %v323, 4294901760
      %1456 = vmatpush.msra.mxu0 %v1455
      %v1457 = vand.u32 %v321, 4294901760
      %1458 = vmatpush.msra.mxu0 %v1457
      %v1459 = vand.u32 %v319, 4294901760
      %1460 = vmatpush.msra.mxu0 %v1459
      %v1461 = vand.u32 %v317, 4294901760
      %1462 = vmatpush.msra.mxu0 %v1461
      %v1463 = vand.u32 %v315, 4294901760
      %1464 = vmatpush.msra.mxu0 %v1463
      %v1465 = vand.u32 %v313, 4294901760
      %1466 = vmatpush.msra.mxu0 %v1465
      %v1467 = vand.u32 %v311, 4294901760
      %1468 = vmatpush.msra.mxu0 %v1467
      %v1469 = vand.u32 %v309, 4294901760
      %1470 = vmatpush.msra.mxu0 %v1469
      %v1471 = vand.u32 %v307, 4294901760
      %1472 = vmatpush.msra.mxu0 %v1471
      %v1473 = vand.u32 %v915, 4294901760
      %1474 = vmatmul.f32.gmra.mxu0 %v1473
      %v1475 = vpop.f32.mrf.mxu0
      %v1476 = vadd.f32 %v1442, %v1475
      %v1477 = vand.u32 %v918, 4294901760
      %1478 = vmatmul.f32.gmra.mxu0 %v1477
      %v1479 = vpop.f32.mrf.mxu0
      %v1480 = vadd.f32 %v1446, %v1479
      %1481 = vdwg.mxu0
      %v1482 = vld [vmem:[%s299 + $0x2] sm:$0xff]
      %v1483 = vld [vmem:[%s299 + $0xa] sm:$0xff]
      %s1484 = scalar_lea.vmem %s1, 288
      %v1485 = vld [vmem:[%s1484] sm:$0xff]
      %v1486 = vld [vmem:[%s1484 + $0x8] sm:$0xff]
      %v1487 = vld [vmem:[%s1484 + $0x10] sm:$0xff]
      %v1488 = vld [vmem:[%s1484 + $0x18] sm:$0xff]
      %v1489 = vld [vmem:[%s1484 + $0x20] sm:$0xff]
      %v1490 = vld [vmem:[%s1484 + $0x28] sm:$0xff]
      %v1491 = vld [vmem:[%s1484 + $0x30] sm:$0xff]
      %v1492 = vld [vmem:[%s1484 + $0x38] sm:$0xff]
      %v1493 = vld [vmem:[%s1484 + $0x40] sm:$0xff]
      %v1494 = vld [vmem:[%s1484 + $0x48] sm:$0xff]
      %v1495 = vld [vmem:[%s1484 + $0x50] sm:$0xff]
      %v1496 = vld [vmem:[%s1484 + $0x58] sm:$0xff]
      %v1497 = vld [vmem:[%s1484 + $0x60] sm:$0xff]
      %v1498 = vld [vmem:[%s1484 + $0x68] sm:$0xff]
      %v1499 = vld [vmem:[%s1484 + $0x70] sm:$0xff]
      %v1500 = vld [vmem:[%s1484 + $0x78] sm:$0xff]
      %v1501 = vld [vmem:[%s1484 + $0x80] sm:$0xff]
      %v1502 = vld [vmem:[%s1484 + $0x88] sm:$0xff]
      %v1504 = vsel %vm345, %v1482, 0
      %v1507 = vsel %vm345, %v1483, 0
      %1509 = vmatpush.msra.mxu0 0.0
      %1510 = vmatpush.msra.mxu0 0.0
      %1511 = vmatpush.msra.mxu0 0.0
      %1512 = vmatpush.msra.mxu0 0.0
      %1513 = vmatpush.msra.mxu0 0.0
      %1514 = vmatpush.msra.mxu0 0.0
      %1515 = vmatpush.msra.mxu0 0.0
      %v1516 = vand.u32 %v1501, 4294901760
      %1517 = vmatpush.msra.mxu0 %v1516
      %v1518 = vand.u32 %v1499, 4294901760
      %1519 = vmatpush.msra.mxu0 %v1518
      %v1520 = vand.u32 %v1497, 4294901760
      %1521 = vmatpush.msra.mxu0 %v1520
      %v1522 = vand.u32 %v1495, 4294901760
      %1523 = vmatpush.msra.mxu0 %v1522
      %v1524 = vand.u32 %v1493, 4294901760
      %1525 = vmatpush.msra.mxu0 %v1524
      %v1526 = vand.u32 %v1491, 4294901760
      %1527 = vmatpush.msra.mxu0 %v1526
      %v1528 = vand.u32 %v1489, 4294901760
      %1529 = vmatpush.msra.mxu0 %v1528
      %v1530 = vand.u32 %v1487, 4294901760
      %1531 = vmatpush.msra.mxu0 %v1530
      %v1532 = vand.u32 %v1485, 4294901760
      %1533 = vmatpush.msra.mxu0 %v1532
      %v1534 = vand.u32 %v1504, 4294901760
      %v1535 = vsub.f32 %v1504, %v1534
      %v1536 = vand.u32 %v1535, 4294901760
      %v1537 = vsub.f32 %v1535, %v1536
      %v1538 = vand.u32 %v1537, 4294901760
      %1539 = vmatmul.f32.gmra.mxu0 %v1538
      %v1540 = vpop.f32.mrf.mxu0
      %v1541 = vadd.f32 0.0, %v1540
      %v1542 = vand.u32 %v1507, 4294901760
      %v1543 = vsub.f32 %v1507, %v1542
      %v1544 = vand.u32 %v1543, 4294901760
      %v1545 = vsub.f32 %v1543, %v1544
      %v1546 = vand.u32 %v1545, 4294901760
      %1547 = vmatmul.f32.gmra.mxu0 %v1546
      %v1548 = vpop.f32.mrf.mxu0
      %v1549 = vadd.f32 0.0, %v1548
      %1550 = vdwg.mxu0
      %1551 = vmatpush.msra.mxu0 0.0
      %1552 = vmatpush.msra.mxu0 0.0
      %1553 = vmatpush.msra.mxu0 0.0
      %1554 = vmatpush.msra.mxu0 0.0
      %1555 = vmatpush.msra.mxu0 0.0
      %1556 = vmatpush.msra.mxu0 0.0
      %1557 = vmatpush.msra.mxu0 0.0
      %v1558 = vand.u32 %v1501, 4294901760
      %v1559 = vsub.f32 %v1501, %v1558
      %v1560 = vand.u32 %v1559, 4294901760
      %v1561 = vsub.f32 %v1559, %v1560
      %v1562 = vand.u32 %v1561, 4294901760
      %1563 = vmatpush.msra.mxu0 %v1562
      %v1564 = vand.u32 %v1499, 4294901760
      %v1565 = vsub.f32 %v1499, %v1564
      %v1566 = vand.u32 %v1565, 4294901760
      %v1567 = vsub.f32 %v1565, %v1566
      %v1568 = vand.u32 %v1567, 4294901760
      %1569 = vmatpush.msra.mxu0 %v1568
      %v1570 = vand.u32 %v1497, 4294901760
      %v1571 = vsub.f32 %v1497, %v1570
      %v1572 = vand.u32 %v1571, 4294901760
      %v1573 = vsub.f32 %v1571, %v1572
      %v1574 = vand.u32 %v1573, 4294901760
      %1575 = vmatpush.msra.mxu0 %v1574
      %v1576 = vand.u32 %v1495, 4294901760
      %v1577 = vsub.f32 %v1495, %v1576
      %v1578 = vand.u32 %v1577, 4294901760
      %v1579 = vsub.f32 %v1577, %v1578
      %v1580 = vand.u32 %v1579, 4294901760
      %1581 = vmatpush.msra.mxu0 %v1580
      %v1582 = vand.u32 %v1493, 4294901760
      %v1583 = vsub.f32 %v1493, %v1582
      %v1584 = vand.u32 %v1583, 4294901760
      %v1585 = vsub.f32 %v1583, %v1584
      %v1586 = vand.u32 %v1585, 4294901760
      %1587 = vmatpush.msra.mxu0 %v1586
      %v1588 = vand.u32 %v1491, 4294901760
      %v1589 = vsub.f32 %v1491, %v1588
      %v1590 = vand.u32 %v1589, 4294901760
      %v1591 = vsub.f32 %v1589, %v1590
      %v1592 = vand.u32 %v1591, 4294901760
      %1593 = vmatpush.msra.mxu0 %v1592
      %v1594 = vand.u32 %v1489, 4294901760
      %v1595 = vsub.f32 %v1489, %v1594
      %v1596 = vand.u32 %v1595, 4294901760
      %v1597 = vsub.f32 %v1595, %v1596
      %v1598 = vand.u32 %v1597, 4294901760
      %1599 = vmatpush.msra.mxu0 %v1598
      %v1600 = vand.u32 %v1487, 4294901760
      %v1601 = vsub.f32 %v1487, %v1600
      %v1602 = vand.u32 %v1601, 4294901760
      %v1603 = vsub.f32 %v1601, %v1602
      %v1604 = vand.u32 %v1603, 4294901760
      %1605 = vmatpush.msra.mxu0 %v1604
      %v1606 = vand.u32 %v1485, 4294901760
      %v1607 = vsub.f32 %v1485, %v1606
      %v1608 = vand.u32 %v1607, 4294901760
      %v1609 = vsub.f32 %v1607, %v1608
      %v1610 = vand.u32 %v1609, 4294901760
      %1611 = vmatpush.msra.mxu0 %v1610
      %v1612 = vand.u32 %v1504, 4294901760
      %1613 = vmatmul.f32.gmra.mxu0 %v1612
      %v1614 = vpop.f32.mrf.mxu0
      %v1615 = vadd.f32 %v1541, %v1614
      %v1616 = vand.u32 %v1507, 4294901760
      %1617 = vmatmul.f32.gmra.mxu0 %v1616
      %v1618 = vpop.f32.mrf.mxu0
      %v1619 = vadd.f32 %v1549, %v1618
      %1620 = vdwg.mxu0
      %1621 = vmatpush.msra.mxu0 0.0
      %1622 = vmatpush.msra.mxu0 0.0
      %1623 = vmatpush.msra.mxu0 0.0
      %1624 = vmatpush.msra.mxu0 0.0
      %1625 = vmatpush.msra.mxu0 0.0
      %1626 = vmatpush.msra.mxu0 0.0
      %1627 = vmatpush.msra.mxu0 0.0
      %v1628 = vand.u32 %v1501, 4294901760
      %v1629 = vsub.f32 %v1501, %v1628
      %1630 = vmatpush.msra.mxu0 %v1629
      %v1631 = vand.u32 %v1499, 4294901760
      %v1632 = vsub.f32 %v1499, %v1631
      %1633 = vmatpush.msra.mxu0 %v1632
      %v1634 = vand.u32 %v1497, 4294901760
      %v1635 = vsub.f32 %v1497, %v1634
      %1636 = vmatpush.msra.mxu0 %v1635
      %v1637 = vand.u32 %v1495, 4294901760
      %v1638 = vsub.f32 %v1495, %v1637
      %1639 = vmatpush.msra.mxu0 %v1638
      %v1640 = vand.u32 %v1493, 4294901760
      %v1641 = vsub.f32 %v1493, %v1640
      %1642 = vmatpush.msra.mxu0 %v1641
      %v1643 = vand.u32 %v1491, 4294901760
      %v1644 = vsub.f32 %v1491, %v1643
      %1645 = vmatpush.msra.mxu0 %v1644
      %v1646 = vand.u32 %v1489, 4294901760
      %v1647 = vsub.f32 %v1489, %v1646
      %1648 = vmatpush.msra.mxu0 %v1647
      %v1649 = vand.u32 %v1487, 4294901760
      %v1650 = vsub.f32 %v1487, %v1649
      %1651 = vmatpush.msra.mxu0 %v1650
      %v1652 = vand.u32 %v1485, 4294901760
      %v1653 = vsub.f32 %v1485, %v1652
      %1654 = vmatpush.msra.mxu0 %v1653
      %v1655 = vand.u32 %v1504, 4294901760
      %v1656 = vsub.f32 %v1504, %v1655
      %1657 = vmatmul.f32.gmra.mxu0 %v1656
      %v1658 = vpop.f32.mrf.mxu0
      %v1659 = vadd.f32 %v1615, %v1658
      %v1660 = vand.u32 %v1507, 4294901760
      %v1661 = vsub.f32 %v1507, %v1660
      %1662 = vmatmul.f32.gmra.mxu0 %v1661
      %v1663 = vpop.f32.mrf.mxu0
      %v1664 = vadd.f32 %v1619, %v1663
      %1665 = vdwg.mxu0
      %1666 = vmatpush.msra.mxu0 0.0
      %1667 = vmatpush.msra.mxu0 0.0
      %1668 = vmatpush.msra.mxu0 0.0
      %1669 = vmatpush.msra.mxu0 0.0
      %1670 = vmatpush.msra.mxu0 0.0
      %1671 = vmatpush.msra.mxu0 0.0
      %1672 = vmatpush.msra.mxu0 0.0
      %v1673 = vand.u32 %v1501, 4294901760
      %1674 = vmatpush.msra.mxu0 %v1673
      %v1675 = vand.u32 %v1499, 4294901760
      %1676 = vmatpush.msra.mxu0 %v1675
      %v1677 = vand.u32 %v1497, 4294901760
      %1678 = vmatpush.msra.mxu0 %v1677
      %v1679 = vand.u32 %v1495, 4294901760
      %1680 = vmatpush.msra.mxu0 %v1679
      %v1681 = vand.u32 %v1493, 4294901760
      %1682 = vmatpush.msra.mxu0 %v1681
      %v1683 = vand.u32 %v1491, 4294901760
      %1684 = vmatpush.msra.mxu0 %v1683
      %v1685 = vand.u32 %v1489, 4294901760
      %1686 = vmatpush.msra.mxu0 %v1685
      %v1687 = vand.u32 %v1487, 4294901760
      %1688 = vmatpush.msra.mxu0 %v1687
      %v1689 = vand.u32 %v1485, 4294901760
      %1690 = vmatpush.msra.mxu0 %v1689
      %v1691 = vand.u32 %v1504, 4294901760
      %v1692 = vsub.f32 %v1504, %v1691
      %v1693 = vand.u32 %v1692, 4294901760
      %1694 = vmatmul.f32.gmra.mxu0 %v1693
      %v1695 = vpop.f32.mrf.mxu0
      %v1696 = vadd.f32 %v1659, %v1695
      %v1697 = vand.u32 %v1507, 4294901760
      %v1698 = vsub.f32 %v1507, %v1697
      %v1699 = vand.u32 %v1698, 4294901760
      %1700 = vmatmul.f32.gmra.mxu0 %v1699
      %v1701 = vpop.f32.mrf.mxu0
      %v1702 = vadd.f32 %v1664, %v1701
      %1703 = vdwg.mxu0
      %1704 = vmatpush.msra.mxu0 0.0
      %1705 = vmatpush.msra.mxu0 0.0
      %1706 = vmatpush.msra.mxu0 0.0
      %1707 = vmatpush.msra.mxu0 0.0
      %1708 = vmatpush.msra.mxu0 0.0
      %1709 = vmatpush.msra.mxu0 0.0
      %1710 = vmatpush.msra.mxu0 0.0
      %v1711 = vand.u32 %v1501, 4294901760
      %v1712 = vsub.f32 %v1501, %v1711
      %v1713 = vand.u32 %v1712, 4294901760
      %1714 = vmatpush.msra.mxu0 %v1713
      %v1715 = vand.u32 %v1499, 4294901760
      %v1716 = vsub.f32 %v1499, %v1715
      %v1717 = vand.u32 %v1716, 4294901760
      %1718 = vmatpush.msra.mxu0 %v1717
      %v1719 = vand.u32 %v1497, 4294901760
      %v1720 = vsub.f32 %v1497, %v1719
      %v1721 = vand.u32 %v1720, 4294901760
      %1722 = vmatpush.msra.mxu0 %v1721
      %v1723 = vand.u32 %v1495, 4294901760
      %v1724 = vsub.f32 %v1495, %v1723
      %v1725 = vand.u32 %v1724, 4294901760
      %1726 = vmatpush.msra.mxu0 %v1725
      %v1727 = vand.u32 %v1493, 4294901760
      %v1728 = vsub.f32 %v1493, %v1727
      %v1729 = vand.u32 %v1728, 4294901760
      %1730 = vmatpush.msra.mxu0 %v1729
      %v1731 = vand.u32 %v1491, 4294901760
      %v1732 = vsub.f32 %v1491, %v1731
      %v1733 = vand.u32 %v1732, 4294901760
      %1734 = vmatpush.msra.mxu0 %v1733
      %v1735 = vand.u32 %v1489, 4294901760
      %v1736 = vsub.f32 %v1489, %v1735
      %v1737 = vand.u32 %v1736, 4294901760
      %1738 = vmatpush.msra.mxu0 %v1737
      %v1739 = vand.u32 %v1487, 4294901760
      %v1740 = vsub.f32 %v1487, %v1739
      %v1741 = vand.u32 %v1740, 4294901760
      %1742 = vmatpush.msra.mxu0 %v1741
      %v1743 = vand.u32 %v1485, 4294901760
      %v1744 = vsub.f32 %v1485, %v1743
      %v1745 = vand.u32 %v1744, 4294901760
      %1746 = vmatpush.msra.mxu0 %v1745
      %v1747 = vand.u32 %v1504, 4294901760
      %1748 = vmatmul.f32.gmra.mxu0 %v1747
      %v1749 = vpop.f32.mrf.mxu0
      %v1750 = vadd.f32 %v1696, %v1749
      %v1751 = vand.u32 %v1507, 4294901760
      %1752 = vmatmul.f32.gmra.mxu0 %v1751
      %v1753 = vpop.f32.mrf.mxu0
      %v1754 = vadd.f32 %v1702, %v1753
      %1755 = vdwg.mxu0
      %1756 = vmatpush.msra.mxu0 0.0
      %1757 = vmatpush.msra.mxu0 0.0
      %1758 = vmatpush.msra.mxu0 0.0
      %1759 = vmatpush.msra.mxu0 0.0
      %1760 = vmatpush.msra.mxu0 0.0
      %1761 = vmatpush.msra.mxu0 0.0
      %1762 = vmatpush.msra.mxu0 0.0
      %v1763 = vand.u32 %v1501, 4294901760
      %1764 = vmatpush.msra.mxu0 %v1763
      %v1765 = vand.u32 %v1499, 4294901760
      %1766 = vmatpush.msra.mxu0 %v1765
      %v1767 = vand.u32 %v1497, 4294901760
      %1768 = vmatpush.msra.mxu0 %v1767
      %v1769 = vand.u32 %v1495, 4294901760
      %1770 = vmatpush.msra.mxu0 %v1769
      %v1771 = vand.u32 %v1493, 4294901760
      %1772 = vmatpush.msra.mxu0 %v1771
      %v1773 = vand.u32 %v1491, 4294901760
      %1774 = vmatpush.msra.mxu0 %v1773
      %v1775 = vand.u32 %v1489, 4294901760
      %1776 = vmatpush.msra.mxu0 %v1775
      %v1777 = vand.u32 %v1487, 4294901760
      %1778 = vmatpush.msra.mxu0 %v1777
      %v1779 = vand.u32 %v1485, 4294901760
      %1780 = vmatpush.msra.mxu0 %v1779
      %v1781 = vand.u32 %v1504, 4294901760
      %1782 = vmatmul.f32.gmra.mxu0 %v1781
      %v1783 = vpop.f32.mrf.mxu0
      %v1784 = vadd.f32 %v1750, %v1783
      %v1785 = vand.u32 %v1507, 4294901760
      %1786 = vmatmul.f32.gmra.mxu0 %v1785
      %v1787 = vpop.f32.mrf.mxu0
      %v1788 = vadd.f32 %v1754, %v1787
      %1789 = vdwg.mxu0
      %1790 = vmatpush.msra.mxu0 0.0
      %1791 = vmatpush.msra.mxu0 0.0
      %1792 = vmatpush.msra.mxu0 0.0
      %1793 = vmatpush.msra.mxu0 0.0
      %1794 = vmatpush.msra.mxu0 0.0
      %1795 = vmatpush.msra.mxu0 0.0
      %1796 = vmatpush.msra.mxu0 0.0
      %v1797 = vand.u32 %v1502, 4294901760
      %1798 = vmatpush.msra.mxu0 %v1797
      %v1799 = vand.u32 %v1500, 4294901760
      %1800 = vmatpush.msra.mxu0 %v1799
      %v1801 = vand.u32 %v1498, 4294901760
      %1802 = vmatpush.msra.mxu0 %v1801
      %v1803 = vand.u32 %v1496, 4294901760
      %1804 = vmatpush.msra.mxu0 %v1803
      %v1805 = vand.u32 %v1494, 4294901760
      %1806 = vmatpush.msra.mxu0 %v1805
      %v1807 = vand.u32 %v1492, 4294901760
      %1808 = vmatpush.msra.mxu0 %v1807
      %v1809 = vand.u32 %v1490, 4294901760
      %1810 = vmatpush.msra.mxu0 %v1809
      %v1811 = vand.u32 %v1488, 4294901760
      %1812 = vmatpush.msra.mxu0 %v1811
      %v1813 = vand.u32 %v1486, 4294901760
      %1814 = vmatpush.msra.mxu0 %v1813
      %v1815 = vand.u32 %v1504, 4294901760
      %v1816 = vsub.f32 %v1504, %v1815
      %v1817 = vand.u32 %v1816, 4294901760
      %v1818 = vsub.f32 %v1816, %v1817
      %v1819 = vand.u32 %v1818, 4294901760
      %1820 = vmatmul.f32.gmra.mxu0 %v1819
      %v1821 = vpop.f32.mrf.mxu0
      %v1822 = vadd.f32 0.0, %v1821
      %v1823 = vand.u32 %v1507, 4294901760
      %v1824 = vsub.f32 %v1507, %v1823
      %v1825 = vand.u32 %v1824, 4294901760
      %v1826 = vsub.f32 %v1824, %v1825
      %v1827 = vand.u32 %v1826, 4294901760
      %1828 = vmatmul.f32.gmra.mxu0 %v1827
      %v1829 = vpop.f32.mrf.mxu0
      %v1830 = vadd.f32 0.0, %v1829
      %1831 = vdwg.mxu0
      %1832 = vmatpush.msra.mxu0 0.0
      %1833 = vmatpush.msra.mxu0 0.0
      %1834 = vmatpush.msra.mxu0 0.0
      %1835 = vmatpush.msra.mxu0 0.0
      %1836 = vmatpush.msra.mxu0 0.0
      %1837 = vmatpush.msra.mxu0 0.0
      %1838 = vmatpush.msra.mxu0 0.0
      %v1839 = vand.u32 %v1502, 4294901760
      %v1840 = vsub.f32 %v1502, %v1839
      %v1841 = vand.u32 %v1840, 4294901760
      %v1842 = vsub.f32 %v1840, %v1841
      %v1843 = vand.u32 %v1842, 4294901760
      %1844 = vmatpush.msra.mxu0 %v1843
      %v1845 = vand.u32 %v1500, 4294901760
      %v1846 = vsub.f32 %v1500, %v1845
      %v1847 = vand.u32 %v1846, 4294901760
      %v1848 = vsub.f32 %v1846, %v1847
      %v1849 = vand.u32 %v1848, 4294901760
      %1850 = vmatpush.msra.mxu0 %v1849
      %v1851 = vand.u32 %v1498, 4294901760
      %v1852 = vsub.f32 %v1498, %v1851
      %v1853 = vand.u32 %v1852, 4294901760
      %v1854 = vsub.f32 %v1852, %v1853
      %v1855 = vand.u32 %v1854, 4294901760
      %1856 = vmatpush.msra.mxu0 %v1855
      %v1857 = vand.u32 %v1496, 4294901760
      %v1858 = vsub.f32 %v1496, %v1857
      %v1859 = vand.u32 %v1858, 4294901760
      %v1860 = vsub.f32 %v1858, %v1859
      %v1861 = vand.u32 %v1860, 4294901760
      %1862 = vmatpush.msra.mxu0 %v1861
      %v1863 = vand.u32 %v1494, 4294901760
      %v1864 = vsub.f32 %v1494, %v1863
      %v1865 = vand.u32 %v1864, 4294901760
      %v1866 = vsub.f32 %v1864, %v1865
      %v1867 = vand.u32 %v1866, 4294901760
      %1868 = vmatpush.msra.mxu0 %v1867
      %v1869 = vand.u32 %v1492, 4294901760
      %v1870 = vsub.f32 %v1492, %v1869
      %v1871 = vand.u32 %v1870, 4294901760
      %v1872 = vsub.f32 %v1870, %v1871
      %v1873 = vand.u32 %v1872, 4294901760
      %1874 = vmatpush.msra.mxu0 %v1873
      %v1875 = vand.u32 %v1490, 4294901760
      %v1876 = vsub.f32 %v1490, %v1875
      %v1877 = vand.u32 %v1876, 4294901760
      %v1878 = vsub.f32 %v1876, %v1877
      %v1879 = vand.u32 %v1878, 4294901760
      %1880 = vmatpush.msra.mxu0 %v1879
      %v1881 = vand.u32 %v1488, 4294901760
      %v1882 = vsub.f32 %v1488, %v1881
      %v1883 = vand.u32 %v1882, 4294901760
      %v1884 = vsub.f32 %v1882, %v1883
      %v1885 = vand.u32 %v1884, 4294901760
      %1886 = vmatpush.msra.mxu0 %v1885
      %v1887 = vand.u32 %v1486, 4294901760
      %v1888 = vsub.f32 %v1486, %v1887
      %v1889 = vand.u32 %v1888, 4294901760
      %v1890 = vsub.f32 %v1888, %v1889
      %v1891 = vand.u32 %v1890, 4294901760
      %1892 = vmatpush.msra.mxu0 %v1891
      %v1893 = vand.u32 %v1504, 4294901760
      %1894 = vmatmul.f32.gmra.mxu0 %v1893
      %v1895 = vpop.f32.mrf.mxu0
      %v1896 = vadd.f32 %v1822, %v1895
      %v1897 = vand.u32 %v1507, 4294901760
      %1898 = vmatmul.f32.gmra.mxu0 %v1897
      %v1899 = vpop.f32.mrf.mxu0
      %v1900 = vadd.f32 %v1830, %v1899
      %1901 = vdwg.mxu0
      %1902 = vmatpush.msra.mxu0 0.0
      %1903 = vmatpush.msra.mxu0 0.0
      %1904 = vmatpush.msra.mxu0 0.0
      %1905 = vmatpush.msra.mxu0 0.0
      %1906 = vmatpush.msra.mxu0 0.0
      %1907 = vmatpush.msra.mxu0 0.0
      %1908 = vmatpush.msra.mxu0 0.0
      %v1909 = vand.u32 %v1502, 4294901760
      %v1910 = vsub.f32 %v1502, %v1909
      %1911 = vmatpush.msra.mxu0 %v1910
      %v1912 = vand.u32 %v1500, 4294901760
      %v1913 = vsub.f32 %v1500, %v1912
      %1914 = vmatpush.msra.mxu0 %v1913
      %v1915 = vand.u32 %v1498, 4294901760
      %v1916 = vsub.f32 %v1498, %v1915
      %1917 = vmatpush.msra.mxu0 %v1916
      %v1918 = vand.u32 %v1496, 4294901760
      %v1919 = vsub.f32 %v1496, %v1918
      %1920 = vmatpush.msra.mxu0 %v1919
      %v1921 = vand.u32 %v1494, 4294901760
      %v1922 = vsub.f32 %v1494, %v1921
      %1923 = vmatpush.msra.mxu0 %v1922
      %v1924 = vand.u32 %v1492, 4294901760
      %v1925 = vsub.f32 %v1492, %v1924
      %1926 = vmatpush.msra.mxu0 %v1925
      %v1927 = vand.u32 %v1490, 4294901760
      %v1928 = vsub.f32 %v1490, %v1927
      %1929 = vmatpush.msra.mxu0 %v1928
      %v1930 = vand.u32 %v1488, 4294901760
      %v1931 = vsub.f32 %v1488, %v1930
      %1932 = vmatpush.msra.mxu0 %v1931
      %v1933 = vand.u32 %v1486, 4294901760
      %v1934 = vsub.f32 %v1486, %v1933
      %1935 = vmatpush.msra.mxu0 %v1934
      %v1936 = vand.u32 %v1504, 4294901760
      %v1937 = vsub.f32 %v1504, %v1936
      %1938 = vmatmul.f32.gmra.mxu0 %v1937
      %v1939 = vpop.f32.mrf.mxu0
      %v1940 = vadd.f32 %v1896, %v1939
      %v1941 = vand.u32 %v1507, 4294901760
      %v1942 = vsub.f32 %v1507, %v1941
      %1943 = vmatmul.f32.gmra.mxu0 %v1942
      %v1944 = vpop.f32.mrf.mxu0
      %v1945 = vadd.f32 %v1900, %v1944
      %1946 = vdwg.mxu0
      %1947 = vmatpush.msra.mxu0 0.0
      %1948 = vmatpush.msra.mxu0 0.0
      %1949 = vmatpush.msra.mxu0 0.0
      %1950 = vmatpush.msra.mxu0 0.0
      %1951 = vmatpush.msra.mxu0 0.0
      %1952 = vmatpush.msra.mxu0 0.0
      %1953 = vmatpush.msra.mxu0 0.0
      %v1954 = vand.u32 %v1502, 4294901760
      %1955 = vmatpush.msra.mxu0 %v1954
      %v1956 = vand.u32 %v1500, 4294901760
      %1957 = vmatpush.msra.mxu0 %v1956
      %v1958 = vand.u32 %v1498, 4294901760
      %1959 = vmatpush.msra.mxu0 %v1958
      %v1960 = vand.u32 %v1496, 4294901760
      %1961 = vmatpush.msra.mxu0 %v1960
      %v1962 = vand.u32 %v1494, 4294901760
      %1963 = vmatpush.msra.mxu0 %v1962
      %v1964 = vand.u32 %v1492, 4294901760
      %1965 = vmatpush.msra.mxu0 %v1964
      %v1966 = vand.u32 %v1490, 4294901760
      %1967 = vmatpush.msra.mxu0 %v1966
      %v1968 = vand.u32 %v1488, 4294901760
      %1969 = vmatpush.msra.mxu0 %v1968
      %v1970 = vand.u32 %v1486, 4294901760
      %1971 = vmatpush.msra.mxu0 %v1970
      %v1972 = vand.u32 %v1504, 4294901760
      %v1973 = vsub.f32 %v1504, %v1972
      %v1974 = vand.u32 %v1973, 4294901760
      %1975 = vmatmul.f32.gmra.mxu0 %v1974
      %v1976 = vpop.f32.mrf.mxu0
      %v1977 = vadd.f32 %v1940, %v1976
      %v1978 = vand.u32 %v1507, 4294901760
      %v1979 = vsub.f32 %v1507, %v1978
      %v1980 = vand.u32 %v1979, 4294901760
      %1981 = vmatmul.f32.gmra.mxu0 %v1980
      %v1982 = vpop.f32.mrf.mxu0
      %v1983 = vadd.f32 %v1945, %v1982
      %1984 = vdwg.mxu0
      %1985 = vmatpush.msra.mxu0 0.0
      %1986 = vmatpush.msra.mxu0 0.0
      %1987 = vmatpush.msra.mxu0 0.0
      %1988 = vmatpush.msra.mxu0 0.0
      %1989 = vmatpush.msra.mxu0 0.0
      %1990 = vmatpush.msra.mxu0 0.0
      %1991 = vmatpush.msra.mxu0 0.0
      %v1992 = vand.u32 %v1502, 4294901760
      %v1993 = vsub.f32 %v1502, %v1992
      %v1994 = vand.u32 %v1993, 4294901760
      %1995 = vmatpush.msra.mxu0 %v1994
      %v1996 = vand.u32 %v1500, 4294901760
      %v1997 = vsub.f32 %v1500, %v1996
      %v1998 = vand.u32 %v1997, 4294901760
      %1999 = vmatpush.msra.mxu0 %v1998
      %v2000 = vand.u32 %v1498, 4294901760
      %v2001 = vsub.f32 %v1498, %v2000
      %v2002 = vand.u32 %v2001, 4294901760
      %2003 = vmatpush.msra.mxu0 %v2002
      %v2004 = vand.u32 %v1496, 4294901760
      %v2005 = vsub.f32 %v1496, %v2004
      %v2006 = vand.u32 %v2005, 4294901760
      %2007 = vmatpush.msra.mxu0 %v2006
      %v2008 = vand.u32 %v1494, 4294901760
      %v2009 = vsub.f32 %v1494, %v2008
      %v2010 = vand.u32 %v2009, 4294901760
      %2011 = vmatpush.msra.mxu0 %v2010
      %v2012 = vand.u32 %v1492, 4294901760
      %v2013 = vsub.f32 %v1492, %v2012
      %v2014 = vand.u32 %v2013, 4294901760
      %2015 = vmatpush.msra.mxu0 %v2014
      %v2016 = vand.u32 %v1490, 4294901760
      %v2017 = vsub.f32 %v1490, %v2016
      %v2018 = vand.u32 %v2017, 4294901760
      %2019 = vmatpush.msra.mxu0 %v2018
      %v2020 = vand.u32 %v1488, 4294901760
      %v2021 = vsub.f32 %v1488, %v2020
      %v2022 = vand.u32 %v2021, 4294901760
      %2023 = vmatpush.msra.mxu0 %v2022
      %v2024 = vand.u32 %v1486, 4294901760
      %v2025 = vsub.f32 %v1486, %v2024
      %v2026 = vand.u32 %v2025, 4294901760
      %2027 = vmatpush.msra.mxu0 %v2026
      %v2028 = vand.u32 %v1504, 4294901760
      %2029 = vmatmul.f32.gmra.mxu0 %v2028
      %v2030 = vpop.f32.mrf.mxu0
      %v2031 = vadd.f32 %v1977, %v2030
      %v2032 = vand.u32 %v1507, 4294901760
      %2033 = vmatmul.f32.gmra.mxu0 %v2032
      %v2034 = vpop.f32.mrf.mxu0
      %v2035 = vadd.f32 %v1983, %v2034
      %2036 = vdwg.mxu0
      %2037 = vmatpush.msra.mxu0 0.0
      %2038 = vmatpush.msra.mxu0 0.0
      %2039 = vmatpush.msra.mxu0 0.0
      %2040 = vmatpush.msra.mxu0 0.0
      %2041 = vmatpush.msra.mxu0 0.0
      %2042 = vmatpush.msra.mxu0 0.0
      %2043 = vmatpush.msra.mxu0 0.0
      %v2044 = vand.u32 %v1502, 4294901760
      %2045 = vmatpush.msra.mxu0 %v2044
      %v2046 = vand.u32 %v1500, 4294901760
      %2047 = vmatpush.msra.mxu0 %v2046
      %v2048 = vand.u32 %v1498, 4294901760
      %2049 = vmatpush.msra.mxu0 %v2048
      %v2050 = vand.u32 %v1496, 4294901760
      %2051 = vmatpush.msra.mxu0 %v2050
      %v2052 = vand.u32 %v1494, 4294901760
      %2053 = vmatpush.msra.mxu0 %v2052
      %v2054 = vand.u32 %v1492, 4294901760
      %2055 = vmatpush.msra.mxu0 %v2054
      %v2056 = vand.u32 %v1490, 4294901760
      %2057 = vmatpush.msra.mxu0 %v2056
      %v2058 = vand.u32 %v1488, 4294901760
      %2059 = vmatpush.msra.mxu0 %v2058
      %v2060 = vand.u32 %v1486, 4294901760
      %2061 = vmatpush.msra.mxu0 %v2060
      %v2062 = vand.u32 %v1504, 4294901760
      %2063 = vmatmul.f32.gmra.mxu0 %v2062
      %v2064 = vpop.f32.mrf.mxu0
      %v2065 = vadd.f32 %v2031, %v2064
      %v2066 = vand.u32 %v1507, 4294901760
      %2067 = vmatmul.f32.gmra.mxu0 %v2066
      %v2068 = vpop.f32.mrf.mxu0
      %v2069 = vadd.f32 %v2035, %v2068
      %2070 = vdwg.mxu0
      %v2071 = vadd.f32 %v1195, %v1784
      %v2072 = vadd.f32 %v1476, %v2065
      %v2073 = vadd.f32 %v1199, %v1788
      %v2074 = vadd.f32 %v1480, %v2069
      %v2075 = vld [vmem:[%s2] sm:$0x1]
      %v2077 = vperm.slane %v2075, 0
      %v2079 = vadd.f32 %v2071, %v2077
      %v2080 = vadd.f32 %v2073, %v2077
      %v2081 = vmax.f32 %v2079, 0.0
      %v2082 = vmax.f32 %v2080, 0.0
      %v2083 = vld [vmem:[%s3] sm:$0xff]
      %v2084 = vld [vmem:[%s3 + $0x8] sm:$0xff]
      %v2085 = vld [vmem:[%s3 + $0x10] sm:$0xff]
      %v2086 = vld [vmem:[%s3 + $0x18] sm:$0xff]
      %v2087 = vld [vmem:[%s3 + $0x20] sm:$0xff]
      %v2088 = vld [vmem:[%s3 + $0x28] sm:$0xff]
      %v2089 = vld [vmem:[%s3 + $0x30] sm:$0xff]
      %v2090 = vld [vmem:[%s3 + $0x38] sm:$0xff]
      %v2091 = vld [vmem:[%s3 + $0x40] sm:$0xff]
      %v2092 = vld [vmem:[%s3 + $0x48] sm:$0xff]
      %v2093 = vld [vmem:[%s3 + $0x50] sm:$0xff]
      %v2094 = vld [vmem:[%s3 + $0x58] sm:$0xff]
      %v2095 = vld [vmem:[%s3 + $0x60] sm:$0xff]
      %v2096 = vld [vmem:[%s3 + $0x68] sm:$0xff]
      %v2097 = vld [vmem:[%s3 + $0x70] sm:$0xff]
      %v2098 = vld [vmem:[%s3 + $0x78] sm:$0xff]
      %v2099 = vand.u32 %v2098, 4294901760
      %2100 = vmatpush.msra.mxu0 %v2099
      %v2101 = vand.u32 %v2097, 4294901760
      %2102 = vmatpush.msra.mxu0 %v2101
      %v2103 = vand.u32 %v2096, 4294901760
      %2104 = vmatpush.msra.mxu0 %v2103
      %v2105 = vand.u32 %v2095, 4294901760
      %2106 = vmatpush.msra.mxu0 %v2105
      %v2107 = vand.u32 %v2094, 4294901760
      %2108 = vmatpush.msra.mxu0 %v2107
      %v2109 = vand.u32 %v2093, 4294901760
      %2110 = vmatpush.msra.mxu0 %v2109
      %v2111 = vand.u32 %v2092, 4294901760
      %2112 = vmatpush.msra.mxu0 %v2111
      %v2113 = vand.u32 %v2091, 4294901760
      %2114 = vmatpush.msra.mxu0 %v2113
      %v2115 = vand.u32 %v2090, 4294901760
      %2116 = vmatpush.msra.mxu0 %v2115
      %v2117 = vand.u32 %v2089, 4294901760
      %2118 = vmatpush.msra.mxu0 %v2117
      %v2119 = vand.u32 %v2088, 4294901760
      %2120 = vmatpush.msra.mxu0 %v2119
      %v2121 = vand.u32 %v2087, 4294901760
      %2122 = vmatpush.msra.mxu0 %v2121
      %v2123 = vand.u32 %v2086, 4294901760
      %2124 = vmatpush.msra.mxu0 %v2123
      %v2125 = vand.u32 %v2085, 4294901760
      %2126 = vmatpush.msra.mxu0 %v2125
      %v2127 = vand.u32 %v2084, 4294901760
      %2128 = vmatpush.msra.mxu0 %v2127
      %v2129 = vand.u32 %v2083, 4294901760
      %2130 = vmatpush.msra.mxu0 %v2129
      %v2131 = vand.u32 %v2081, 4294901760
      %v2132 = vsub.f32 %v2081, %v2131
      %v2133 = vand.u32 %v2132, 4294901760
      %v2134 = vsub.f32 %v2132, %v2133
      %v2135 = vand.u32 %v2134, 4294901760
      %2136 = vmatmul.f32.gmra.mxu0 %v2135
      %v2137 = vpop.f32.mrf.mxu0
      %v2138 = vadd.f32 0.0, %v2137
      %v2139 = vand.u32 %v2082, 4294901760
      %v2140 = vsub.f32 %v2082, %v2139
      %v2141 = vand.u32 %v2140, 4294901760
      %v2142 = vsub.f32 %v2140, %v2141
      %v2143 = vand.u32 %v2142, 4294901760
      %2144 = vmatmul.f32.gmra.mxu0 %v2143
      %v2145 = vpop.f32.mrf.mxu0
      %v2146 = vadd.f32 0.0, %v2145
      %2147 = vdwg.mxu0
      %v2148 = vand.u32 %v2098, 4294901760
      %v2149 = vsub.f32 %v2098, %v2148
      %v2150 = vand.u32 %v2149, 4294901760
      %v2151 = vsub.f32 %v2149, %v2150
      %v2152 = vand.u32 %v2151, 4294901760
      %2153 = vmatpush.msra.mxu0 %v2152
      %v2154 = vand.u32 %v2097, 4294901760
      %v2155 = vsub.f32 %v2097, %v2154
      %v2156 = vand.u32 %v2155, 4294901760
      %v2157 = vsub.f32 %v2155, %v2156
      %v2158 = vand.u32 %v2157, 4294901760
      %2159 = vmatpush.msra.mxu0 %v2158
      %v2160 = vand.u32 %v2096, 4294901760
      %v2161 = vsub.f32 %v2096, %v2160
      %v2162 = vand.u32 %v2161, 4294901760
      %v2163 = vsub.f32 %v2161, %v2162
      %v2164 = vand.u32 %v2163, 4294901760
      %2165 = vmatpush.msra.mxu0 %v2164
      %v2166 = vand.u32 %v2095, 4294901760
      %v2167 = vsub.f32 %v2095, %v2166
      %v2168 = vand.u32 %v2167, 4294901760
      %v2169 = vsub.f32 %v2167, %v2168
      %v2170 = vand.u32 %v2169, 4294901760
      %2171 = vmatpush.msra.mxu0 %v2170
      %v2172 = vand.u32 %v2094, 4294901760
      %v2173 = vsub.f32 %v2094, %v2172
      %v2174 = vand.u32 %v2173, 4294901760
      %v2175 = vsub.f32 %v2173, %v2174
      %v2176 = vand.u32 %v2175, 4294901760
      %2177 = vmatpush.msra.mxu0 %v2176
      %v2178 = vand.u32 %v2093, 4294901760
      %v2179 = vsub.f32 %v2093, %v2178
      %v2180 = vand.u32 %v2179, 4294901760
      %v2181 = vsub.f32 %v2179, %v2180
      %v2182 = vand.u32 %v2181, 4294901760
      %2183 = vmatpush.msra.mxu0 %v2182
      %v2184 = vand.u32 %v2092, 4294901760
      %v2185 = vsub.f32 %v2092, %v2184
      %v2186 = vand.u32 %v2185, 4294901760
      %v2187 = vsub.f32 %v2185, %v2186
      %v2188 = vand.u32 %v2187, 4294901760
      %2189 = vmatpush.msra.mxu0 %v2188
      %v2190 = vand.u32 %v2091, 4294901760
      %v2191 = vsub.f32 %v2091, %v2190
      %v2192 = vand.u32 %v2191, 4294901760
      %v2193 = vsub.f32 %v2191, %v2192
      %v2194 = vand.u32 %v2193, 4294901760
      %2195 = vmatpush.msra.mxu0 %v2194
      %v2196 = vand.u32 %v2090, 4294901760
      %v2197 = vsub.f32 %v2090, %v2196
      %v2198 = vand.u32 %v2197, 4294901760
      %v2199 = vsub.f32 %v2197, %v2198
      %v2200 = vand.u32 %v2199, 4294901760
      %2201 = vmatpush.msra.mxu0 %v2200
      %v2202 = vand.u32 %v2089, 4294901760
      %v2203 = vsub.f32 %v2089, %v2202
      %v2204 = vand.u32 %v2203, 4294901760
      %v2205 = vsub.f32 %v2203, %v2204
      %v2206 = vand.u32 %v2205, 4294901760
      %2207 = vmatpush.msra.mxu0 %v2206
      %v2208 = vand.u32 %v2088, 4294901760
      %v2209 = vsub.f32 %v2088, %v2208
      %v2210 = vand.u32 %v2209, 4294901760
      %v2211 = vsub.f32 %v2209, %v2210
      %v2212 = vand.u32 %v2211, 4294901760
      %2213 = vmatpush.msra.mxu0 %v2212
      %v2214 = vand.u32 %v2087, 4294901760
      %v2215 = vsub.f32 %v2087, %v2214
      %v2216 = vand.u32 %v2215, 4294901760
      %v2217 = vsub.f32 %v2215, %v2216
      %v2218 = vand.u32 %v2217, 4294901760
      %2219 = vmatpush.msra.mxu0 %v2218
      %v2220 = vand.u32 %v2086, 4294901760
      %v2221 = vsub.f32 %v2086, %v2220
      %v2222 = vand.u32 %v2221, 4294901760
      %v2223 = vsub.f32 %v2221, %v2222
      %v2224 = vand.u32 %v2223, 4294901760
      %2225 = vmatpush.msra.mxu0 %v2224
      %v2226 = vand.u32 %v2085, 4294901760
      %v2227 = vsub.f32 %v2085, %v2226
      %v2228 = vand.u32 %v2227, 4294901760
      %v2229 = vsub.f32 %v2227, %v2228
      %v2230 = vand.u32 %v2229, 4294901760
      %2231 = vmatpush.msra.mxu0 %v2230
      %v2232 = vand.u32 %v2084, 4294901760
      %v2233 = vsub.f32 %v2084, %v2232
      %v2234 = vand.u32 %v2233, 4294901760
      %v2235 = vsub.f32 %v2233, %v2234
      %v2236 = vand.u32 %v2235, 4294901760
      %2237 = vmatpush.msra.mxu0 %v2236
      %v2238 = vand.u32 %v2083, 4294901760
      %v2239 = vsub.f32 %v2083, %v2238
      %v2240 = vand.u32 %v2239, 4294901760
      %v2241 = vsub.f32 %v2239, %v2240
      %v2242 = vand.u32 %v2241, 4294901760
      %2243 = vmatpush.msra.mxu0 %v2242
      %v2244 = vand.u32 %v2081, 4294901760
      %2245 = vmatmul.f32.gmra.mxu0 %v2244
      %v2246 = vpop.f32.mrf.mxu0
      %v2247 = vadd.f32 %v2138, %v2246
      %v2248 = vand.u32 %v2082, 4294901760
      %2249 = vmatmul.f32.gmra.mxu0 %v2248
      %v2250 = vpop.f32.mrf.mxu0
      %v2251 = vadd.f32 %v2146, %v2250
      %2252 = vdwg.mxu0
      %v2253 = vand.u32 %v2098, 4294901760
      %v2254 = vsub.f32 %v2098, %v2253
      %2255 = vmatpush.msra.mxu0 %v2254
      %v2256 = vand.u32 %v2097, 4294901760
      %v2257 = vsub.f32 %v2097, %v2256
      %2258 = vmatpush.msra.mxu0 %v2257
      %v2259 = vand.u32 %v2096, 4294901760
      %v2260 = vsub.f32 %v2096, %v2259
      %2261 = vmatpush.msra.mxu0 %v2260
      %v2262 = vand.u32 %v2095, 4294901760
      %v2263 = vsub.f32 %v2095, %v2262
      %2264 = vmatpush.msra.mxu0 %v2263
      %v2265 = vand.u32 %v2094, 4294901760
      %v2266 = vsub.f32 %v2094, %v2265
      %2267 = vmatpush.msra.mxu0 %v2266
      %v2268 = vand.u32 %v2093, 4294901760
      %v2269 = vsub.f32 %v2093, %v2268
      %2270 = vmatpush.msra.mxu0 %v2269
      %v2271 = vand.u32 %v2092, 4294901760
      %v2272 = vsub.f32 %v2092, %v2271
      %2273 = vmatpush.msra.mxu0 %v2272
      %v2274 = vand.u32 %v2091, 4294901760
      %v2275 = vsub.f32 %v2091, %v2274
      %2276 = vmatpush.msra.mxu0 %v2275
      %v2277 = vand.u32 %v2090, 4294901760
      %v2278 = vsub.f32 %v2090, %v2277
      %2279 = vmatpush.msra.mxu0 %v2278
      %v2280 = vand.u32 %v2089, 4294901760
      %v2281 = vsub.f32 %v2089, %v2280
      %2282 = vmatpush.msra.mxu0 %v2281
      %v2283 = vand.u32 %v2088, 4294901760
      %v2284 = vsub.f32 %v2088, %v2283
      %2285 = vmatpush.msra.mxu0 %v2284
      %v2286 = vand.u32 %v2087, 4294901760
      %v2287 = vsub.f32 %v2087, %v2286
      %2288 = vmatpush.msra.mxu0 %v2287
      %v2289 = vand.u32 %v2086, 4294901760
      %v2290 = vsub.f32 %v2086, %v2289
      %2291 = vmatpush.msra.mxu0 %v2290
      %v2292 = vand.u32 %v2085, 4294901760
      %v2293 = vsub.f32 %v2085, %v2292
      %2294 = vmatpush.msra.mxu0 %v2293
      %v2295 = vand.u32 %v2084, 4294901760
      %v2296 = vsub.f32 %v2084, %v2295
      %2297 = vmatpush.msra.mxu0 %v2296
      %v2298 = vand.u32 %v2083, 4294901760
      %v2299 = vsub.f32 %v2083, %v2298
      %2300 = vmatpush.msra.mxu0 %v2299
      %v2301 = vand.u32 %v2081, 4294901760
      %v2302 = vsub.f32 %v2081, %v2301
      %2303 = vmatmul.f32.gmra.mxu0 %v2302
      %v2304 = vpop.f32.mrf.mxu0
      %v2305 = vadd.f32 %v2247, %v2304
      %v2306 = vand.u32 %v2082, 4294901760
      %v2307 = vsub.f32 %v2082, %v2306
      %2308 = vmatmul.f32.gmra.mxu0 %v2307
      %v2309 = vpop.f32.mrf.mxu0
      %v2310 = vadd.f32 %v2251, %v2309
      %2311 = vdwg.mxu0
      %v2312 = vand.u32 %v2098, 4294901760
      %2313 = vmatpush.msra.mxu0 %v2312
      %v2314 = vand.u32 %v2097, 4294901760
      %2315 = vmatpush.msra.mxu0 %v2314
      %v2316 = vand.u32 %v2096, 4294901760
      %2317 = vmatpush.msra.mxu0 %v2316
      %v2318 = vand.u32 %v2095, 4294901760
      %2319 = vmatpush.msra.mxu0 %v2318
      %v2320 = vand.u32 %v2094, 4294901760
      %2321 = vmatpush.msra.mxu0 %v2320
      %v2322 = vand.u32 %v2093, 4294901760
      %2323 = vmatpush.msra.mxu0 %v2322
      %v2324 = vand.u32 %v2092, 4294901760
      %2325 = vmatpush.msra.mxu0 %v2324
      %v2326 = vand.u32 %v2091, 4294901760
      %2327 = vmatpush.msra.mxu0 %v2326
      %v2328 = vand.u32 %v2090, 4294901760
      %2329 = vmatpush.msra.mxu0 %v2328
      %v2330 = vand.u32 %v2089, 4294901760
      %2331 = vmatpush.msra.mxu0 %v2330
      %v2332 = vand.u32 %v2088, 4294901760
      %2333 = vmatpush.msra.mxu0 %v2332
      %v2334 = vand.u32 %v2087, 4294901760
      %2335 = vmatpush.msra.mxu0 %v2334
      %v2336 = vand.u32 %v2086, 4294901760
      %2337 = vmatpush.msra.mxu0 %v2336
      %v2338 = vand.u32 %v2085, 4294901760
      %2339 = vmatpush.msra.mxu0 %v2338
      %v2340 = vand.u32 %v2084, 4294901760
      %2341 = vmatpush.msra.mxu0 %v2340
      %v2342 = vand.u32 %v2083, 4294901760
      %2343 = vmatpush.msra.mxu0 %v2342
      %v2344 = vand.u32 %v2081, 4294901760
      %v2345 = vsub.f32 %v2081, %v2344
      %v2346 = vand.u32 %v2345, 4294901760
      %2347 = vmatmul.f32.gmra.mxu0 %v2346
      %v2348 = vpop.f32.mrf.mxu0
      %v2349 = vadd.f32 %v2305, %v2348
      %v2350 = vand.u32 %v2082, 4294901760
      %v2351 = vsub.f32 %v2082, %v2350
      %v2352 = vand.u32 %v2351, 4294901760
      %2353 = vmatmul.f32.gmra.mxu0 %v2352
      %v2354 = vpop.f32.mrf.mxu0
      %v2355 = vadd.f32 %v2310, %v2354
      %2356 = vdwg.mxu0
      %v2357 = vand.u32 %v2098, 4294901760
      %v2358 = vsub.f32 %v2098, %v2357
      %v2359 = vand.u32 %v2358, 4294901760
      %2360 = vmatpush.msra.mxu0 %v2359
      %v2361 = vand.u32 %v2097, 4294901760
      %v2362 = vsub.f32 %v2097, %v2361
      %v2363 = vand.u32 %v2362, 4294901760
      %2364 = vmatpush.msra.mxu0 %v2363
      %v2365 = vand.u32 %v2096, 4294901760
      %v2366 = vsub.f32 %v2096, %v2365
      %v2367 = vand.u32 %v2366, 4294901760
      %2368 = vmatpush.msra.mxu0 %v2367
      %v2369 = vand.u32 %v2095, 4294901760
      %v2370 = vsub.f32 %v2095, %v2369
      %v2371 = vand.u32 %v2370, 4294901760
      %2372 = vmatpush.msra.mxu0 %v2371
      %v2373 = vand.u32 %v2094, 4294901760
      %v2374 = vsub.f32 %v2094, %v2373
      %v2375 = vand.u32 %v2374, 4294901760
      %2376 = vmatpush.msra.mxu0 %v2375
      %v2377 = vand.u32 %v2093, 4294901760
      %v2378 = vsub.f32 %v2093, %v2377
      %v2379 = vand.u32 %v2378, 4294901760
      %2380 = vmatpush.msra.mxu0 %v2379
      %v2381 = vand.u32 %v2092, 4294901760
      %v2382 = vsub.f32 %v2092, %v2381
      %v2383 = vand.u32 %v2382, 4294901760
      %2384 = vmatpush.msra.mxu0 %v2383
      %v2385 = vand.u32 %v2091, 4294901760
      %v2386 = vsub.f32 %v2091, %v2385
      %v2387 = vand.u32 %v2386, 4294901760
      %2388 = vmatpush.msra.mxu0 %v2387
      %v2389 = vand.u32 %v2090, 4294901760
      %v2390 = vsub.f32 %v2090, %v2389
      %v2391 = vand.u32 %v2390, 4294901760
      %2392 = vmatpush.msra.mxu0 %v2391
      %v2393 = vand.u32 %v2089, 4294901760
      %v2394 = vsub.f32 %v2089, %v2393
      %v2395 = vand.u32 %v2394, 4294901760
      %2396 = vmatpush.msra.mxu0 %v2395
      %v2397 = vand.u32 %v2088, 4294901760
      %v2398 = vsub.f32 %v2088, %v2397
      %v2399 = vand.u32 %v2398, 4294901760
      %2400 = vmatpush.msra.mxu0 %v2399
      %v2401 = vand.u32 %v2087, 4294901760
      %v2402 = vsub.f32 %v2087, %v2401
      %v2403 = vand.u32 %v2402, 4294901760
      %2404 = vmatpush.msra.mxu0 %v2403
      %v2405 = vand.u32 %v2086, 4294901760
      %v2406 = vsub.f32 %v2086, %v2405
      %v2407 = vand.u32 %v2406, 4294901760
      %2408 = vmatpush.msra.mxu0 %v2407
      %v2409 = vand.u32 %v2085, 4294901760
      %v2410 = vsub.f32 %v2085, %v2409
      %v2411 = vand.u32 %v2410, 4294901760
      %2412 = vmatpush.msra.mxu0 %v2411
      %v2413 = vand.u32 %v2084, 4294901760
      %v2414 = vsub.f32 %v2084, %v2413
      %v2415 = vand.u32 %v2414, 4294901760
      %2416 = vmatpush.msra.mxu0 %v2415
      %v2417 = vand.u32 %v2083, 4294901760
      %v2418 = vsub.f32 %v2083, %v2417
      %v2419 = vand.u32 %v2418, 4294901760
      %2420 = vmatpush.msra.mxu0 %v2419
      %v2421 = vand.u32 %v2081, 4294901760
      %2422 = vmatmul.f32.gmra.mxu0 %v2421
      %v2423 = vpop.f32.mrf.mxu0
      %v2424 = vadd.f32 %v2349, %v2423
      %v2425 = vand.u32 %v2082, 4294901760
      %2426 = vmatmul.f32.gmra.mxu0 %v2425
      %v2427 = vpop.f32.mrf.mxu0
      %v2428 = vadd.f32 %v2355, %v2427
      %2429 = vdwg.mxu0
      %v2430 = vand.u32 %v2098, 4294901760
      %2431 = vmatpush.msra.mxu0 %v2430
      %v2432 = vand.u32 %v2097, 4294901760
      %2433 = vmatpush.msra.mxu0 %v2432
      %v2434 = vand.u32 %v2096, 4294901760
      %2435 = vmatpush.msra.mxu0 %v2434
      %v2436 = vand.u32 %v2095, 4294901760
      %2437 = vmatpush.msra.mxu0 %v2436
      %v2438 = vand.u32 %v2094, 4294901760
      %2439 = vmatpush.msra.mxu0 %v2438
      %v2440 = vand.u32 %v2093, 4294901760
      %2441 = vmatpush.msra.mxu0 %v2440
      %v2442 = vand.u32 %v2092, 4294901760
      %2443 = vmatpush.msra.mxu0 %v2442
      %v2444 = vand.u32 %v2091, 4294901760
      %2445 = vmatpush.msra.mxu0 %v2444
      %v2446 = vand.u32 %v2090, 4294901760
      %2447 = vmatpush.msra.mxu0 %v2446
      %v2448 = vand.u32 %v2089, 4294901760
      %2449 = vmatpush.msra.mxu0 %v2448
      %v2450 = vand.u32 %v2088, 4294901760
      %2451 = vmatpush.msra.mxu0 %v2450
      %v2452 = vand.u32 %v2087, 4294901760
      %2453 = vmatpush.msra.mxu0 %v2452
      %v2454 = vand.u32 %v2086, 4294901760
      %2455 = vmatpush.msra.mxu0 %v2454
      %v2456 = vand.u32 %v2085, 4294901760
      %2457 = vmatpush.msra.mxu0 %v2456
      %v2458 = vand.u32 %v2084, 4294901760
      %2459 = vmatpush.msra.mxu0 %v2458
      %v2460 = vand.u32 %v2083, 4294901760
      %2461 = vmatpush.msra.mxu0 %v2460
      %v2462 = vand.u32 %v2081, 4294901760
      %2463 = vmatmul.f32.gmra.mxu0 %v2462
      %v2464 = vpop.f32.mrf.mxu0
      %v2465 = vadd.f32 %v2424, %v2464
      %v2466 = vand.u32 %v2082, 4294901760
      %2467 = vmatmul.f32.gmra.mxu0 %v2466
      %v2468 = vpop.f32.mrf.mxu0
      %v2469 = vadd.f32 %v2428, %v2468
      %2470 = vdwg.mxu0
      %v2471 = vld [vmem:[%s4] sm:$0xff]
      %s2472 = scalar_lea.vmem %s3, 128
      %v2473 = vld [vmem:[%s2472] sm:$0xff]
      %v2474 = vld [vmem:[%s2472 + $0x8] sm:$0xff]
      %v2475 = vld [vmem:[%s2472 + $0x10] sm:$0xff]
      %v2476 = vld [vmem:[%s2472 + $0x18] sm:$0xff]
      %v2477 = vld [vmem:[%s2472 + $0x20] sm:$0xff]
      %v2478 = vld [vmem:[%s2472 + $0x28] sm:$0xff]
      %v2479 = vld [vmem:[%s2472 + $0x30] sm:$0xff]
      %v2480 = vld [vmem:[%s2472 + $0x38] sm:$0xff]
      %v2481 = vld [vmem:[%s2472 + $0x40] sm:$0xff]
      %v2482 = vld [vmem:[%s2472 + $0x48] sm:$0xff]
      %v2483 = vld [vmem:[%s2472 + $0x50] sm:$0xff]
      %v2484 = vld [vmem:[%s2472 + $0x58] sm:$0xff]
      %v2485 = vld [vmem:[%s2472 + $0x60] sm:$0xff]
      %v2486 = vld [vmem:[%s2472 + $0x68] sm:$0xff]
      %v2487 = vld [vmem:[%s2472 + $0x70] sm:$0xff]
      %v2488 = vld [vmem:[%s2472 + $0x78] sm:$0xff]
      %v2489 = vand.u32 %v2488, 4294901760
      %2490 = vmatpush.msra.mxu0 %v2489
      %v2491 = vand.u32 %v2487, 4294901760
      %2492 = vmatpush.msra.mxu0 %v2491
      %v2493 = vand.u32 %v2486, 4294901760
      %2494 = vmatpush.msra.mxu0 %v2493
      %v2495 = vand.u32 %v2485, 4294901760
      %2496 = vmatpush.msra.mxu0 %v2495
      %v2497 = vand.u32 %v2484, 4294901760
      %2498 = vmatpush.msra.mxu0 %v2497
      %v2499 = vand.u32 %v2483, 4294901760
      %2500 = vmatpush.msra.mxu0 %v2499
      %v2501 = vand.u32 %v2482, 4294901760
      %2502 = vmatpush.msra.mxu0 %v2501
      %v2503 = vand.u32 %v2481, 4294901760
      %2504 = vmatpush.msra.mxu0 %v2503
      %v2505 = vand.u32 %v2480, 4294901760
      %2506 = vmatpush.msra.mxu0 %v2505
      %v2507 = vand.u32 %v2479, 4294901760
      %2508 = vmatpush.msra.mxu0 %v2507
      %v2509 = vand.u32 %v2478, 4294901760
      %2510 = vmatpush.msra.mxu0 %v2509
      %v2511 = vand.u32 %v2477, 4294901760
      %2512 = vmatpush.msra.mxu0 %v2511
      %v2513 = vand.u32 %v2476, 4294901760
      %2514 = vmatpush.msra.mxu0 %v2513
      %v2515 = vand.u32 %v2475, 4294901760
      %2516 = vmatpush.msra.mxu0 %v2515
      %v2517 = vand.u32 %v2474, 4294901760
      %2518 = vmatpush.msra.mxu0 %v2517
      %v2519 = vand.u32 %v2473, 4294901760
      %2520 = vmatpush.msra.mxu0 %v2519
      %v2521 = vand.u32 %v2081, 4294901760
      %v2522 = vsub.f32 %v2081, %v2521
      %v2523 = vand.u32 %v2522, 4294901760
      %v2524 = vsub.f32 %v2522, %v2523
      %v2525 = vand.u32 %v2524, 4294901760
      %2526 = vmatmul.f32.gmra.mxu0 %v2525
      %v2527 = vpop.f32.mrf.mxu0
      %v2528 = vadd.f32 0.0, %v2527
      %v2529 = vand.u32 %v2082, 4294901760
      %v2530 = vsub.f32 %v2082, %v2529
      %v2531 = vand.u32 %v2530, 4294901760
      %v2532 = vsub.f32 %v2530, %v2531
      %v2533 = vand.u32 %v2532, 4294901760
      %2534 = vmatmul.f32.gmra.mxu0 %v2533
      %v2535 = vpop.f32.mrf.mxu0
      %v2536 = vadd.f32 0.0, %v2535
      %2537 = vdwg.mxu0
      %v2538 = vand.u32 %v2488, 4294901760
      %v2539 = vsub.f32 %v2488, %v2538
      %v2540 = vand.u32 %v2539, 4294901760
      %v2541 = vsub.f32 %v2539, %v2540
      %v2542 = vand.u32 %v2541, 4294901760
      %2543 = vmatpush.msra.mxu0 %v2542
      %v2544 = vand.u32 %v2487, 4294901760
      %v2545 = vsub.f32 %v2487, %v2544
      %v2546 = vand.u32 %v2545, 4294901760
      %v2547 = vsub.f32 %v2545, %v2546
      %v2548 = vand.u32 %v2547, 4294901760
      %2549 = vmatpush.msra.mxu0 %v2548
      %v2550 = vand.u32 %v2486, 4294901760
      %v2551 = vsub.f32 %v2486, %v2550
      %v2552 = vand.u32 %v2551, 4294901760
      %v2553 = vsub.f32 %v2551, %v2552
      %v2554 = vand.u32 %v2553, 4294901760
      %2555 = vmatpush.msra.mxu0 %v2554
      %v2556 = vand.u32 %v2485, 4294901760
      %v2557 = vsub.f32 %v2485, %v2556
      %v2558 = vand.u32 %v2557, 4294901760
      %v2559 = vsub.f32 %v2557, %v2558
      %v2560 = vand.u32 %v2559, 4294901760
      %2561 = vmatpush.msra.mxu0 %v2560
      %v2562 = vand.u32 %v2484, 4294901760
      %v2563 = vsub.f32 %v2484, %v2562
      %v2564 = vand.u32 %v2563, 4294901760
      %v2565 = vsub.f32 %v2563, %v2564
      %v2566 = vand.u32 %v2565, 4294901760
      %2567 = vmatpush.msra.mxu0 %v2566
      %v2568 = vand.u32 %v2483, 4294901760
      %v2569 = vsub.f32 %v2483, %v2568
      %v2570 = vand.u32 %v2569, 4294901760
      %v2571 = vsub.f32 %v2569, %v2570
      %v2572 = vand.u32 %v2571, 4294901760
      %2573 = vmatpush.msra.mxu0 %v2572
      %v2574 = vand.u32 %v2482, 4294901760
      %v2575 = vsub.f32 %v2482, %v2574
      %v2576 = vand.u32 %v2575, 4294901760
      %v2577 = vsub.f32 %v2575, %v2576
      %v2578 = vand.u32 %v2577, 4294901760
      %2579 = vmatpush.msra.mxu0 %v2578
      %v2580 = vand.u32 %v2481, 4294901760
      %v2581 = vsub.f32 %v2481, %v2580
      %v2582 = vand.u32 %v2581, 4294901760
      %v2583 = vsub.f32 %v2581, %v2582
      %v2584 = vand.u32 %v2583, 4294901760
      %2585 = vmatpush.msra.mxu0 %v2584
      %v2586 = vand.u32 %v2480, 4294901760
      %v2587 = vsub.f32 %v2480, %v2586
      %v2588 = vand.u32 %v2587, 4294901760
      %v2589 = vsub.f32 %v2587, %v2588
      %v2590 = vand.u32 %v2589, 4294901760
      %2591 = vmatpush.msra.mxu0 %v2590
      %v2592 = vand.u32 %v2479, 4294901760
      %v2593 = vsub.f32 %v2479, %v2592
      %v2594 = vand.u32 %v2593, 4294901760
      %v2595 = vsub.f32 %v2593, %v2594
      %v2596 = vand.u32 %v2595, 4294901760
      %2597 = vmatpush.msra.mxu0 %v2596
      %v2598 = vand.u32 %v2478, 4294901760
      %v2599 = vsub.f32 %v2478, %v2598
      %v2600 = vand.u32 %v2599, 4294901760
      %v2601 = vsub.f32 %v2599, %v2600
      %v2602 = vand.u32 %v2601, 4294901760
      %2603 = vmatpush.msra.mxu0 %v2602
      %v2604 = vand.u32 %v2477, 4294901760
      %v2605 = vsub.f32 %v2477, %v2604
      %v2606 = vand.u32 %v2605, 4294901760
      %v2607 = vsub.f32 %v2605, %v2606
      %v2608 = vand.u32 %v2607, 4294901760
      %2609 = vmatpush.msra.mxu0 %v2608
      %v2610 = vand.u32 %v2476, 4294901760
      %v2611 = vsub.f32 %v2476, %v2610
      %v2612 = vand.u32 %v2611, 4294901760
      %v2613 = vsub.f32 %v2611, %v2612
      %v2614 = vand.u32 %v2613, 4294901760
      %2615 = vmatpush.msra.mxu0 %v2614
      %v2616 = vand.u32 %v2475, 4294901760
      %v2617 = vsub.f32 %v2475, %v2616
      %v2618 = vand.u32 %v2617, 4294901760
      %v2619 = vsub.f32 %v2617, %v2618
      %v2620 = vand.u32 %v2619, 4294901760
      %2621 = vmatpush.msra.mxu0 %v2620
      %v2622 = vand.u32 %v2474, 4294901760
      %v2623 = vsub.f32 %v2474, %v2622
      %v2624 = vand.u32 %v2623, 4294901760
      %v2625 = vsub.f32 %v2623, %v2624
      %v2626 = vand.u32 %v2625, 4294901760
      %2627 = vmatpush.msra.mxu0 %v2626
      %v2628 = vand.u32 %v2473, 4294901760
      %v2629 = vsub.f32 %v2473, %v2628
      %v2630 = vand.u32 %v2629, 4294901760
      %v2631 = vsub.f32 %v2629, %v2630
      %v2632 = vand.u32 %v2631, 4294901760
      %2633 = vmatpush.msra.mxu0 %v2632
      %v2634 = vand.u32 %v2081, 4294901760
      %2635 = vmatmul.f32.gmra.mxu0 %v2634
      %v2636 = vpop.f32.mrf.mxu0
      %v2637 = vadd.f32 %v2528, %v2636
      %v2638 = vand.u32 %v2082, 4294901760
      %2639 = vmatmul.f32.gmra.mxu0 %v2638
      %v2640 = vpop.f32.mrf.mxu0
      %v2641 = vadd.f32 %v2536, %v2640
      %2642 = vdwg.mxu0
      %v2643 = vand.u32 %v2488, 4294901760
      %v2644 = vsub.f32 %v2488, %v2643
      %2645 = vmatpush.msra.mxu0 %v2644
      %v2646 = vand.u32 %v2487, 4294901760
      %v2647 = vsub.f32 %v2487, %v2646
      %2648 = vmatpush.msra.mxu0 %v2647
      %v2649 = vand.u32 %v2486, 4294901760
      %v2650 = vsub.f32 %v2486, %v2649
      %2651 = vmatpush.msra.mxu0 %v2650
      %v2652 = vand.u32 %v2485, 4294901760
      %v2653 = vsub.f32 %v2485, %v2652
      %2654 = vmatpush.msra.mxu0 %v2653
      %v2655 = vand.u32 %v2484, 4294901760
      %v2656 = vsub.f32 %v2484, %v2655
      %2657 = vmatpush.msra.mxu0 %v2656
      %v2658 = vand.u32 %v2483, 4294901760
      %v2659 = vsub.f32 %v2483, %v2658
      %2660 = vmatpush.msra.mxu0 %v2659
      %v2661 = vand.u32 %v2482, 4294901760
      %v2662 = vsub.f32 %v2482, %v2661
      %2663 = vmatpush.msra.mxu0 %v2662
      %v2664 = vand.u32 %v2481, 4294901760
      %v2665 = vsub.f32 %v2481, %v2664
      %2666 = vmatpush.msra.mxu0 %v2665
      %v2667 = vand.u32 %v2480, 4294901760
      %v2668 = vsub.f32 %v2480, %v2667
      %2669 = vmatpush.msra.mxu0 %v2668
      %v2670 = vand.u32 %v2479, 4294901760
      %v2671 = vsub.f32 %v2479, %v2670
      %2672 = vmatpush.msra.mxu0 %v2671
      %v2673 = vand.u32 %v2478, 4294901760
      %v2674 = vsub.f32 %v2478, %v2673
      %2675 = vmatpush.msra.mxu0 %v2674
      %v2676 = vand.u32 %v2477, 4294901760
      %v2677 = vsub.f32 %v2477, %v2676
      %2678 = vmatpush.msra.mxu0 %v2677
      %v2679 = vand.u32 %v2476, 4294901760
      %v2680 = vsub.f32 %v2476, %v2679
      %2681 = vmatpush.msra.mxu0 %v2680
      %v2682 = vand.u32 %v2475, 4294901760
      %v2683 = vsub.f32 %v2475, %v2682
      %2684 = vmatpush.msra.mxu0 %v2683
      %v2685 = vand.u32 %v2474, 4294901760
      %v2686 = vsub.f32 %v2474, %v2685
      %2687 = vmatpush.msra.mxu0 %v2686
      %v2688 = vand.u32 %v2473, 4294901760
      %v2689 = vsub.f32 %v2473, %v2688
      %2690 = vmatpush.msra.mxu0 %v2689
      %v2691 = vand.u32 %v2081, 4294901760
      %v2692 = vsub.f32 %v2081, %v2691
      %2693 = vmatmul.f32.gmra.mxu0 %v2692
      %v2694 = vpop.f32.mrf.mxu0
      %v2695 = vadd.f32 %v2637, %v2694
      %v2696 = vand.u32 %v2082, 4294901760
      %v2697 = vsub.f32 %v2082, %v2696
      %2698 = vmatmul.f32.gmra.mxu0 %v2697
      %v2699 = vpop.f32.mrf.mxu0
      %v2700 = vadd.f32 %v2641, %v2699
      %2701 = vdwg.mxu0
      %v2702 = vand.u32 %v2488, 4294901760
      %2703 = vmatpush.msra.mxu0 %v2702
      %v2704 = vand.u32 %v2487, 4294901760
      %2705 = vmatpush.msra.mxu0 %v2704
      %v2706 = vand.u32 %v2486, 4294901760
      %2707 = vmatpush.msra.mxu0 %v2706
      %v2708 = vand.u32 %v2485, 4294901760
      %2709 = vmatpush.msra.mxu0 %v2708
      %v2710 = vand.u32 %v2484, 4294901760
      %2711 = vmatpush.msra.mxu0 %v2710
      %v2712 = vand.u32 %v2483, 4294901760
      %2713 = vmatpush.msra.mxu0 %v2712
      %v2714 = vand.u32 %v2482, 4294901760
      %2715 = vmatpush.msra.mxu0 %v2714
      %v2716 = vand.u32 %v2481, 4294901760
      %2717 = vmatpush.msra.mxu0 %v2716
      %v2718 = vand.u32 %v2480, 4294901760
      %2719 = vmatpush.msra.mxu0 %v2718
      %v2720 = vand.u32 %v2479, 4294901760
      %2721 = vmatpush.msra.mxu0 %v2720
      %v2722 = vand.u32 %v2478, 4294901760
      %2723 = vmatpush.msra.mxu0 %v2722
      %v2724 = vand.u32 %v2477, 4294901760
      %2725 = vmatpush.msra.mxu0 %v2724
      %v2726 = vand.u32 %v2476, 4294901760
      %2727 = vmatpush.msra.mxu0 %v2726
      %v2728 = vand.u32 %v2475, 4294901760
      %2729 = vmatpush.msra.mxu0 %v2728
      %v2730 = vand.u32 %v2474, 4294901760
      %2731 = vmatpush.msra.mxu0 %v2730
      %v2732 = vand.u32 %v2473, 4294901760
      %2733 = vmatpush.msra.mxu0 %v2732
      %v2734 = vand.u32 %v2081, 4294901760
      %v2735 = vsub.f32 %v2081, %v2734
      %v2736 = vand.u32 %v2735, 4294901760
      %2737 = vmatmul.f32.gmra.mxu0 %v2736
      %v2738 = vpop.f32.mrf.mxu0
      %v2739 = vadd.f32 %v2695, %v2738
      %v2740 = vand.u32 %v2082, 4294901760
      %v2741 = vsub.f32 %v2082, %v2740
      %v2742 = vand.u32 %v2741, 4294901760
      %2743 = vmatmul.f32.gmra.mxu0 %v2742
      %v2744 = vpop.f32.mrf.mxu0
      %v2745 = vadd.f32 %v2700, %v2744
      %2746 = vdwg.mxu0
      %v2747 = vand.u32 %v2488, 4294901760
      %v2748 = vsub.f32 %v2488, %v2747
      %v2749 = vand.u32 %v2748, 4294901760
      %2750 = vmatpush.msra.mxu0 %v2749
      %v2751 = vand.u32 %v2487, 4294901760
      %v2752 = vsub.f32 %v2487, %v2751
      %v2753 = vand.u32 %v2752, 4294901760
      %2754 = vmatpush.msra.mxu0 %v2753
      %v2755 = vand.u32 %v2486, 4294901760
      %v2756 = vsub.f32 %v2486, %v2755
      %v2757 = vand.u32 %v2756, 4294901760
      %2758 = vmatpush.msra.mxu0 %v2757
      %v2759 = vand.u32 %v2485, 4294901760
      %v2760 = vsub.f32 %v2485, %v2759
      %v2761 = vand.u32 %v2760, 4294901760
      %2762 = vmatpush.msra.mxu0 %v2761
      %v2763 = vand.u32 %v2484, 4294901760
      %v2764 = vsub.f32 %v2484, %v2763
      %v2765 = vand.u32 %v2764, 4294901760
      %2766 = vmatpush.msra.mxu0 %v2765
      %v2767 = vand.u32 %v2483, 4294901760
      %v2768 = vsub.f32 %v2483, %v2767
      %v2769 = vand.u32 %v2768, 4294901760
      %2770 = vmatpush.msra.mxu0 %v2769
      %v2771 = vand.u32 %v2482, 4294901760
      %v2772 = vsub.f32 %v2482, %v2771
      %v2773 = vand.u32 %v2772, 4294901760
      %2774 = vmatpush.msra.mxu0 %v2773
      %v2775 = vand.u32 %v2481, 4294901760
      %v2776 = vsub.f32 %v2481, %v2775
      %v2777 = vand.u32 %v2776, 4294901760
      %2778 = vmatpush.msra.mxu0 %v2777
      %v2779 = vand.u32 %v2480, 4294901760
      %v2780 = vsub.f32 %v2480, %v2779
      %v2781 = vand.u32 %v2780, 4294901760
      %2782 = vmatpush.msra.mxu0 %v2781
      %v2783 = vand.u32 %v2479, 4294901760
      %v2784 = vsub.f32 %v2479, %v2783
      %v2785 = vand.u32 %v2784, 4294901760
      %2786 = vmatpush.msra.mxu0 %v2785
      %v2787 = vand.u32 %v2478, 4294901760
      %v2788 = vsub.f32 %v2478, %v2787
      %v2789 = vand.u32 %v2788, 4294901760
      %2790 = vmatpush.msra.mxu0 %v2789
      %v2791 = vand.u32 %v2477, 4294901760
      %v2792 = vsub.f32 %v2477, %v2791
      %v2793 = vand.u32 %v2792, 4294901760
      %2794 = vmatpush.msra.mxu0 %v2793
      %v2795 = vand.u32 %v2476, 4294901760
      %v2796 = vsub.f32 %v2476, %v2795
      %v2797 = vand.u32 %v2796, 4294901760
      %2798 = vmatpush.msra.mxu0 %v2797
      %v2799 = vand.u32 %v2475, 4294901760
      %v2800 = vsub.f32 %v2475, %v2799
      %v2801 = vand.u32 %v2800, 4294901760
      %2802 = vmatpush.msra.mxu0 %v2801
      %v2803 = vand.u32 %v2474, 4294901760
      %v2804 = vsub.f32 %v2474, %v2803
      %v2805 = vand.u32 %v2804, 4294901760
      %2806 = vmatpush.msra.mxu0 %v2805
      %v2807 = vand.u32 %v2473, 4294901760
      %v2808 = vsub.f32 %v2473, %v2807
      %v2809 = vand.u32 %v2808, 4294901760
      %2810 = vmatpush.msra.mxu0 %v2809
      %v2811 = vand.u32 %v2081, 4294901760
      %2812 = vmatmul.f32.gmra.mxu0 %v2811
      %v2813 = vpop.f32.mrf.mxu0
      %v2814 = vadd.f32 %v2739, %v2813
      %v2815 = vand.u32 %v2082, 4294901760
      %2816 = vmatmul.f32.gmra.mxu0 %v2815
      %v2817 = vpop.f32.mrf.mxu0
      %v2818 = vadd.f32 %v2745, %v2817
      %2819 = vdwg.mxu0
      %v2820 = vand.u32 %v2488, 4294901760
      %2821 = vmatpush.msra.mxu0 %v2820
      %v2822 = vand.u32 %v2487, 4294901760
      %2823 = vmatpush.msra.mxu0 %v2822
      %v2824 = vand.u32 %v2486, 4294901760
      %2825 = vmatpush.msra.mxu0 %v2824
      %v2826 = vand.u32 %v2485, 4294901760
      %2827 = vmatpush.msra.mxu0 %v2826
      %v2828 = vand.u32 %v2484, 4294901760
      %2829 = vmatpush.msra.mxu0 %v2828
      %v2830 = vand.u32 %v2483, 4294901760
      %2831 = vmatpush.msra.mxu0 %v2830
      %v2832 = vand.u32 %v2482, 4294901760
      %2833 = vmatpush.msra.mxu0 %v2832
      %v2834 = vand.u32 %v2481, 4294901760
      %2835 = vmatpush.msra.mxu0 %v2834
      %v2836 = vand.u32 %v2480, 4294901760
      %2837 = vmatpush.msra.mxu0 %v2836
      %v2838 = vand.u32 %v2479, 4294901760
      %2839 = vmatpush.msra.mxu0 %v2838
      %v2840 = vand.u32 %v2478, 4294901760
      %2841 = vmatpush.msra.mxu0 %v2840
      %v2842 = vand.u32 %v2477, 4294901760
      %2843 = vmatpush.msra.mxu0 %v2842
      %v2844 = vand.u32 %v2476, 4294901760
      %2845 = vmatpush.msra.mxu0 %v2844
      %v2846 = vand.u32 %v2475, 4294901760
      %2847 = vmatpush.msra.mxu0 %v2846
      %v2848 = vand.u32 %v2474, 4294901760
      %2849 = vmatpush.msra.mxu0 %v2848
      %v2850 = vand.u32 %v2473, 4294901760
      %2851 = vmatpush.msra.mxu0 %v2850
      %v2852 = vand.u32 %v2081, 4294901760
      %2853 = vmatmul.f32.gmra.mxu0 %v2852
      %v2854 = vpop.f32.mrf.mxu0
      %v2855 = vadd.f32 %v2814, %v2854
      %v2856 = vand.u32 %v2082, 4294901760
      %2857 = vmatmul.f32.gmra.mxu0 %v2856
      %v2858 = vpop.f32.mrf.mxu0
      %v2859 = vadd.f32 %v2818, %v2858
      %2860 = vdwg.mxu0
      %s2861 = scalar_lea.vmem %s4, 8
      %v2862 = vld [vmem:[%s2861] sm:$0xff]
      %vm2863 = vcmask 130048
      %v2865 = vsel %vm2863, %v2862, 0
      %2867 = vmatpush.msra.mxu0 0.0
      %2868 = vmatpush.msra.mxu0 0.0
      %2869 = vmatpush.msra.mxu0 0.0
      %2870 = vmatpush.msra.mxu0 0.0
      %2871 = vmatpush.msra.mxu0 0.0
      %2872 = vmatpush.msra.mxu0 0.0
      %2873 = vmatpush.msra.mxu0 0.0
      %2874 = vmatpush.msra.mxu0 0.0
      %2875 = vmatpush.msra.mxu0 0.0
      %2876 = vmatpush.msra.mxu0 0.0
      %2877 = vmatpush.msra.mxu0 0.0
      %2878 = vmatpush.msra.mxu0 0.0
      %2879 = vmatpush.msra.mxu0 0.0
      %2880 = vmatpush.msra.mxu0 0.0
      %v2881 = vand.u32 %v2859, 4294901760
      %2882 = vmatpush.msra.mxu0 %v2881
      %v2883 = vand.u32 %v2855, 4294901760
      %2884 = vmatpush.msra.mxu0 %v2883
      %v2885 = vand.u32 %v2865, 4294901760
      %v2886 = vsub.f32 %v2865, %v2885
      %v2887 = vand.u32 %v2886, 4294901760
      %v2888 = vsub.f32 %v2886, %v2887
      %v2889 = vand.u32 %v2888, 4294901760
      %2890 = vmatmul.f32.gmra.mxu0 %v2889
      %v2891 = vpop.f32.mrf.mxu0
      %v2892 = vadd.f32 0.0, %v2891
      %2893 = vdwg.mxu0
      %2894 = vmatpush.msra.mxu0 0.0
      %2895 = vmatpush.msra.mxu0 0.0
      %2896 = vmatpush.msra.mxu0 0.0
      %2897 = vmatpush.msra.mxu0 0.0
      %2898 = vmatpush.msra.mxu0 0.0
      %2899 = vmatpush.msra.mxu0 0.0
      %2900 = vmatpush.msra.mxu0 0.0
      %2901 = vmatpush.msra.mxu0 0.0
      %2902 = vmatpush.msra.mxu0 0.0
      %2903 = vmatpush.msra.mxu0 0.0
      %2904 = vmatpush.msra.mxu0 0.0
      %2905 = vmatpush.msra.mxu0 0.0
      %2906 = vmatpush.msra.mxu0 0.0
      %2907 = vmatpush.msra.mxu0 0.0
      %v2908 = vand.u32 %v2859, 4294901760
      %v2909 = vsub.f32 %v2859, %v2908
      %v2910 = vand.u32 %v2909, 4294901760
      %v2911 = vsub.f32 %v2909, %v2910
      %v2912 = vand.u32 %v2911, 4294901760
      %2913 = vmatpush.msra.mxu0 %v2912
      %v2914 = vand.u32 %v2855, 4294901760
      %v2915 = vsub.f32 %v2855, %v2914
      %v2916 = vand.u32 %v2915, 4294901760
      %v2917 = vsub.f32 %v2915, %v2916
      %v2918 = vand.u32 %v2917, 4294901760
      %2919 = vmatpush.msra.mxu0 %v2918
      %v2920 = vand.u32 %v2865, 4294901760
      %2921 = vmatmul.f32.gmra.mxu0 %v2920
      %v2922 = vpop.f32.mrf.mxu0
      %v2923 = vadd.f32 %v2892, %v2922
      %2924 = vdwg.mxu0
      %2925 = vmatpush.msra.mxu0 0.0
      %2926 = vmatpush.msra.mxu0 0.0
      %2927 = vmatpush.msra.mxu0 0.0
      %2928 = vmatpush.msra.mxu0 0.0
      %2929 = vmatpush.msra.mxu0 0.0
      %2930 = vmatpush.msra.mxu0 0.0
      %2931 = vmatpush.msra.mxu0 0.0
      %2932 = vmatpush.msra.mxu0 0.0
      %2933 = vmatpush.msra.mxu0 0.0
      %2934 = vmatpush.msra.mxu0 0.0
      %2935 = vmatpush.msra.mxu0 0.0
      %2936 = vmatpush.msra.mxu0 0.0
      %2937 = vmatpush.msra.mxu0 0.0
      %2938 = vmatpush.msra.mxu0 0.0
      %v2939 = vand.u32 %v2859, 4294901760
      %v2940 = vsub.f32 %v2859, %v2939
      %2941 = vmatpush.msra.mxu0 %v2940
      %v2942 = vand.u32 %v2855, 4294901760
      %v2943 = vsub.f32 %v2855, %v2942
      %2944 = vmatpush.msra.mxu0 %v2943
      %v2945 = vand.u32 %v2865, 4294901760
      %v2946 = vsub.f32 %v2865, %v2945
      %2947 = vmatmul.f32.gmra.mxu0 %v2946
      %v2948 = vpop.f32.mrf.mxu0
      %v2949 = vadd.f32 %v2923, %v2948
      %2950 = vdwg.mxu0
      %2951 = vmatpush.msra.mxu0 0.0
      %2952 = vmatpush.msra.mxu0 0.0
      %2953 = vmatpush.msra.mxu0 0.0
      %2954 = vmatpush.msra.mxu0 0.0
      %2955 = vmatpush.msra.mxu0 0.0
      %2956 = vmatpush.msra.mxu0 0.0
      %2957 = vmatpush.msra.mxu0 0.0
      %2958 = vmatpush.msra.mxu0 0.0
      %2959 = vmatpush.msra.mxu0 0.0
      %2960 = vmatpush.msra.mxu0 0.0
      %2961 = vmatpush.msra.mxu0 0.0
      %2962 = vmatpush.msra.mxu0 0.0
      %2963 = vmatpush.msra.mxu0 0.0
      %2964 = vmatpush.msra.mxu0 0.0
      %v2965 = vand.u32 %v2859, 4294901760
      %2966 = vmatpush.msra.mxu0 %v2965
      %v2967 = vand.u32 %v2855, 4294901760
      %2968 = vmatpush.msra.mxu0 %v2967
      %v2969 = vand.u32 %v2865, 4294901760
      %v2970 = vsub.f32 %v2865, %v2969
      %v2971 = vand.u32 %v2970, 4294901760
      %2972 = vmatmul.f32.gmra.mxu0 %v2971
      %v2973 = vpop.f32.mrf.mxu0
      %v2974 = vadd.f32 %v2949, %v2973
      %2975 = vdwg.mxu0
      %2976 = vmatpush.msra.mxu0 0.0
      %2977 = vmatpush.msra.mxu0 0.0
      %2978 = vmatpush.msra.mxu0 0.0
      %2979 = vmatpush.msra.mxu0 0.0
      %2980 = vmatpush.msra.mxu0 0.0
      %2981 = vmatpush.msra.mxu0 0.0
      %2982 = vmatpush.msra.mxu0 0.0
      %2983 = vmatpush.msra.mxu0 0.0
      %2984 = vmatpush.msra.mxu0 0.0
      %2985 = vmatpush.msra.mxu0 0.0
      %2986 = vmatpush.msra.mxu0 0.0
      %2987 = vmatpush.msra.mxu0 0.0
      %2988 = vmatpush.msra.mxu0 0.0
      %2989 = vmatpush.msra.mxu0 0.0
      %v2990 = vand.u32 %v2859, 4294901760
      %v2991 = vsub.f32 %v2859, %v2990
      %v2992 = vand.u32 %v2991, 4294901760
      %2993 = vmatpush.msra.mxu0 %v2992
      %v2994 = vand.u32 %v2855, 4294901760
      %v2995 = vsub.f32 %v2855, %v2994
      %v2996 = vand.u32 %v2995, 4294901760
      %2997 = vmatpush.msra.mxu0 %v2996
      %v2998 = vand.u32 %v2865, 4294901760
      %2999 = vmatmul.f32.gmra.mxu0 %v2998
      %v3000 = vpop.f32.mrf.mxu0
      %v3001 = vadd.f32 %v2974, %v3000
      %3002 = vdwg.mxu0
      %3003 = vmatpush.msra.mxu0 0.0
      %3004 = vmatpush.msra.mxu0 0.0
      %3005 = vmatpush.msra.mxu0 0.0
      %3006 = vmatpush.msra.mxu0 0.0
      %3007 = vmatpush.msra.mxu0 0.0
      %3008 = vmatpush.msra.mxu0 0.0
      %3009 = vmatpush.msra.mxu0 0.0
      %3010 = vmatpush.msra.mxu0 0.0
      %3011 = vmatpush.msra.mxu0 0.0
      %3012 = vmatpush.msra.mxu0 0.0
      %3013 = vmatpush.msra.mxu0 0.0
      %3014 = vmatpush.msra.mxu0 0.0
      %3015 = vmatpush.msra.mxu0 0.0
      %3016 = vmatpush.msra.mxu0 0.0
      %v3017 = vand.u32 %v2859, 4294901760
      %3018 = vmatpush.msra.mxu0 %v3017
      %v3019 = vand.u32 %v2855, 4294901760
      %3020 = vmatpush.msra.mxu0 %v3019
      %v3021 = vand.u32 %v2865, 4294901760
      %3022 = vmatmul.f32.gmra.mxu0 %v3021
      %v3023 = vpop.f32.mrf.mxu0
      %v3024 = vadd.f32 %v3001, %v3023
      %3025 = vdwg.mxu0
      %v3027 = vsel %vm2863, %v2471, 0
      %3029 = vmatpush.msra.mxu0 0.0
      %3030 = vmatpush.msra.mxu0 0.0
      %3031 = vmatpush.msra.mxu0 0.0
      %3032 = vmatpush.msra.mxu0 0.0
      %3033 = vmatpush.msra.mxu0 0.0
      %3034 = vmatpush.msra.mxu0 0.0
      %3035 = vmatpush.msra.mxu0 0.0
      %3036 = vmatpush.msra.mxu0 0.0
      %3037 = vmatpush.msra.mxu0 0.0
      %3038 = vmatpush.msra.mxu0 0.0
      %3039 = vmatpush.msra.mxu0 0.0
      %3040 = vmatpush.msra.mxu0 0.0
      %3041 = vmatpush.msra.mxu0 0.0
      %3042 = vmatpush.msra.mxu0 0.0
      %v3043 = vand.u32 %v2469, 4294901760
      %3044 = vmatpush.msra.mxu0 %v3043
      %v3045 = vand.u32 %v2465, 4294901760
      %3046 = vmatpush.msra.mxu0 %v3045
      %v3047 = vand.u32 %v3027, 4294901760
      %v3048 = vsub.f32 %v3027, %v3047
      %v3049 = vand.u32 %v3048, 4294901760
      %v3050 = vsub.f32 %v3048, %v3049
      %v3051 = vand.u32 %v3050, 4294901760
      %3052 = vmatmul.f32.gmra.mxu0 %v3051
      %v3053 = vpop.f32.mrf.mxu0
      %v3054 = vadd.f32 %v3024, %v3053
      %3055 = vdwg.mxu0
      %3056 = vmatpush.msra.mxu0 0.0
      %3057 = vmatpush.msra.mxu0 0.0
      %3058 = vmatpush.msra.mxu0 0.0
      %3059 = vmatpush.msra.mxu0 0.0
      %3060 = vmatpush.msra.mxu0 0.0
      %3061 = vmatpush.msra.mxu0 0.0
      %3062 = vmatpush.msra.mxu0 0.0
      %3063 = vmatpush.msra.mxu0 0.0
      %3064 = vmatpush.msra.mxu0 0.0
      %3065 = vmatpush.msra.mxu0 0.0
      %3066 = vmatpush.msra.mxu0 0.0
      %3067 = vmatpush.msra.mxu0 0.0
      %3068 = vmatpush.msra.mxu0 0.0
      %3069 = vmatpush.msra.mxu0 0.0
      %v3070 = vand.u32 %v2469, 4294901760
      %v3071 = vsub.f32 %v2469, %v3070
      %v3072 = vand.u32 %v3071, 4294901760
      %v3073 = vsub.f32 %v3071, %v3072
      %v3074 = vand.u32 %v3073, 4294901760
      %3075 = vmatpush.msra.mxu0 %v3074
      %v3076 = vand.u32 %v2465, 4294901760
      %v3077 = vsub.f32 %v2465, %v3076
      %v3078 = vand.u32 %v3077, 4294901760
      %v3079 = vsub.f32 %v3077, %v3078
      %v3080 = vand.u32 %v3079, 4294901760
      %3081 = vmatpush.msra.mxu0 %v3080
      %v3082 = vand.u32 %v3027, 4294901760
      %3083 = vmatmul.f32.gmra.mxu0 %v3082
      %v3084 = vpop.f32.mrf.mxu0
      %v3085 = vadd.f32 %v3054, %v3084
      %3086 = vdwg.mxu0
      %3087 = vmatpush.msra.mxu0 0.0
      %3088 = vmatpush.msra.mxu0 0.0
      %3089 = vmatpush.msra.mxu0 0.0
      %3090 = vmatpush.msra.mxu0 0.0
      %3091 = vmatpush.msra.mxu0 0.0
      %3092 = vmatpush.msra.mxu0 0.0
      %3093 = vmatpush.msra.mxu0 0.0
      %3094 = vmatpush.msra.mxu0 0.0
      %3095 = vmatpush.msra.mxu0 0.0
      %3096 = vmatpush.msra.mxu0 0.0
      %3097 = vmatpush.msra.mxu0 0.0
      %3098 = vmatpush.msra.mxu0 0.0
      %3099 = vmatpush.msra.mxu0 0.0
      %3100 = vmatpush.msra.mxu0 0.0
      %v3101 = vand.u32 %v2469, 4294901760
      %v3102 = vsub.f32 %v2469, %v3101
      %3103 = vmatpush.msra.mxu0 %v3102
      %v3104 = vand.u32 %v2465, 4294901760
      %v3105 = vsub.f32 %v2465, %v3104
      %3106 = vmatpush.msra.mxu0 %v3105
      %v3107 = vand.u32 %v3027, 4294901760
      %v3108 = vsub.f32 %v3027, %v3107
      %3109 = vmatmul.f32.gmra.mxu0 %v3108
      %v3110 = vpop.f32.mrf.mxu0
      %v3111 = vadd.f32 %v3085, %v3110
      %3112 = vdwg.mxu0
      %3113 = vmatpush.msra.mxu0 0.0
      %3114 = vmatpush.msra.mxu0 0.0
      %3115 = vmatpush.msra.mxu0 0.0
      %3116 = vmatpush.msra.mxu0 0.0
      %3117 = vmatpush.msra.mxu0 0.0
      %3118 = vmatpush.msra.mxu0 0.0
      %3119 = vmatpush.msra.mxu0 0.0
      %3120 = vmatpush.msra.mxu0 0.0
      %3121 = vmatpush.msra.mxu0 0.0
      %3122 = vmatpush.msra.mxu0 0.0
      %3123 = vmatpush.msra.mxu0 0.0
      %3124 = vmatpush.msra.mxu0 0.0
      %3125 = vmatpush.msra.mxu0 0.0
      %3126 = vmatpush.msra.mxu0 0.0
      %v3127 = vand.u32 %v2469, 4294901760
      %3128 = vmatpush.msra.mxu0 %v3127
      %v3129 = vand.u32 %v2465, 4294901760
      %3130 = vmatpush.msra.mxu0 %v3129
      %v3131 = vand.u32 %v3027, 4294901760
      %v3132 = vsub.f32 %v3027, %v3131
      %v3133 = vand.u32 %v3132, 4294901760
      %3134 = vmatmul.f32.gmra.mxu0 %v3133
      %v3135 = vpop.f32.mrf.mxu0
      %v3136 = vadd.f32 %v3111, %v3135
      %3137 = vdwg.mxu0
      %3138 = vmatpush.msra.mxu0 0.0
      %3139 = vmatpush.msra.mxu0 0.0
      %3140 = vmatpush.msra.mxu0 0.0
      %3141 = vmatpush.msra.mxu0 0.0
      %3142 = vmatpush.msra.mxu0 0.0
      %3143 = vmatpush.msra.mxu0 0.0
      %3144 = vmatpush.msra.mxu0 0.0
      %3145 = vmatpush.msra.mxu0 0.0
      %3146 = vmatpush.msra.mxu0 0.0
      %3147 = vmatpush.msra.mxu0 0.0
      %3148 = vmatpush.msra.mxu0 0.0
      %3149 = vmatpush.msra.mxu0 0.0
      %3150 = vmatpush.msra.mxu0 0.0
      %3151 = vmatpush.msra.mxu0 0.0
      %v3152 = vand.u32 %v2469, 4294901760
      %v3153 = vsub.f32 %v2469, %v3152
      %v3154 = vand.u32 %v3153, 4294901760
      %3155 = vmatpush.msra.mxu0 %v3154
      %v3156 = vand.u32 %v2465, 4294901760
      %v3157 = vsub.f32 %v2465, %v3156
      %v3158 = vand.u32 %v3157, 4294901760
      %3159 = vmatpush.msra.mxu0 %v3158
      %v3160 = vand.u32 %v3027, 4294901760
      %3161 = vmatmul.f32.gmra.mxu0 %v3160
      %v3162 = vpop.f32.mrf.mxu0
      %v3163 = vadd.f32 %v3136, %v3162
      %3164 = vdwg.mxu0
      %3165 = vmatpush.msra.mxu0 0.0
      %3166 = vmatpush.msra.mxu0 0.0
      %3167 = vmatpush.msra.mxu0 0.0
      %3168 = vmatpush.msra.mxu0 0.0
      %3169 = vmatpush.msra.mxu0 0.0
      %3170 = vmatpush.msra.mxu0 0.0
      %3171 = vmatpush.msra.mxu0 0.0
      %3172 = vmatpush.msra.mxu0 0.0
      %3173 = vmatpush.msra.mxu0 0.0
      %3174 = vmatpush.msra.mxu0 0.0
      %3175 = vmatpush.msra.mxu0 0.0
      %3176 = vmatpush.msra.mxu0 0.0
      %3177 = vmatpush.msra.mxu0 0.0
      %3178 = vmatpush.msra.mxu0 0.0
      %v3179 = vand.u32 %v2469, 4294901760
      %3180 = vmatpush.msra.mxu0 %v3179
      %v3181 = vand.u32 %v2465, 4294901760
      %3182 = vmatpush.msra.mxu0 %v3181
      %v3183 = vand.u32 %v3027, 4294901760
      %3184 = vmatmul.f32.gmra.mxu0 %v3183
      %v3185 = vpop.f32.mrf.mxu0
      %v3186 = vadd.f32 %v3163, %v3185
      %3187 = vdwg.mxu0
      %s3188 = scalar_lea.vmem %s3, 256
      %v3189 = vld [vmem:[%s3188] sm:$0xff]
      %v3190 = vld [vmem:[%s3188 + $0x8] sm:$0xff]
      %v3191 = vld [vmem:[%s3188 + $0x10] sm:$0xff]
      %v3192 = vld [vmem:[%s3188 + $0x18] sm:$0xff]
      %v3193 = vld [vmem:[%s3188 + $0x20] sm:$0xff]
      %v3194 = vld [vmem:[%s3188 + $0x28] sm:$0xff]
      %v3195 = vld [vmem:[%s3188 + $0x30] sm:$0xff]
      %v3196 = vld [vmem:[%s3188 + $0x38] sm:$0xff]
      %v3197 = vld [vmem:[%s3188 + $0x40] sm:$0xff]
      %v3198 = vld [vmem:[%s3188 + $0x48] sm:$0xff]
      %v3199 = vld [vmem:[%s3188 + $0x50] sm:$0xff]
      %v3200 = vld [vmem:[%s3188 + $0x58] sm:$0xff]
      %v3201 = vld [vmem:[%s3188 + $0x60] sm:$0xff]
      %v3202 = vld [vmem:[%s3188 + $0x68] sm:$0xff]
      %v3203 = vld [vmem:[%s3188 + $0x70] sm:$0xff]
      %v3204 = vld [vmem:[%s3188 + $0x78] sm:$0xff]
      %v3205 = vand.u32 %v3204, 4294901760
      %3206 = vmatpush.msra.mxu0 %v3205
      %v3207 = vand.u32 %v3203, 4294901760
      %3208 = vmatpush.msra.mxu0 %v3207
      %v3209 = vand.u32 %v3202, 4294901760
      %3210 = vmatpush.msra.mxu0 %v3209
      %v3211 = vand.u32 %v3201, 4294901760
      %3212 = vmatpush.msra.mxu0 %v3211
      %v3213 = vand.u32 %v3200, 4294901760
      %3214 = vmatpush.msra.mxu0 %v3213
      %v3215 = vand.u32 %v3199, 4294901760
      %3216 = vmatpush.msra.mxu0 %v3215
      %v3217 = vand.u32 %v3198, 4294901760
      %3218 = vmatpush.msra.mxu0 %v3217
      %v3219 = vand.u32 %v3197, 4294901760
      %3220 = vmatpush.msra.mxu0 %v3219
      %v3221 = vand.u32 %v3196, 4294901760
      %3222 = vmatpush.msra.mxu0 %v3221
      %v3223 = vand.u32 %v3195, 4294901760
      %3224 = vmatpush.msra.mxu0 %v3223
      %v3225 = vand.u32 %v3194, 4294901760
      %3226 = vmatpush.msra.mxu0 %v3225
      %v3227 = vand.u32 %v3193, 4294901760
      %3228 = vmatpush.msra.mxu0 %v3227
      %v3229 = vand.u32 %v3192, 4294901760
      %3230 = vmatpush.msra.mxu0 %v3229
      %v3231 = vand.u32 %v3191, 4294901760
      %3232 = vmatpush.msra.mxu0 %v3231
      %v3233 = vand.u32 %v3190, 4294901760
      %3234 = vmatpush.msra.mxu0 %v3233
      %v3235 = vand.u32 %v3189, 4294901760
      %3236 = vmatpush.msra.mxu0 %v3235
      %v3237 = vand.u32 %v2081, 4294901760
      %v3238 = vsub.f32 %v2081, %v3237
      %v3239 = vand.u32 %v3238, 4294901760
      %v3240 = vsub.f32 %v3238, %v3239
      %v3241 = vand.u32 %v3240, 4294901760
      %3242 = vmatmul.f32.gmra.mxu0 %v3241
      %v3243 = vpop.f32.mrf.mxu0
      %v3244 = vadd.f32 0.0, %v3243
      %v3245 = vand.u32 %v2082, 4294901760
      %v3246 = vsub.f32 %v2082, %v3245
      %v3247 = vand.u32 %v3246, 4294901760
      %v3248 = vsub.f32 %v3246, %v3247
      %v3249 = vand.u32 %v3248, 4294901760
      %3250 = vmatmul.f32.gmra.mxu0 %v3249
      %v3251 = vpop.f32.mrf.mxu0
      %v3252 = vadd.f32 0.0, %v3251
      %3253 = vdwg.mxu0
      %v3254 = vand.u32 %v3204, 4294901760
      %v3255 = vsub.f32 %v3204, %v3254
      %v3256 = vand.u32 %v3255, 4294901760
      %v3257 = vsub.f32 %v3255, %v3256
      %v3258 = vand.u32 %v3257, 4294901760
      %3259 = vmatpush.msra.mxu0 %v3258
      %v3260 = vand.u32 %v3203, 4294901760
      %v3261 = vsub.f32 %v3203, %v3260
      %v3262 = vand.u32 %v3261, 4294901760
      %v3263 = vsub.f32 %v3261, %v3262
      %v3264 = vand.u32 %v3263, 4294901760
      %3265 = vmatpush.msra.mxu0 %v3264
      %v3266 = vand.u32 %v3202, 4294901760
      %v3267 = vsub.f32 %v3202, %v3266
      %v3268 = vand.u32 %v3267, 4294901760
      %v3269 = vsub.f32 %v3267, %v3268
      %v3270 = vand.u32 %v3269, 4294901760
      %3271 = vmatpush.msra.mxu0 %v3270
      %v3272 = vand.u32 %v3201, 4294901760
      %v3273 = vsub.f32 %v3201, %v3272
      %v3274 = vand.u32 %v3273, 4294901760
      %v3275 = vsub.f32 %v3273, %v3274
      %v3276 = vand.u32 %v3275, 4294901760
      %3277 = vmatpush.msra.mxu0 %v3276
      %v3278 = vand.u32 %v3200, 4294901760
      %v3279 = vsub.f32 %v3200, %v3278
      %v3280 = vand.u32 %v3279, 4294901760
      %v3281 = vsub.f32 %v3279, %v3280
      %v3282 = vand.u32 %v3281, 4294901760
      %3283 = vmatpush.msra.mxu0 %v3282
      %v3284 = vand.u32 %v3199, 4294901760
      %v3285 = vsub.f32 %v3199, %v3284
      %v3286 = vand.u32 %v3285, 4294901760
      %v3287 = vsub.f32 %v3285, %v3286
      %v3288 = vand.u32 %v3287, 4294901760
      %3289 = vmatpush.msra.mxu0 %v3288
      %v3290 = vand.u32 %v3198, 4294901760
      %v3291 = vsub.f32 %v3198, %v3290
      %v3292 = vand.u32 %v3291, 4294901760
      %v3293 = vsub.f32 %v3291, %v3292
      %v3294 = vand.u32 %v3293, 4294901760
      %3295 = vmatpush.msra.mxu0 %v3294
      %v3296 = vand.u32 %v3197, 4294901760
      %v3297 = vsub.f32 %v3197, %v3296
      %v3298 = vand.u32 %v3297, 4294901760
      %v3299 = vsub.f32 %v3297, %v3298
      %v3300 = vand.u32 %v3299, 4294901760
      %3301 = vmatpush.msra.mxu0 %v3300
      %v3302 = vand.u32 %v3196, 4294901760
      %v3303 = vsub.f32 %v3196, %v3302
      %v3304 = vand.u32 %v3303, 4294901760
      %v3305 = vsub.f32 %v3303, %v3304
      %v3306 = vand.u32 %v3305, 4294901760
      %3307 = vmatpush.msra.mxu0 %v3306
      %v3308 = vand.u32 %v3195, 4294901760
      %v3309 = vsub.f32 %v3195, %v3308
      %v3310 = vand.u32 %v3309, 4294901760
      %v3311 = vsub.f32 %v3309, %v3310
      %v3312 = vand.u32 %v3311, 4294901760
      %3313 = vmatpush.msra.mxu0 %v3312
      %v3314 = vand.u32 %v3194, 4294901760
      %v3315 = vsub.f32 %v3194, %v3314
      %v3316 = vand.u32 %v3315, 4294901760
      %v3317 = vsub.f32 %v3315, %v3316
      %v3318 = vand.u32 %v3317, 4294901760
      %3319 = vmatpush.msra.mxu0 %v3318
      %v3320 = vand.u32 %v3193, 4294901760
      %v3321 = vsub.f32 %v3193, %v3320
      %v3322 = vand.u32 %v3321, 4294901760
      %v3323 = vsub.f32 %v3321, %v3322
      %v3324 = vand.u32 %v3323, 4294901760
      %3325 = vmatpush.msra.mxu0 %v3324
      %v3326 = vand.u32 %v3192, 4294901760
      %v3327 = vsub.f32 %v3192, %v3326
      %v3328 = vand.u32 %v3327, 4294901760
      %v3329 = vsub.f32 %v3327, %v3328
      %v3330 = vand.u32 %v3329, 4294901760
      %3331 = vmatpush.msra.mxu0 %v3330
      %v3332 = vand.u32 %v3191, 4294901760
      %v3333 = vsub.f32 %v3191, %v3332
      %v3334 = vand.u32 %v3333, 4294901760
      %v3335 = vsub.f32 %v3333, %v3334
      %v3336 = vand.u32 %v3335, 4294901760
      %3337 = vmatpush.msra.mxu0 %v3336
      %v3338 = vand.u32 %v3190, 4294901760
      %v3339 = vsub.f32 %v3190, %v3338
      %v3340 = vand.u32 %v3339, 4294901760
      %v3341 = vsub.f32 %v3339, %v3340
      %v3342 = vand.u32 %v3341, 4294901760
      %3343 = vmatpush.msra.mxu0 %v3342
      %v3344 = vand.u32 %v3189, 4294901760
      %v3345 = vsub.f32 %v3189, %v3344
      %v3346 = vand.u32 %v3345, 4294901760
      %v3347 = vsub.f32 %v3345, %v3346
      %v3348 = vand.u32 %v3347, 4294901760
      %3349 = vmatpush.msra.mxu0 %v3348
      %v3350 = vand.u32 %v2081, 4294901760
      %3351 = vmatmul.f32.gmra.mxu0 %v3350
      %v3352 = vpop.f32.mrf.mxu0
      %v3353 = vadd.f32 %v3244, %v3352
      %v3354 = vand.u32 %v2082, 4294901760
      %3355 = vmatmul.f32.gmra.mxu0 %v3354
      %v3356 = vpop.f32.mrf.mxu0
      %v3357 = vadd.f32 %v3252, %v3356
      %3358 = vdwg.mxu0
      %v3359 = vand.u32 %v3204, 4294901760
      %v3360 = vsub.f32 %v3204, %v3359
      %3361 = vmatpush.msra.mxu0 %v3360
      %v3362 = vand.u32 %v3203, 4294901760
      %v3363 = vsub.f32 %v3203, %v3362
      %3364 = vmatpush.msra.mxu0 %v3363
      %v3365 = vand.u32 %v3202, 4294901760
      %v3366 = vsub.f32 %v3202, %v3365
      %3367 = vmatpush.msra.mxu0 %v3366
      %v3368 = vand.u32 %v3201, 4294901760
      %v3369 = vsub.f32 %v3201, %v3368
      %3370 = vmatpush.msra.mxu0 %v3369
      %v3371 = vand.u32 %v3200, 4294901760
      %v3372 = vsub.f32 %v3200, %v3371
      %3373 = vmatpush.msra.mxu0 %v3372
      %v3374 = vand.u32 %v3199, 4294901760
      %v3375 = vsub.f32 %v3199, %v3374
      %3376 = vmatpush.msra.mxu0 %v3375
      %v3377 = vand.u32 %v3198, 4294901760
      %v3378 = vsub.f32 %v3198, %v3377
      %3379 = vmatpush.msra.mxu0 %v3378
      %v3380 = vand.u32 %v3197, 4294901760
      %v3381 = vsub.f32 %v3197, %v3380
      %3382 = vmatpush.msra.mxu0 %v3381
      %v3383 = vand.u32 %v3196, 4294901760
      %v3384 = vsub.f32 %v3196, %v3383
      %3385 = vmatpush.msra.mxu0 %v3384
      %v3386 = vand.u32 %v3195, 4294901760
      %v3387 = vsub.f32 %v3195, %v3386
      %3388 = vmatpush.msra.mxu0 %v3387
      %v3389 = vand.u32 %v3194, 4294901760
      %v3390 = vsub.f32 %v3194, %v3389
      %3391 = vmatpush.msra.mxu0 %v3390
      %v3392 = vand.u32 %v3193, 4294901760
      %v3393 = vsub.f32 %v3193, %v3392
      %3394 = vmatpush.msra.mxu0 %v3393
      %v3395 = vand.u32 %v3192, 4294901760
      %v3396 = vsub.f32 %v3192, %v3395
      %3397 = vmatpush.msra.mxu0 %v3396
      %v3398 = vand.u32 %v3191, 4294901760
      %v3399 = vsub.f32 %v3191, %v3398
      %3400 = vmatpush.msra.mxu0 %v3399
      %v3401 = vand.u32 %v3190, 4294901760
      %v3402 = vsub.f32 %v3190, %v3401
      %3403 = vmatpush.msra.mxu0 %v3402
      %v3404 = vand.u32 %v3189, 4294901760
      %v3405 = vsub.f32 %v3189, %v3404
      %3406 = vmatpush.msra.mxu0 %v3405
      %v3407 = vand.u32 %v2081, 4294901760
      %v3408 = vsub.f32 %v2081, %v3407
      %3409 = vmatmul.f32.gmra.mxu0 %v3408
      %v3410 = vpop.f32.mrf.mxu0
      %v3411 = vadd.f32 %v3353, %v3410
      %v3412 = vand.u32 %v2082, 4294901760
      %v3413 = vsub.f32 %v2082, %v3412
      %3414 = vmatmul.f32.gmra.mxu0 %v3413
      %v3415 = vpop.f32.mrf.mxu0
      %v3416 = vadd.f32 %v3357, %v3415
      %3417 = vdwg.mxu0
      %v3418 = vand.u32 %v3204, 4294901760
      %3419 = vmatpush.msra.mxu0 %v3418
      %v3420 = vand.u32 %v3203, 4294901760
      %3421 = vmatpush.msra.mxu0 %v3420
      %v3422 = vand.u32 %v3202, 4294901760
      %3423 = vmatpush.msra.mxu0 %v3422
      %v3424 = vand.u32 %v3201, 4294901760
      %3425 = vmatpush.msra.mxu0 %v3424
      %v3426 = vand.u32 %v3200, 4294901760
      %3427 = vmatpush.msra.mxu0 %v3426
      %v3428 = vand.u32 %v3199, 4294901760
      %3429 = vmatpush.msra.mxu0 %v3428
      %v3430 = vand.u32 %v3198, 4294901760
      %3431 = vmatpush.msra.mxu0 %v3430
      %v3432 = vand.u32 %v3197, 4294901760
      %3433 = vmatpush.msra.mxu0 %v3432
      %v3434 = vand.u32 %v3196, 4294901760
      %3435 = vmatpush.msra.mxu0 %v3434
      %v3436 = vand.u32 %v3195, 4294901760
      %3437 = vmatpush.msra.mxu0 %v3436
      %v3438 = vand.u32 %v3194, 4294901760
      %3439 = vmatpush.msra.mxu0 %v3438
      %v3440 = vand.u32 %v3193, 4294901760
      %3441 = vmatpush.msra.mxu0 %v3440
      %v3442 = vand.u32 %v3192, 4294901760
      %3443 = vmatpush.msra.mxu0 %v3442
      %v3444 = vand.u32 %v3191, 4294901760
      %3445 = vmatpush.msra.mxu0 %v3444
      %v3446 = vand.u32 %v3190, 4294901760
      %3447 = vmatpush.msra.mxu0 %v3446
      %v3448 = vand.u32 %v3189, 4294901760
      %3449 = vmatpush.msra.mxu0 %v3448
      %v3450 = vand.u32 %v2081, 4294901760
      %v3451 = vsub.f32 %v2081, %v3450
      %v3452 = vand.u32 %v3451, 4294901760
      %3453 = vmatmul.f32.gmra.mxu0 %v3452
      %v3454 = vpop.f32.mrf.mxu0
      %v3455 = vadd.f32 %v3411, %v3454
      %v3456 = vand.u32 %v2082, 4294901760
      %v3457 = vsub.f32 %v2082, %v3456
      %v3458 = vand.u32 %v3457, 4294901760
      %3459 = vmatmul.f32.gmra.mxu0 %v3458
      %v3460 = vpop.f32.mrf.mxu0
      %v3461 = vadd.f32 %v3416, %v3460
      %3462 = vdwg.mxu0
      %v3463 = vand.u32 %v3204, 4294901760
      %v3464 = vsub.f32 %v3204, %v3463
      %v3465 = vand.u32 %v3464, 4294901760
      %3466 = vmatpush.msra.mxu0 %v3465
      %v3467 = vand.u32 %v3203, 4294901760
      %v3468 = vsub.f32 %v3203, %v3467
      %v3469 = vand.u32 %v3468, 4294901760
      %3470 = vmatpush.msra.mxu0 %v3469
      %v3471 = vand.u32 %v3202, 4294901760
      %v3472 = vsub.f32 %v3202, %v3471
      %v3473 = vand.u32 %v3472, 4294901760
      %3474 = vmatpush.msra.mxu0 %v3473
      %v3475 = vand.u32 %v3201, 4294901760
      %v3476 = vsub.f32 %v3201, %v3475
      %v3477 = vand.u32 %v3476, 4294901760
      %3478 = vmatpush.msra.mxu0 %v3477
      %v3479 = vand.u32 %v3200, 4294901760
      %v3480 = vsub.f32 %v3200, %v3479
      %v3481 = vand.u32 %v3480, 4294901760
      %3482 = vmatpush.msra.mxu0 %v3481
      %v3483 = vand.u32 %v3199, 4294901760
      %v3484 = vsub.f32 %v3199, %v3483
      %v3485 = vand.u32 %v3484, 4294901760
      %3486 = vmatpush.msra.mxu0 %v3485
      %v3487 = vand.u32 %v3198, 4294901760
      %v3488 = vsub.f32 %v3198, %v3487
      %v3489 = vand.u32 %v3488, 4294901760
      %3490 = vmatpush.msra.mxu0 %v3489
      %v3491 = vand.u32 %v3197, 4294901760
      %v3492 = vsub.f32 %v3197, %v3491
      %v3493 = vand.u32 %v3492, 4294901760
      %3494 = vmatpush.msra.mxu0 %v3493
      %v3495 = vand.u32 %v3196, 4294901760
      %v3496 = vsub.f32 %v3196, %v3495
      %v3497 = vand.u32 %v3496, 4294901760
      %3498 = vmatpush.msra.mxu0 %v3497
      %v3499 = vand.u32 %v3195, 4294901760
      %v3500 = vsub.f32 %v3195, %v3499
      %v3501 = vand.u32 %v3500, 4294901760
      %3502 = vmatpush.msra.mxu0 %v3501
      %v3503 = vand.u32 %v3194, 4294901760
      %v3504 = vsub.f32 %v3194, %v3503
      %v3505 = vand.u32 %v3504, 4294901760
      %3506 = vmatpush.msra.mxu0 %v3505
      %v3507 = vand.u32 %v3193, 4294901760
      %v3508 = vsub.f32 %v3193, %v3507
      %v3509 = vand.u32 %v3508, 4294901760
      %3510 = vmatpush.msra.mxu0 %v3509
      %v3511 = vand.u32 %v3192, 4294901760
      %v3512 = vsub.f32 %v3192, %v3511
      %v3513 = vand.u32 %v3512, 4294901760
      %3514 = vmatpush.msra.mxu0 %v3513
      %v3515 = vand.u32 %v3191, 4294901760
      %v3516 = vsub.f32 %v3191, %v3515
      %v3517 = vand.u32 %v3516, 4294901760
      %3518 = vmatpush.msra.mxu0 %v3517
      %v3519 = vand.u32 %v3190, 4294901760
      %v3520 = vsub.f32 %v3190, %v3519
      %v3521 = vand.u32 %v3520, 4294901760
      %3522 = vmatpush.msra.mxu0 %v3521
      %v3523 = vand.u32 %v3189, 4294901760
      %v3524 = vsub.f32 %v3189, %v3523
      %v3525 = vand.u32 %v3524, 4294901760
      %3526 = vmatpush.msra.mxu0 %v3525
      %v3527 = vand.u32 %v2081, 4294901760
      %3528 = vmatmul.f32.gmra.mxu0 %v3527
      %v3529 = vpop.f32.mrf.mxu0
      %v3530 = vadd.f32 %v3455, %v3529
      %v3531 = vand.u32 %v2082, 4294901760
      %3532 = vmatmul.f32.gmra.mxu0 %v3531
      %v3533 = vpop.f32.mrf.mxu0
      %v3534 = vadd.f32 %v3461, %v3533
      %3535 = vdwg.mxu0
      %v3536 = vand.u32 %v3204, 4294901760
      %3537 = vmatpush.msra.mxu0 %v3536
      %v3538 = vand.u32 %v3203, 4294901760
      %3539 = vmatpush.msra.mxu0 %v3538
      %v3540 = vand.u32 %v3202, 4294901760
      %3541 = vmatpush.msra.mxu0 %v3540
      %v3542 = vand.u32 %v3201, 4294901760
      %3543 = vmatpush.msra.mxu0 %v3542
      %v3544 = vand.u32 %v3200, 4294901760
      %3545 = vmatpush.msra.mxu0 %v3544
      %v3546 = vand.u32 %v3199, 4294901760
      %3547 = vmatpush.msra.mxu0 %v3546
      %v3548 = vand.u32 %v3198, 4294901760
      %3549 = vmatpush.msra.mxu0 %v3548
      %v3550 = vand.u32 %v3197, 4294901760
      %3551 = vmatpush.msra.mxu0 %v3550
      %v3552 = vand.u32 %v3196, 4294901760
      %3553 = vmatpush.msra.mxu0 %v3552
      %v3554 = vand.u32 %v3195, 4294901760
      %3555 = vmatpush.msra.mxu0 %v3554
      %v3556 = vand.u32 %v3194, 4294901760
      %3557 = vmatpush.msra.mxu0 %v3556
      %v3558 = vand.u32 %v3193, 4294901760
      %3559 = vmatpush.msra.mxu0 %v3558
      %v3560 = vand.u32 %v3192, 4294901760
      %3561 = vmatpush.msra.mxu0 %v3560
      %v3562 = vand.u32 %v3191, 4294901760
      %3563 = vmatpush.msra.mxu0 %v3562
      %v3564 = vand.u32 %v3190, 4294901760
      %3565 = vmatpush.msra.mxu0 %v3564
      %v3566 = vand.u32 %v3189, 4294901760
      %3567 = vmatpush.msra.mxu0 %v3566
      %v3568 = vand.u32 %v2081, 4294901760
      %3569 = vmatmul.f32.gmra.mxu0 %v3568
      %v3570 = vpop.f32.mrf.mxu0
      %v3571 = vadd.f32 %v3530, %v3570
      %v3572 = vand.u32 %v2082, 4294901760
      %3573 = vmatmul.f32.gmra.mxu0 %v3572
      %v3574 = vpop.f32.mrf.mxu0
      %v3575 = vadd.f32 %v3534, %v3574
      %3576 = vdwg.mxu0
      %s3577 = scalar_lea.vmem %s4, 16
      %v3578 = vld [vmem:[%s3577] sm:$0xff]
      %v3580 = vsel %vm2863, %v3578, 0
      %3582 = vmatpush.msra.mxu0 0.0
      %3583 = vmatpush.msra.mxu0 0.0
      %3584 = vmatpush.msra.mxu0 0.0
      %3585 = vmatpush.msra.mxu0 0.0
      %3586 = vmatpush.msra.mxu0 0.0
      %3587 = vmatpush.msra.mxu0 0.0
      %3588 = vmatpush.msra.mxu0 0.0
      %3589 = vmatpush.msra.mxu0 0.0
      %3590 = vmatpush.msra.mxu0 0.0
      %3591 = vmatpush.msra.mxu0 0.0
      %3592 = vmatpush.msra.mxu0 0.0
      %3593 = vmatpush.msra.mxu0 0.0
      %3594 = vmatpush.msra.mxu0 0.0
      %3595 = vmatpush.msra.mxu0 0.0
      %v3596 = vand.u32 %v3575, 4294901760
      %3597 = vmatpush.msra.mxu0 %v3596
      %v3598 = vand.u32 %v3571, 4294901760
      %3599 = vmatpush.msra.mxu0 %v3598
      %v3600 = vand.u32 %v3580, 4294901760
      %v3601 = vsub.f32 %v3580, %v3600
      %v3602 = vand.u32 %v3601, 4294901760
      %v3603 = vsub.f32 %v3601, %v3602
      %v3604 = vand.u32 %v3603, 4294901760
      %3605 = vmatmul.f32.gmra.mxu0 %v3604
      %v3606 = vpop.f32.mrf.mxu0
      %v3607 = vadd.f32 0.0, %v3606
      %3608 = vdwg.mxu0
      %3609 = vmatpush.msra.mxu0 0.0
      %3610 = vmatpush.msra.mxu0 0.0
      %3611 = vmatpush.msra.mxu0 0.0
      %3612 = vmatpush.msra.mxu0 0.0
      %3613 = vmatpush.msra.mxu0 0.0
      %3614 = vmatpush.msra.mxu0 0.0
      %3615 = vmatpush.msra.mxu0 0.0
      %3616 = vmatpush.msra.mxu0 0.0
      %3617 = vmatpush.msra.mxu0 0.0
      %3618 = vmatpush.msra.mxu0 0.0
      %3619 = vmatpush.msra.mxu0 0.0
      %3620 = vmatpush.msra.mxu0 0.0
      %3621 = vmatpush.msra.mxu0 0.0
      %3622 = vmatpush.msra.mxu0 0.0
      %v3623 = vand.u32 %v3575, 4294901760
      %v3624 = vsub.f32 %v3575, %v3623
      %v3625 = vand.u32 %v3624, 4294901760
      %v3626 = vsub.f32 %v3624, %v3625
      %v3627 = vand.u32 %v3626, 4294901760
      %3628 = vmatpush.msra.mxu0 %v3627
      %v3629 = vand.u32 %v3571, 4294901760
      %v3630 = vsub.f32 %v3571, %v3629
      %v3631 = vand.u32 %v3630, 4294901760
      %v3632 = vsub.f32 %v3630, %v3631
      %v3633 = vand.u32 %v3632, 4294901760
      %3634 = vmatpush.msra.mxu0 %v3633
      %v3635 = vand.u32 %v3580, 4294901760
      %3636 = vmatmul.f32.gmra.mxu0 %v3635
      %v3637 = vpop.f32.mrf.mxu0
      %v3638 = vadd.f32 %v3607, %v3637
      %3639 = vdwg.mxu0
      %3640 = vmatpush.msra.mxu0 0.0
      %3641 = vmatpush.msra.mxu0 0.0
      %3642 = vmatpush.msra.mxu0 0.0
      %3643 = vmatpush.msra.mxu0 0.0
      %3644 = vmatpush.msra.mxu0 0.0
      %3645 = vmatpush.msra.mxu0 0.0
      %3646 = vmatpush.msra.mxu0 0.0
      %3647 = vmatpush.msra.mxu0 0.0
      %3648 = vmatpush.msra.mxu0 0.0
      %3649 = vmatpush.msra.mxu0 0.0
      %3650 = vmatpush.msra.mxu0 0.0
      %3651 = vmatpush.msra.mxu0 0.0
      %3652 = vmatpush.msra.mxu0 0.0
      %3653 = vmatpush.msra.mxu0 0.0
      %v3654 = vand.u32 %v3575, 4294901760
      %v3655 = vsub.f32 %v3575, %v3654
      %3656 = vmatpush.msra.mxu0 %v3655
      %v3657 = vand.u32 %v3571, 4294901760
      %v3658 = vsub.f32 %v3571, %v3657
      %3659 = vmatpush.msra.mxu0 %v3658
      %v3660 = vand.u32 %v3580, 4294901760
      %v3661 = vsub.f32 %v3580, %v3660
      %3662 = vmatmul.f32.gmra.mxu0 %v3661
      %v3663 = vpop.f32.mrf.mxu0
      %v3664 = vadd.f32 %v3638, %v3663
      %3665 = vdwg.mxu0
      %3666 = vmatpush.msra.mxu0 0.0
      %3667 = vmatpush.msra.mxu0 0.0
      %3668 = vmatpush.msra.mxu0 0.0
      %3669 = vmatpush.msra.mxu0 0.0
      %3670 = vmatpush.msra.mxu0 0.0
      %3671 = vmatpush.msra.mxu0 0.0
      %3672 = vmatpush.msra.mxu0 0.0
      %3673 = vmatpush.msra.mxu0 0.0
      %3674 = vmatpush.msra.mxu0 0.0
      %3675 = vmatpush.msra.mxu0 0.0
      %3676 = vmatpush.msra.mxu0 0.0
      %3677 = vmatpush.msra.mxu0 0.0
      %3678 = vmatpush.msra.mxu0 0.0
      %3679 = vmatpush.msra.mxu0 0.0
      %v3680 = vand.u32 %v3575, 4294901760
      %3681 = vmatpush.msra.mxu0 %v3680
      %v3682 = vand.u32 %v3571, 4294901760
      %3683 = vmatpush.msra.mxu0 %v3682
      %v3684 = vand.u32 %v3580, 4294901760
      %v3685 = vsub.f32 %v3580, %v3684
      %v3686 = vand.u32 %v3685, 4294901760
      %3687 = vmatmul.f32.gmra.mxu0 %v3686
      %v3688 = vpop.f32.mrf.mxu0
      %v3689 = vadd.f32 %v3664, %v3688
      %3690 = vdwg.mxu0
      %3691 = vmatpush.msra.mxu0 0.0
      %3692 = vmatpush.msra.mxu0 0.0
      %3693 = vmatpush.msra.mxu0 0.0
      %3694 = vmatpush.msra.mxu0 0.0
      %3695 = vmatpush.msra.mxu0 0.0
      %3696 = vmatpush.msra.mxu0 0.0
      %3697 = vmatpush.msra.mxu0 0.0
      %3698 = vmatpush.msra.mxu0 0.0
      %3699 = vmatpush.msra.mxu0 0.0
      %3700 = vmatpush.msra.mxu0 0.0
      %3701 = vmatpush.msra.mxu0 0.0
      %3702 = vmatpush.msra.mxu0 0.0
      %3703 = vmatpush.msra.mxu0 0.0
      %3704 = vmatpush.msra.mxu0 0.0
      %v3705 = vand.u32 %v3575, 4294901760
      %v3706 = vsub.f32 %v3575, %v3705
      %v3707 = vand.u32 %v3706, 4294901760
      %3708 = vmatpush.msra.mxu0 %v3707
      %v3709 = vand.u32 %v3571, 4294901760
      %v3710 = vsub.f32 %v3571, %v3709
      %v3711 = vand.u32 %v3710, 4294901760
      %3712 = vmatpush.msra.mxu0 %v3711
      %v3713 = vand.u32 %v3580, 4294901760
      %3714 = vmatmul.f32.gmra.mxu0 %v3713
      %v3715 = vpop.f32.mrf.mxu0
      %v3716 = vadd.f32 %v3689, %v3715
      %3717 = vdwg.mxu0
      %3718 = vmatpush.msra.mxu0 0.0
      %3719 = vmatpush.msra.mxu0 0.0
      %3720 = vmatpush.msra.mxu0 0.0
      %3721 = vmatpush.msra.mxu0 0.0
      %3722 = vmatpush.msra.mxu0 0.0
      %3723 = vmatpush.msra.mxu0 0.0
      %3724 = vmatpush.msra.mxu0 0.0
      %3725 = vmatpush.msra.mxu0 0.0
      %3726 = vmatpush.msra.mxu0 0.0
      %3727 = vmatpush.msra.mxu0 0.0
      %3728 = vmatpush.msra.mxu0 0.0
      %3729 = vmatpush.msra.mxu0 0.0
      %3730 = vmatpush.msra.mxu0 0.0
      %3731 = vmatpush.msra.mxu0 0.0
      %v3732 = vand.u32 %v3575, 4294901760
      %3733 = vmatpush.msra.mxu0 %v3732
      %v3734 = vand.u32 %v3571, 4294901760
      %3735 = vmatpush.msra.mxu0 %v3734
      %v3736 = vand.u32 %v3580, 4294901760
      %3737 = vmatmul.f32.gmra.mxu0 %v3736
      %v3738 = vpop.f32.mrf.mxu0
      %v3739 = vadd.f32 %v3716, %v3738
      %3740 = vdwg.mxu0
      %v3741 = vadd.f32 %v3186, %v3739
      %v3742 = vld [vmem:[%s5] sm:$0xff]
      %v3744 = vsel %vm2863, %v3742, 0
      %3746 = vmatpush.msra.mxu0 0.0
      %3747 = vmatpush.msra.mxu0 0.0
      %3748 = vmatpush.msra.mxu0 0.0
      %3749 = vmatpush.msra.mxu0 0.0
      %3750 = vmatpush.msra.mxu0 0.0
      %3751 = vmatpush.msra.mxu0 0.0
      %3752 = vmatpush.msra.mxu0 0.0
      %3753 = vmatpush.msra.mxu0 0.0
      %3754 = vmatpush.msra.mxu0 0.0
      %3755 = vmatpush.msra.mxu0 0.0
      %3756 = vmatpush.msra.mxu0 0.0
      %3757 = vmatpush.msra.mxu0 0.0
      %3758 = vmatpush.msra.mxu0 0.0
      %3759 = vmatpush.msra.mxu0 0.0
      %v3760 = vand.u32 %v2074, 4294901760
      %3761 = vmatpush.msra.mxu0 %v3760
      %v3762 = vand.u32 %v2072, 4294901760
      %3763 = vmatpush.msra.mxu0 %v3762
      %v3764 = vand.u32 %v3744, 4294901760
      %v3765 = vsub.f32 %v3744, %v3764
      %v3766 = vand.u32 %v3765, 4294901760
      %v3767 = vsub.f32 %v3765, %v3766
      %v3768 = vand.u32 %v3767, 4294901760
      %3769 = vmatmul.f32.gmra.mxu0 %v3768
      %v3770 = vpop.f32.mrf.mxu0
      %v3771 = vadd.f32 0.0, %v3770
      %3772 = vdwg.mxu0
      %3773 = vmatpush.msra.mxu0 0.0
      %3774 = vmatpush.msra.mxu0 0.0
      %3775 = vmatpush.msra.mxu0 0.0
      %3776 = vmatpush.msra.mxu0 0.0
      %3777 = vmatpush.msra.mxu0 0.0
      %3778 = vmatpush.msra.mxu0 0.0
      %3779 = vmatpush.msra.mxu0 0.0
      %3780 = vmatpush.msra.mxu0 0.0
      %3781 = vmatpush.msra.mxu0 0.0
      %3782 = vmatpush.msra.mxu0 0.0
      %3783 = vmatpush.msra.mxu0 0.0
      %3784 = vmatpush.msra.mxu0 0.0
      %3785 = vmatpush.msra.mxu0 0.0
      %3786 = vmatpush.msra.mxu0 0.0
      %v3787 = vand.u32 %v2074, 4294901760
      %v3788 = vsub.f32 %v2074, %v3787
      %v3789 = vand.u32 %v3788, 4294901760
      %v3790 = vsub.f32 %v3788, %v3789
      %v3791 = vand.u32 %v3790, 4294901760
      %3792 = vmatpush.msra.mxu0 %v3791
      %v3793 = vand.u32 %v2072, 4294901760
      %v3794 = vsub.f32 %v2072, %v3793
      %v3795 = vand.u32 %v3794, 4294901760
      %v3796 = vsub.f32 %v3794, %v3795
      %v3797 = vand.u32 %v3796, 4294901760
      %3798 = vmatpush.msra.mxu0 %v3797
      %v3799 = vand.u32 %v3744, 4294901760
      %3800 = vmatmul.f32.gmra.mxu0 %v3799
      %v3801 = vpop.f32.mrf.mxu0
      %v3802 = vadd.f32 %v3771, %v3801
      %3803 = vdwg.mxu0
      %3804 = vmatpush.msra.mxu0 0.0
      %3805 = vmatpush.msra.mxu0 0.0
      %3806 = vmatpush.msra.mxu0 0.0
      %3807 = vmatpush.msra.mxu0 0.0
      %3808 = vmatpush.msra.mxu0 0.0
      %3809 = vmatpush.msra.mxu0 0.0
      %3810 = vmatpush.msra.mxu0 0.0
      %3811 = vmatpush.msra.mxu0 0.0
      %3812 = vmatpush.msra.mxu0 0.0
      %3813 = vmatpush.msra.mxu0 0.0
      %3814 = vmatpush.msra.mxu0 0.0
      %3815 = vmatpush.msra.mxu0 0.0
      %3816 = vmatpush.msra.mxu0 0.0
      %3817 = vmatpush.msra.mxu0 0.0
      %v3818 = vand.u32 %v2074, 4294901760
      %v3819 = vsub.f32 %v2074, %v3818
      %3820 = vmatpush.msra.mxu0 %v3819
      %v3821 = vand.u32 %v2072, 4294901760
      %v3822 = vsub.f32 %v2072, %v3821
      %3823 = vmatpush.msra.mxu0 %v3822
      %v3824 = vand.u32 %v3744, 4294901760
      %v3825 = vsub.f32 %v3744, %v3824
      %3826 = vmatmul.f32.gmra.mxu0 %v3825
      %v3827 = vpop.f32.mrf.mxu0
      %v3828 = vadd.f32 %v3802, %v3827
      %3829 = vdwg.mxu0
      %3830 = vmatpush.msra.mxu0 0.0
      %3831 = vmatpush.msra.mxu0 0.0
      %3832 = vmatpush.msra.mxu0 0.0
      %3833 = vmatpush.msra.mxu0 0.0
      %3834 = vmatpush.msra.mxu0 0.0
      %3835 = vmatpush.msra.mxu0 0.0
      %3836 = vmatpush.msra.mxu0 0.0
      %3837 = vmatpush.msra.mxu0 0.0
      %3838 = vmatpush.msra.mxu0 0.0
      %3839 = vmatpush.msra.mxu0 0.0
      %3840 = vmatpush.msra.mxu0 0.0
      %3841 = vmatpush.msra.mxu0 0.0
      %3842 = vmatpush.msra.mxu0 0.0
      %3843 = vmatpush.msra.mxu0 0.0
      %v3844 = vand.u32 %v2074, 4294901760
      %3845 = vmatpush.msra.mxu0 %v3844
      %v3846 = vand.u32 %v2072, 4294901760
      %3847 = vmatpush.msra.mxu0 %v3846
      %v3848 = vand.u32 %v3744, 4294901760
      %v3849 = vsub.f32 %v3744, %v3848
      %v3850 = vand.u32 %v3849, 4294901760
      %3851 = vmatmul.f32.gmra.mxu0 %v3850
      %v3852 = vpop.f32.mrf.mxu0
      %v3853 = vadd.f32 %v3828, %v3852
      %3854 = vdwg.mxu0
      %3855 = vmatpush.msra.mxu0 0.0
      %3856 = vmatpush.msra.mxu0 0.0
      %3857 = vmatpush.msra.mxu0 0.0
      %3858 = vmatpush.msra.mxu0 0.0
      %3859 = vmatpush.msra.mxu0 0.0
      %3860 = vmatpush.msra.mxu0 0.0
      %3861 = vmatpush.msra.mxu0 0.0
      %3862 = vmatpush.msra.mxu0 0.0
      %3863 = vmatpush.msra.mxu0 0.0
      %3864 = vmatpush.msra.mxu0 0.0
      %3865 = vmatpush.msra.mxu0 0.0
      %3866 = vmatpush.msra.mxu0 0.0
      %3867 = vmatpush.msra.mxu0 0.0
      %3868 = vmatpush.msra.mxu0 0.0
      %v3869 = vand.u32 %v2074, 4294901760
      %v3870 = vsub.f32 %v2074, %v3869
      %v3871 = vand.u32 %v3870, 4294901760
      %3872 = vmatpush.msra.mxu0 %v3871
      %v3873 = vand.u32 %v2072, 4294901760
      %v3874 = vsub.f32 %v2072, %v3873
      %v3875 = vand.u32 %v3874, 4294901760
      %3876 = vmatpush.msra.mxu0 %v3875
      %v3877 = vand.u32 %v3744, 4294901760
      %3878 = vmatmul.f32.gmra.mxu0 %v3877
      %v3879 = vpop.f32.mrf.mxu0
      %v3880 = vadd.f32 %v3853, %v3879
      %3881 = vdwg.mxu0
      %3882 = vmatpush.msra.mxu0 0.0
      %3883 = vmatpush.msra.mxu0 0.0
      %3884 = vmatpush.msra.mxu0 0.0
      %3885 = vmatpush.msra.mxu0 0.0
      %3886 = vmatpush.msra.mxu0 0.0
      %3887 = vmatpush.msra.mxu0 0.0
      %3888 = vmatpush.msra.mxu0 0.0
      %3889 = vmatpush.msra.mxu0 0.0
      %3890 = vmatpush.msra.mxu0 0.0
      %3891 = vmatpush.msra.mxu0 0.0
      %3892 = vmatpush.msra.mxu0 0.0
      %3893 = vmatpush.msra.mxu0 0.0
      %3894 = vmatpush.msra.mxu0 0.0
      %3895 = vmatpush.msra.mxu0 0.0
      %v3896 = vand.u32 %v2074, 4294901760
      %3897 = vmatpush.msra.mxu0 %v3896
      %v3898 = vand.u32 %v2072, 4294901760
      %3899 = vmatpush.msra.mxu0 %v3898
      %v3900 = vand.u32 %v3744, 4294901760
      %3901 = vmatmul.f32.gmra.mxu0 %v3900
      %v3902 = vpop.f32.mrf.mxu0
      %v3903 = vadd.f32 %v3880, %v3902
      %3904 = vdwg.mxu0
      %v3905 = vadd.f32 %v3741, %v3903
      %v3906 = vld [vmem:[%s6] sm:$0xff]
      %v3907 = vld [vmem:[%s6 + $0x8] sm:$0xff]
      %v3908 = vld [vmem:[%s6 + $0x10] sm:$0xff]
      %v3909 = vld [vmem:[%s6 + $0x18] sm:$0xff]
      %v3910 = vld [vmem:[%s6 + $0x20] sm:$0xff]
      %v3911 = vld [vmem:[%s6 + $0x28] sm:$0xff]
      %v3912 = vld [vmem:[%s6 + $0x30] sm:$0xff]
      %v3913 = vld [vmem:[%s6 + $0x38] sm:$0xff]
      %v3914 = vld [vmem:[%s6 + $0x40] sm:$0xff]
      %v3915 = vld [vmem:[%s6 + $0x48] sm:$0xff]
      %v3916 = vld [vmem:[%s6 + $0x50] sm:$0xff]
      %v3917 = vld [vmem:[%s6 + $0x58] sm:$0xff]
      %v3918 = vld [vmem:[%s6 + $0x60] sm:$0xff]
      %v3919 = vld [vmem:[%s6 + $0x68] sm:$0xff]
      %v3920 = vld [vmem:[%s6 + $0x70] sm:$0xff]
      %v3921 = vld [vmem:[%s6 + $0x78] sm:$0xff]
      %v3922 = vld [vmem:[%s7] sm:$0x1]
      %v3924 = vperm.slane %v3922, 0
      %v3926 = vand.u32 %v3921, 4294901760
      %3927 = vmatpush.msra.mxu0 %v3926
      %v3928 = vand.u32 %v3920, 4294901760
      %3929 = vmatpush.msra.mxu0 %v3928
      %v3930 = vand.u32 %v3919, 4294901760
      %3931 = vmatpush.msra.mxu0 %v3930
      %v3932 = vand.u32 %v3918, 4294901760
      %3933 = vmatpush.msra.mxu0 %v3932
      %v3934 = vand.u32 %v3917, 4294901760
      %3935 = vmatpush.msra.mxu0 %v3934
      %v3936 = vand.u32 %v3916, 4294901760
      %3937 = vmatpush.msra.mxu0 %v3936
      %v3938 = vand.u32 %v3915, 4294901760
      %3939 = vmatpush.msra.mxu0 %v3938
      %v3940 = vand.u32 %v3914, 4294901760
      %3941 = vmatpush.msra.mxu0 %v3940
      %v3942 = vand.u32 %v3913, 4294901760
      %3943 = vmatpush.msra.mxu0 %v3942
      %v3944 = vand.u32 %v3912, 4294901760
      %3945 = vmatpush.msra.mxu0 %v3944
      %v3946 = vand.u32 %v3911, 4294901760
      %3947 = vmatpush.msra.mxu0 %v3946
      %v3948 = vand.u32 %v3910, 4294901760
      %3949 = vmatpush.msra.mxu0 %v3948
      %v3950 = vand.u32 %v3909, 4294901760
      %3951 = vmatpush.msra.mxu0 %v3950
      %v3952 = vand.u32 %v3908, 4294901760
      %3953 = vmatpush.msra.mxu0 %v3952
      %v3954 = vand.u32 %v3907, 4294901760
      %3955 = vmatpush.msra.mxu0 %v3954
      %v3956 = vand.u32 %v3906, 4294901760
      %3957 = vmatpush.msra.mxu0 %v3956
      %v3958 = vand.u32 %v3905, 4294901760
      %v3959 = vsub.f32 %v3905, %v3958
      %v3960 = vand.u32 %v3959, 4294901760
      %v3961 = vsub.f32 %v3959, %v3960
      %v3962 = vand.u32 %v3961, 4294901760
      %3963 = vmatmul.f32.gmra.mxu0 %v3962
      %v3964 = vpop.f32.mrf.mxu0
      %v3965 = vadd.f32 %v3924, %v3964
      %3966 = vdwg.mxu0
      %v3967 = vand.u32 %v3921, 4294901760
      %v3968 = vsub.f32 %v3921, %v3967
      %v3969 = vand.u32 %v3968, 4294901760
      %v3970 = vsub.f32 %v3968, %v3969
      %v3971 = vand.u32 %v3970, 4294901760
      %3972 = vmatpush.msra.mxu0 %v3971
      %v3973 = vand.u32 %v3920, 4294901760
      %v3974 = vsub.f32 %v3920, %v3973
      %v3975 = vand.u32 %v3974, 4294901760
      %v3976 = vsub.f32 %v3974, %v3975
      %v3977 = vand.u32 %v3976, 4294901760
      %3978 = vmatpush.msra.mxu0 %v3977
      %v3979 = vand.u32 %v3919, 4294901760
      %v3980 = vsub.f32 %v3919, %v3979
      %v3981 = vand.u32 %v3980, 4294901760
      %v3982 = vsub.f32 %v3980, %v3981
      %v3983 = vand.u32 %v3982, 4294901760
      %3984 = vmatpush.msra.mxu0 %v3983
      %v3985 = vand.u32 %v3918, 4294901760
      %v3986 = vsub.f32 %v3918, %v3985
      %v3987 = vand.u32 %v3986, 4294901760
      %v3988 = vsub.f32 %v3986, %v3987
      %v3989 = vand.u32 %v3988, 4294901760
      %3990 = vmatpush.msra.mxu0 %v3989
      %v3991 = vand.u32 %v3917, 4294901760
      %v3992 = vsub.f32 %v3917, %v3991
      %v3993 = vand.u32 %v3992, 4294901760
      %v3994 = vsub.f32 %v3992, %v3993
      %v3995 = vand.u32 %v3994, 4294901760
      %3996 = vmatpush.msra.mxu0 %v3995
      %v3997 = vand.u32 %v3916, 4294901760
      %v3998 = vsub.f32 %v3916, %v3997
      %v3999 = vand.u32 %v3998, 4294901760
      %v4000 = vsub.f32 %v3998, %v3999
      %v4001 = vand.u32 %v4000, 4294901760
      %4002 = vmatpush.msra.mxu0 %v4001
      %v4003 = vand.u32 %v3915, 4294901760
      %v4004 = vsub.f32 %v3915, %v4003
      %v4005 = vand.u32 %v4004, 4294901760
      %v4006 = vsub.f32 %v4004, %v4005
      %v4007 = vand.u32 %v4006, 4294901760
      %4008 = vmatpush.msra.mxu0 %v4007
      %v4009 = vand.u32 %v3914, 4294901760
      %v4010 = vsub.f32 %v3914, %v4009
      %v4011 = vand.u32 %v4010, 4294901760
      %v4012 = vsub.f32 %v4010, %v4011
      %v4013 = vand.u32 %v4012, 4294901760
      %4014 = vmatpush.msra.mxu0 %v4013
      %v4015 = vand.u32 %v3913, 4294901760
      %v4016 = vsub.f32 %v3913, %v4015
      %v4017 = vand.u32 %v4016, 4294901760
      %v4018 = vsub.f32 %v4016, %v4017
      %v4019 = vand.u32 %v4018, 4294901760
      %4020 = vmatpush.msra.mxu0 %v4019
      %v4021 = vand.u32 %v3912, 4294901760
      %v4022 = vsub.f32 %v3912, %v4021
      %v4023 = vand.u32 %v4022, 4294901760
      %v4024 = vsub.f32 %v4022, %v4023
      %v4025 = vand.u32 %v4024, 4294901760
      %4026 = vmatpush.msra.mxu0 %v4025
      %v4027 = vand.u32 %v3911, 4294901760
      %v4028 = vsub.f32 %v3911, %v4027
      %v4029 = vand.u32 %v4028, 4294901760
      %v4030 = vsub.f32 %v4028, %v4029
      %v4031 = vand.u32 %v4030, 4294901760
      %4032 = vmatpush.msra.mxu0 %v4031
      %v4033 = vand.u32 %v3910, 4294901760
      %v4034 = vsub.f32 %v3910, %v4033
      %v4035 = vand.u32 %v4034, 4294901760
      %v4036 = vsub.f32 %v4034, %v4035
      %v4037 = vand.u32 %v4036, 4294901760
      %4038 = vmatpush.msra.mxu0 %v4037
      %v4039 = vand.u32 %v3909, 4294901760
      %v4040 = vsub.f32 %v3909, %v4039
      %v4041 = vand.u32 %v4040, 4294901760
      %v4042 = vsub.f32 %v4040, %v4041
      %v4043 = vand.u32 %v4042, 4294901760
      %4044 = vmatpush.msra.mxu0 %v4043
      %v4045 = vand.u32 %v3908, 4294901760
      %v4046 = vsub.f32 %v3908, %v4045
      %v4047 = vand.u32 %v4046, 4294901760
      %v4048 = vsub.f32 %v4046, %v4047
      %v4049 = vand.u32 %v4048, 4294901760
      %4050 = vmatpush.msra.mxu0 %v4049
      %v4051 = vand.u32 %v3907, 4294901760
      %v4052 = vsub.f32 %v3907, %v4051
      %v4053 = vand.u32 %v4052, 4294901760
      %v4054 = vsub.f32 %v4052, %v4053
      %v4055 = vand.u32 %v4054, 4294901760
      %4056 = vmatpush.msra.mxu0 %v4055
      %v4057 = vand.u32 %v3906, 4294901760
      %v4058 = vsub.f32 %v3906, %v4057
      %v4059 = vand.u32 %v4058, 4294901760
      %v4060 = vsub.f32 %v4058, %v4059
      %v4061 = vand.u32 %v4060, 4294901760
      %4062 = vmatpush.msra.mxu0 %v4061
      %v4063 = vand.u32 %v3905, 4294901760
      %4064 = vmatmul.f32.gmra.mxu0 %v4063
      %v4065 = vpop.f32.mrf.mxu0
      %v4066 = vadd.f32 %v3965, %v4065
      %4067 = vdwg.mxu0
      %v4068 = vand.u32 %v3921, 4294901760
      %v4069 = vsub.f32 %v3921, %v4068
      %4070 = vmatpush.msra.mxu0 %v4069
      %v4071 = vand.u32 %v3920, 4294901760
      %v4072 = vsub.f32 %v3920, %v4071
      %4073 = vmatpush.msra.mxu0 %v4072
      %v4074 = vand.u32 %v3919, 4294901760
      %v4075 = vsub.f32 %v3919, %v4074
      %4076 = vmatpush.msra.mxu0 %v4075
      %v4077 = vand.u32 %v3918, 4294901760
      %v4078 = vsub.f32 %v3918, %v4077
      %4079 = vmatpush.msra.mxu0 %v4078
      %v4080 = vand.u32 %v3917, 4294901760
      %v4081 = vsub.f32 %v3917, %v4080
      %4082 = vmatpush.msra.mxu0 %v4081
      %v4083 = vand.u32 %v3916, 4294901760
      %v4084 = vsub.f32 %v3916, %v4083
      %4085 = vmatpush.msra.mxu0 %v4084
      %v4086 = vand.u32 %v3915, 4294901760
      %v4087 = vsub.f32 %v3915, %v4086
      %4088 = vmatpush.msra.mxu0 %v4087
      %v4089 = vand.u32 %v3914, 4294901760
      %v4090 = vsub.f32 %v3914, %v4089
      %4091 = vmatpush.msra.mxu0 %v4090
      %v4092 = vand.u32 %v3913, 4294901760
      %v4093 = vsub.f32 %v3913, %v4092
      %4094 = vmatpush.msra.mxu0 %v4093
      %v4095 = vand.u32 %v3912, 4294901760
      %v4096 = vsub.f32 %v3912, %v4095
      %4097 = vmatpush.msra.mxu0 %v4096
      %v4098 = vand.u32 %v3911, 4294901760
      %v4099 = vsub.f32 %v3911, %v4098
      %4100 = vmatpush.msra.mxu0 %v4099
      %v4101 = vand.u32 %v3910, 4294901760
      %v4102 = vsub.f32 %v3910, %v4101
      %4103 = vmatpush.msra.mxu0 %v4102
      %v4104 = vand.u32 %v3909, 4294901760
      %v4105 = vsub.f32 %v3909, %v4104
      %4106 = vmatpush.msra.mxu0 %v4105
      %v4107 = vand.u32 %v3908, 4294901760
      %v4108 = vsub.f32 %v3908, %v4107
      %4109 = vmatpush.msra.mxu0 %v4108
      %v4110 = vand.u32 %v3907, 4294901760
      %v4111 = vsub.f32 %v3907, %v4110
      %4112 = vmatpush.msra.mxu0 %v4111
      %v4113 = vand.u32 %v3906, 4294901760
      %v4114 = vsub.f32 %v3906, %v4113
      %4115 = vmatpush.msra.mxu0 %v4114
      %v4116 = vand.u32 %v3905, 4294901760
      %v4117 = vsub.f32 %v3905, %v4116
      %4118 = vmatmul.f32.gmra.mxu0 %v4117
      %v4119 = vpop.f32.mrf.mxu0
      %v4120 = vadd.f32 %v4066, %v4119
      %4121 = vdwg.mxu0
      %v4122 = vand.u32 %v3921, 4294901760
      %4123 = vmatpush.msra.mxu0 %v4122
      %v4124 = vand.u32 %v3920, 4294901760
      %4125 = vmatpush.msra.mxu0 %v4124
      %v4126 = vand.u32 %v3919, 4294901760
      %4127 = vmatpush.msra.mxu0 %v4126
      %v4128 = vand.u32 %v3918, 4294901760
      %4129 = vmatpush.msra.mxu0 %v4128
      %v4130 = vand.u32 %v3917, 4294901760
      %4131 = vmatpush.msra.mxu0 %v4130
      %v4132 = vand.u32 %v3916, 4294901760
      %4133 = vmatpush.msra.mxu0 %v4132
      %v4134 = vand.u32 %v3915, 4294901760
      %4135 = vmatpush.msra.mxu0 %v4134
      %v4136 = vand.u32 %v3914, 4294901760
      %4137 = vmatpush.msra.mxu0 %v4136
      %v4138 = vand.u32 %v3913, 4294901760
      %4139 = vmatpush.msra.mxu0 %v4138
      %v4140 = vand.u32 %v3912, 4294901760
      %4141 = vmatpush.msra.mxu0 %v4140
      %v4142 = vand.u32 %v3911, 4294901760
      %4143 = vmatpush.msra.mxu0 %v4142
      %v4144 = vand.u32 %v3910, 4294901760
      %4145 = vmatpush.msra.mxu0 %v4144
      %v4146 = vand.u32 %v3909, 4294901760
      %4147 = vmatpush.msra.mxu0 %v4146
      %v4148 = vand.u32 %v3908, 4294901760
      %4149 = vmatpush.msra.mxu0 %v4148
      %v4150 = vand.u32 %v3907, 4294901760
      %4151 = vmatpush.msra.mxu0 %v4150
      %v4152 = vand.u32 %v3906, 4294901760
      %4153 = vmatpush.msra.mxu0 %v4152
      %v4154 = vand.u32 %v3905, 4294901760
      %v4155 = vsub.f32 %v3905, %v4154
      %v4156 = vand.u32 %v4155, 4294901760
      %4157 = vmatmul.f32.gmra.mxu0 %v4156
      %v4158 = vpop.f32.mrf.mxu0
      %v4159 = vadd.f32 %v4120, %v4158
      %4160 = vdwg.mxu0
      %v4161 = vand.u32 %v3921, 4294901760
      %v4162 = vsub.f32 %v3921, %v4161
      %v4163 = vand.u32 %v4162, 4294901760
      %4164 = vmatpush.msra.mxu0 %v4163
      %v4165 = vand.u32 %v3920, 4294901760
      %v4166 = vsub.f32 %v3920, %v4165
      %v4167 = vand.u32 %v4166, 4294901760
      %4168 = vmatpush.msra.mxu0 %v4167
      %v4169 = vand.u32 %v3919, 4294901760
      %v4170 = vsub.f32 %v3919, %v4169
      %v4171 = vand.u32 %v4170, 4294901760
      %4172 = vmatpush.msra.mxu0 %v4171
      %v4173 = vand.u32 %v3918, 4294901760
      %v4174 = vsub.f32 %v3918, %v4173
      %v4175 = vand.u32 %v4174, 4294901760
      %4176 = vmatpush.msra.mxu0 %v4175
      %v4177 = vand.u32 %v3917, 4294901760
      %v4178 = vsub.f32 %v3917, %v4177
      %v4179 = vand.u32 %v4178, 4294901760
      %4180 = vmatpush.msra.mxu0 %v4179
      %v4181 = vand.u32 %v3916, 4294901760
      %v4182 = vsub.f32 %v3916, %v4181
      %v4183 = vand.u32 %v4182, 4294901760
      %4184 = vmatpush.msra.mxu0 %v4183
      %v4185 = vand.u32 %v3915, 4294901760
      %v4186 = vsub.f32 %v3915, %v4185
      %v4187 = vand.u32 %v4186, 4294901760
      %4188 = vmatpush.msra.mxu0 %v4187
      %v4189 = vand.u32 %v3914, 4294901760
      %v4190 = vsub.f32 %v3914, %v4189
      %v4191 = vand.u32 %v4190, 4294901760
      %4192 = vmatpush.msra.mxu0 %v4191
      %v4193 = vand.u32 %v3913, 4294901760
      %v4194 = vsub.f32 %v3913, %v4193
      %v4195 = vand.u32 %v4194, 4294901760
      %4196 = vmatpush.msra.mxu0 %v4195
      %v4197 = vand.u32 %v3912, 4294901760
      %v4198 = vsub.f32 %v3912, %v4197
      %v4199 = vand.u32 %v4198, 4294901760
      %4200 = vmatpush.msra.mxu0 %v4199
      %v4201 = vand.u32 %v3911, 4294901760
      %v4202 = vsub.f32 %v3911, %v4201
      %v4203 = vand.u32 %v4202, 4294901760
      %4204 = vmatpush.msra.mxu0 %v4203
      %v4205 = vand.u32 %v3910, 4294901760
      %v4206 = vsub.f32 %v3910, %v4205
      %v4207 = vand.u32 %v4206, 4294901760
      %4208 = vmatpush.msra.mxu0 %v4207
      %v4209 = vand.u32 %v3909, 4294901760
      %v4210 = vsub.f32 %v3909, %v4209
      %v4211 = vand.u32 %v4210, 4294901760
      %4212 = vmatpush.msra.mxu0 %v4211
      %v4213 = vand.u32 %v3908, 4294901760
      %v4214 = vsub.f32 %v3908, %v4213
      %v4215 = vand.u32 %v4214, 4294901760
      %4216 = vmatpush.msra.mxu0 %v4215
      %v4217 = vand.u32 %v3907, 4294901760
      %v4218 = vsub.f32 %v3907, %v4217
      %v4219 = vand.u32 %v4218, 4294901760
      %4220 = vmatpush.msra.mxu0 %v4219
      %v4221 = vand.u32 %v3906, 4294901760
      %v4222 = vsub.f32 %v3906, %v4221
      %v4223 = vand.u32 %v4222, 4294901760
      %4224 = vmatpush.msra.mxu0 %v4223
      %v4225 = vand.u32 %v3905, 4294901760
      %4226 = vmatmul.f32.gmra.mxu0 %v4225
      %v4227 = vpop.f32.mrf.mxu0
      %v4228 = vadd.f32 %v4159, %v4227
      %4229 = vdwg.mxu0
      %v4230 = vand.u32 %v3921, 4294901760
      %4231 = vmatpush.msra.mxu0 %v4230
      %v4232 = vand.u32 %v3920, 4294901760
      %4233 = vmatpush.msra.mxu0 %v4232
      %v4234 = vand.u32 %v3919, 4294901760
      %4235 = vmatpush.msra.mxu0 %v4234
      %v4236 = vand.u32 %v3918, 4294901760
      %4237 = vmatpush.msra.mxu0 %v4236
      %v4238 = vand.u32 %v3917, 4294901760
      %4239 = vmatpush.msra.mxu0 %v4238
      %v4240 = vand.u32 %v3916, 4294901760
      %4241 = vmatpush.msra.mxu0 %v4240
      %v4242 = vand.u32 %v3915, 4294901760
      %4243 = vmatpush.msra.mxu0 %v4242
      %v4244 = vand.u32 %v3914, 4294901760
      %4245 = vmatpush.msra.mxu0 %v4244
      %v4246 = vand.u32 %v3913, 4294901760
      %4247 = vmatpush.msra.mxu0 %v4246
      %v4248 = vand.u32 %v3912, 4294901760
      %4249 = vmatpush.msra.mxu0 %v4248
      %v4250 = vand.u32 %v3911, 4294901760
      %4251 = vmatpush.msra.mxu0 %v4250
      %v4252 = vand.u32 %v3910, 4294901760
      %4253 = vmatpush.msra.mxu0 %v4252
      %v4254 = vand.u32 %v3909, 4294901760
      %4255 = vmatpush.msra.mxu0 %v4254
      %v4256 = vand.u32 %v3908, 4294901760
      %4257 = vmatpush.msra.mxu0 %v4256
      %v4258 = vand.u32 %v3907, 4294901760
      %4259 = vmatpush.msra.mxu0 %v4258
      %v4260 = vand.u32 %v3906, 4294901760
      %4261 = vmatpush.msra.mxu0 %v4260
      %v4262 = vand.u32 %v3905, 4294901760
      %4263 = vmatmul.f32.gmra.mxu0 %v4262
      %v4264 = vpop.f32.mrf.mxu0
      %v4265 = vadd.f32 %v4228, %v4264
      %4266 = vdwg.mxu0
      %v4267 = vmax.f32 %v4265, 0.0
      %vm4268 = vcmask 523264
      %4269 = vst.msk [vmem:[%s303] sm:$0xff] %vm4268, %v4267
      %p4270 = scmp.lt.s32.totalorder %s19, 1
      %s4271 = scalar_select %p4270, %s19, 1
      %s4272 = smul.addr %s4271, 8
      %s4273 = scalar_lea.vmem %s8, %s4272
      // Predicated region
      $region53: #{downscale_basic_block.1} parent=51 // pred_check
        %p4274 = pneg %p210
      $region54: #{downscale_basic_block.1} parent=51 // pred_check_branch
        %4276 = sbr.rel (%p4274) target = $region56
      $region55: #{downscale_basic_block.1} parent=51 // pred_region
        _
      $region56: #{downscale_basic_block.1} parent=51 // pred_fallthru
        _
    $region52: #{downscale_basic_block.1} parent=5 // pred_fallthru
      _
    %p4277 = scmp.le.s32.totalorder 2, %s14
    // Predicated region
    $region57: #{downscale_basic_block.1} parent=5 // pred_check
      %p4278 = pneg %p4277
    $region58: #{downscale_basic_block.1} parent=5 // pred_check_branch
      %4280 = sbr.rel (%p4278) target = $region60
    $region59: #{downscale_basic_block.1} parent=5 // pred_region
      %s4281 = ssub.s32 %s14, 2
      // Predicated region
      $region61: #{downscale_basic_block.1} parent=59 // pred_check
        %p4282 = pneg %p216
      $region62: #{downscale_basic_block.1} parent=59 // pred_check_branch
        %4284 = sbr.rel (%p4282) target = $region64
      $region63: #{downscale_basic_block.1} parent=59 // pred_region
        %p4285 = scmp.lt.s32.totalorder %s20, 1
        %s4286 = scalar_select %p4285, %s20, 1
        %s4287 = smul.addr %s4286, 8
        %s4288 = scalar_lea.vmem %s8, %s4287
      $region64: #{downscale_basic_block.1} parent=59 // pred_fallthru
        _
    $region60: #{downscale_basic_block.1} parent=5 // pred_fallthru
      _
  $region6: #{downscale_basic_block.1} parent=0 // loop_footer
    %s18 = sadd.s32 1, %s14
  $region7: #{downscale_basic_block.1} parent=0 // loop_footer_branch
    %13 = sbr.rel target = $region3
  $region8: #{downscale_basic_block.1} parent=0 // loop_exit
    _

</llo_original>
